<compile_context>
chip_gen: v7x
topology: tpu7x:2x2x1
jax: 0.10.0
libtpu: 0.0.40
codegen_flags: <defaults>
</compile_context>

<pallas_src>
import functools

import jax
import jax.numpy as jnp
from jax.experimental import pallas as pl
from jax.experimental.pallas import tpu as pltpu

LN_EPS = 1e-12          # BERT LayerNorm eps
FILL_ID = 1001          # word_indicies[indexes.bool()] = 1001

_TILE_MN = (512, 256, 128)                 # MXU-aligned N / K tile candidates
_TILE_M = (512, 256, 128, 64, 32, 16, 8)   # sublane-aligned M tile candidates


def _pick_tile(dim, candidates):
    """Largest candidate that exactly divides `dim`, else the full dim."""
    for c in candidates:
        if c <= dim and dim % c == 0:
            return c
    return dim


# ---------------------------------------------------------------------------
# Kernels
# ---------------------------------------------------------------------------

def _argmax_fill_kernel(c_ref, idx_ref, o_ref):
    """argmax over vocab axis, then masked-fill with FILL_ID where idx != 0."""
    x = c_ref[...]                                  # (B, S, V) f32
    B, S, V = x.shape
    col = jax.lax.broadcasted_iota(jnp.int32, (B, S, V), 2)
    mx = jnp.max(x, axis=-1, keepdims=True)
    cand = jnp.where(x >= mx, col, V)               # first index of the max
    am = jnp.min(cand, axis=-1)                     # (B, S) int32
    o_ref[...] = jnp.where(idx_ref[...] != 0, FILL_ID, am).astype(jnp.int32)


def _embed_ln_kernel(we_ref, pe_ref, te_ref, g_ref, b_ref, o_ref):
    """word_emb + position_emb + token_type_emb followed by LayerNorm."""
    e = we_ref[0] + pe_ref[...] + te_ref[0]         # (S, H)
    mean = jnp.mean(e, axis=-1, keepdims=True)
    var = jnp.mean((e - mean) ** 2, axis=-1, keepdims=True)
    o_ref[0] = ((e - mean) * jax.lax.rsqrt(var + LN_EPS)) * g_ref[...] + b_ref[...]


def _matmul_kernel(x_ref, w_ref, b_ref, o_ref, acc_ref, *, activation):
    """Tiled matmul: bf16 MXU operands, f32 accumulate, bias(+GELU) on finalize."""
    @pl.when(pl.program_id(2) == 0)
    def _():
        acc_ref[...] = jnp.zeros_like(acc_ref)

    acc_ref[...] += jnp.dot(x_ref[...].astype(jnp.bfloat16),
                            w_ref[...].astype(jnp.bfloat16),
                            preferred_element_type=jnp.float32)

    @pl.when(pl.program_id(2) == pl.num_programs(2) - 1)
    def _():
        h = acc_ref[...] + b_ref[...]
        if activation == "gelu":
            # TODO(synk): BERT uses exact (erf) GELU; tanh approximation kept
            # because erf has no guaranteed Mosaic lowering.
            h = jax.nn.gelu(h, approximate=True)
        o_ref[...] = h.astype(o_ref.dtype)


def _matmul_add_ln_kernel(x_ref, w_ref, b_ref, res_ref, g_ref, be_ref,
                          o_ref, acc_ref):
    """Fused: LayerNorm(x @ w + b + residual). N (=H) kept whole for the LN."""
    @pl.when(pl.program_id(1) == 0)
    def _():
        acc_ref[...] = jnp.zeros_like(acc_ref)

    acc_ref[...] += jnp.dot(x_ref[...].astype(jnp.bfloat16),
                            w_ref[...].astype(jnp.bfloat16),
                            preferred_element_type=jnp.float32)

    @pl.when(pl.program_id(1) == pl.num_programs(1) - 1)
    def _():
        e = acc_ref[...] + b_ref[...] + res_ref[...]
        mean = jnp.mean(e, axis=-1, keepdims=True)
        var = jnp.mean((e - mean) ** 2, axis=-1, keepdims=True)
        out = ((e - mean) * jax.lax.rsqrt(var + LN_EPS)) * g_ref[...] + be_ref[...]
        o_ref[...] = out.astype(o_ref.dtype)


def _attention_kernel(q_ref, k_ref, v_ref, o_ref, *, num_heads, s_valid):
    """All heads of one batch element per grid step.

    Refs are (1, S_pad, H) with heads packed in the lane axis (H = nH*d);
    per-head work uses static lane slices, so no HBM transposes are needed.
    """
    S = q_ref.shape[1]
    H = q_ref.shape[2]
    d = H // num_heads
    scale = d ** -0.5

    if s_valid < S:
        key_pos = jax.lax.broadcasted_iota(jnp.int32, (S, S), 1)
        key_mask = key_pos < s_valid

    for h in range(num_heads):                      # static, unrolled
        sl = pl.ds(h * d, d)
        q = q_ref[0, :, sl].astype(jnp.bfloat16)    # (S, d)
        k = k_ref[0, :, sl].astype(jnp.bfloat16)
        v = v_ref[0, :, sl].astype(jnp.bfloat16)
        s = jnp.dot(q, k.T, preferred_element_type=jnp.float32) * scale
        if s_valid < S:
            s = jnp.where(key_mask, s, -1e30)       # mask padded keys
        m = jnp.max(s, axis=-1, keepdims=True)
        p = jnp.exp(s - m)
        p = p * pl.reciprocal(jnp.sum(p, axis=-1, keepdims=True), approx=True)
        o = jnp.dot(p.astype(jnp.bfloat16), v, preferred_element_type=jnp.float32)
        o_ref[0, :, sl] = o.astype(o_ref.dtype)


# ---------------------------------------------------------------------------
# Pallas wrappers
# ---------------------------------------------------------------------------

def pallas_argmax_fill(corrupted, indexes):
    B, S, V = corrupted.shape
    return pl.pallas_call(
        _argmax_fill_kernel,
        out_shape=jax.ShapeDtypeStruct((B, S), jnp.int32),
    )(corrupted, indexes.astype(jnp.int32))


def pallas_embed_ln(we, pe, te, gamma, beta):
    B, S, H = we.shape
    spec3 = pl.BlockSpec((1, S, H), lambda b: (b, 0, 0))
    return pl.pallas_call(
        _embed_ln_kernel,
        grid=(B,),
        in_specs=[spec3,
                  pl.BlockSpec((S, H), lambda b: (0, 0)),
                  spec3,
                  pl.BlockSpec((1, H), lambda b: (0, 0)),
                  pl.BlockSpec((1, H), lambda b: (0, 0))],
        out_specs=spec3,
        out_shape=jax.ShapeDtypeStruct((B, S, H), jnp.float32),
        compiler_params=pltpu.CompilerParams(dimension_semantics=("parallel",)),
    )(we, pe, te, gamma.reshape(1, H), beta.reshape(1, H))


def pallas_linear(x, w, b, activation=None):
    """Tiled, pipelined y = act(x @ w + b). Weights may be bf16."""
    M, K = x.shape
    N = w.shape[1]
    tm = _pick_tile(M, _TILE_M)
    tn = _pick_tile(N, _TILE_MN)
    tk = _pick_tile(K, _TILE_MN)
    grid = (M // tm, N // tn, K // tk)
    kernel = functools.partial(_matmul_kernel, activation=activation)
    return pl.pallas_call(
        kernel,
        grid=grid,
        in_specs=[pl.BlockSpec((tm, tk), lambda i, j, k: (i, k)),
                  pl.BlockSpec((tk, tn), lambda i, j, k: (k, j)),
                  pl.BlockSpec((1, tn), lambda i, j, k: (0, j))],
        out_specs=pl.BlockSpec((tm, tn), lambda i, j, k: (i, j)),
        out_shape=jax.ShapeDtypeStruct((M, N), jnp.float32),
        scratch_shapes=[pltpu.VMEM((tm, tn), jnp.float32)],
        compiler_params=pltpu.CompilerParams(
            dimension_semantics=("parallel", "parallel", "arbitrary")),
    )(x, w, b.reshape(1, N))


def pallas_linear_add_ln(x, w, b, res, gamma, beta):
    """Fused LayerNorm(x @ w + b + res); N == H kept whole (LN over features)."""
    M, K = x.shape
    N = w.shape[1]
    tm = _pick_tile(M, _TILE_M)
    tk = _pick_tile(K, _TILE_MN)
    grid = (M // tm, K // tk)
    return pl.pallas_call(
        _matmul_add_ln_kernel,
        grid=grid,
        in_specs=[pl.BlockSpec((tm, tk), lambda i, k: (i, k)),
                  pl.BlockSpec((tk, N), lambda i, k: (k, 0)),
                  pl.BlockSpec((1, N), lambda i, k: (0, 0)),
                  pl.BlockSpec((tm, N), lambda i, k: (i, 0)),
                  pl.BlockSpec((1, N), lambda i, k: (0, 0)),
                  pl.BlockSpec((1, N), lambda i, k: (0, 0))],
        out_specs=pl.BlockSpec((tm, N), lambda i, k: (i, 0)),
        out_shape=jax.ShapeDtypeStruct((M, N), jnp.float32),
        scratch_shapes=[pltpu.VMEM((tm, N), jnp.float32)],
        compiler_params=pltpu.CompilerParams(
            dimension_semantics=("parallel", "arbitrary")),
    )(x, w, b.reshape(1, N), res, gamma.reshape(1, N), beta.reshape(1, N))


def pallas_attention(q, k, v, num_heads):
    """q, k, v: (B, S, H) with heads packed along H. Returns (B, S, H)."""
    B, S, H = q.shape
    s_pad = ((S + 7) // 8) * 8
    if s_pad != S:
        pad = ((0, 0), (0, s_pad - S), (0, 0))
        q = jnp.pad(q, pad)
        k = jnp.pad(k, pad)
        v = jnp.pad(v, pad)
    kernel = functools.partial(_attention_kernel, num_heads=num_heads, s_valid=S)
    spec = pl.BlockSpec((1, s_pad, H), lambda b: (b, 0, 0))
    out = pl.pallas_call(
        kernel,
        grid=(B,),
        in_specs=[spec, spec, spec],
        out_specs=spec,
        out_shape=jax.ShapeDtypeStruct((B, s_pad, H), jnp.float32),
        compiler_params=pltpu.CompilerParams(dimension_semantics=("parallel",)),
    )(q, k, v)
    return out[:, :S, :]


# ---------------------------------------------------------------------------
# Model
# ---------------------------------------------------------------------------

def _encoder_layer(x, B, S, num_heads, p):
    """Post-LN BERT encoder layer. x: (B*S, H) f32."""
    H = x.shape[-1]

    # Fused QKV projection: one (H, 3H) matmul instead of three (H, H).
    qkv = pallas_linear(x, p["w_qkv"], p["b_qkv"])          # (B*S, 3H)
    q = qkv[:, :H].reshape(B, S, H)
    k = qkv[:, H:2 * H].reshape(B, S, H)
    v = qkv[:, 2 * H:].reshape(B, S, H)

    attn = pallas_attention(q, k, v, num_heads)             # (B, S, H)
    attn = attn.reshape(B * S, H)

    # Attention output projection fused with residual add + LayerNorm.
    x = pallas_linear_add_ln(attn, p["wo"], p["bo"], x, p["ln1_g"], p["ln1_b"])

    # FFN: up-projection + GELU, then down-projection fused with add + LN.
    h = pallas_linear(x, p["w1"], p["b1"], activation="gelu")
    x = pallas_linear_add_ln(h, p["w2"], p["b2"], x, p["ln2_g"], p["ln2_b"])
    return x


@functools.partial(jax.jit, static_argnames=("num_heads",))
def index_filler_forward(corrupted_responses, indexes, params, *, num_heads):
    B, S, V = corrupted_responses.shape
    H = params["word_emb"].shape[1]

    # 1) word_indicies = argmax(corrupted, dim=2); word_indicies[indexes.bool()] = 1001
    ids = pallas_argmax_fill(corrupted_responses, indexes)          # (B, S) int32

    # 2) BERT embeddings(input_ids=ids, token_type_ids=indexes)
    we = params["word_emb"][ids]                                    # (B, S, H)  gather (glue)
    te = params["type_emb"][indexes.astype(jnp.int32)]              # (B, S, H)
    pe = params["pos_emb"][:S]                                      # (S, H)
    emb = pallas_embed_ln(we, pe, te, params["emb_ln_g"], params["emb_ln_b"])

    # 3) BERT encoder
    x = emb.reshape(B * S, H)
    for layer_params in params["layers"]:
        x = _encoder_layer(x, B, S, num_heads, layer_params)

    # 4) vector2response
    out = pallas_linear(x, params["out_w"], params["out_b"])        # (B*S, V)
    return {"restored_resp": out.reshape(B, S, V)}


# ---------------------------------------------------------------------------
# Deterministic parameter init (scaled-down synthetic BERT)
# ---------------------------------------------------------------------------

def init_params(key, *, hidden, ffn_dim, num_layers, bert_vocab, type_vocab,
                max_seq, resp_vocab):
    def dense(k, fan_in, fan_out):
        kw, kb = jax.random.split(k)
        w = (jax.random.normal(kw, (fan_in, fan_out), jnp.float32) * 0.02
             ).astype(jnp.bfloat16)                 # bf16 weights (MXU operands)
        b = jax.random.normal(kb, (fan_out,), jnp.float32) * 0.02
        return w, b

    keys = jax.random.split(key, 4 + num_layers)
    params = {
        "word_emb": jax.random.normal(keys[0], (bert_vocab, hidden), jnp.float32) * 0.02,
        "pos_emb": jax.random.normal(keys[1], (max_seq, hidden), jnp.float32) * 0.02,
        "type_emb": jax.random.normal(keys[2], (type_vocab, hidden), jnp.float32) * 0.02,
        "emb_ln_g": jnp.ones((hidden,), jnp.float32),
        "emb_ln_b": jnp.zeros((hidden,), jnp.float32),
        "layers": [],
    }
    for i in range(num_layers):
        ks = jax.random.split(keys[3 + i], 4)
        w_qkv, b_qkv = dense(ks[0], hidden, 3 * hidden)     # fused Q|K|V
        wo, bo = dense(ks[1], hidden, hidden)
        w1, b1 = dense(ks[2], hidden, ffn_dim)
        w2, b2 = dense(ks[3], ffn_dim, hidden)
        params["layers"].append(dict(
            w_qkv=w_qkv, b_qkv=b_qkv, wo=wo, bo=bo,
            w1=w1, b1=b1, w2=w2, b2=b2,
            ln1_g=jnp.ones((hidden,), jnp.float32),
            ln1_b=jnp.zeros((hidden,), jnp.float32),
            ln2_g=jnp.ones((hidden,), jnp.float32),
            ln2_b=jnp.zeros((hidden,), jnp.float32),
        ))
    wout, bout = dense(keys[3 + num_layers], hidden, resp_vocab)
    params["out_w"] = wout
    params["out_b"] = bout
    return params


# ---------------------------------------------------------------------------
# Main
# ---------------------------------------------------------------------------

if __name__ == "__main__":
    # Small, shape-consistent config: seq=10 (module hardcodes 10 positions),
    # response vocab=100 (Linear(768,100)); hidden bumped to 128 so the lane
    # axis and MXU contraction are 128-aligned even in the toy config.
    B, S, RESP_V = 2, 10, 100
    H, NUM_HEADS, FFN, NUM_LAYERS = 128, 2, 256, 2
    BERT_VOCAB, TYPE_VOCAB = 1024, 2        # vocab must contain id 1001

    key = jax.random.PRNGKey(0)
    k_resp, k_idx, k_param = jax.random.split(key, 3)

    corrupted_responses = jax.random.normal(k_resp, (B, S, RESP_V), jnp.float32)
    indexes = (jax.random.uniform(k_idx, (B, S)) > 0.7).astype(jnp.int32)

    params = init_params(
        k_param, hidden=H, ffn_dim=FFN, num_layers=NUM_LAYERS,
        bert_vocab=BERT_VOCAB, type_vocab=TYPE_VOCAB,
        max_seq=S, resp_vocab=RESP_V)

    out = index_filler_forward(
        corrupted_responses, indexes, params, num_heads=NUM_HEADS)
    restored = jax.block_until_ready(out["restored_resp"])

    assert restored.shape == (B, S, RESP_V)
    assert restored.dtype == jnp.float32
    assert bool(jnp.isfinite(restored).all())
    print("KERNEL_OK")
</pallas_src>

<mosaic_0001>
module attributes {stable_mosaic.version = 11 : i64} {
  func.func @_argmax_fill_kernel(%arg0: memref<2x10x100xf32, #tpu.memory_space<vmem>>, %arg1: memref<2x10xi32, #tpu.memory_space<vmem>>, %arg2: memref<2x10xi32, #tpu.memory_space<vmem>>) attributes {dimension_semantics = [], scalar_prefetch = 0 : i64, scratch_operands = 0 : i64, tpu.core_type = #tpu.core_type<tc>} {
    %c0 = arith.constant 0 : index
    %c0_0 = arith.constant 0 : index
    %c0_1 = arith.constant 0 : index
    %0 = vector.load %arg0[%c0, %c0_0, %c0_1] : memref<2x10x100xf32, #tpu.memory_space<vmem>>, vector<2x10x100xf32>
    %1 = tpu.iota {dimensions = array<i32: 2>} : vector<2x10x100xi32>
    %cst = arith.constant dense<0xFF800000> : vector<2x10xf32>
    %2 = vector.multi_reduction <maximumf>, %0, %cst [2] : vector<2x10x100xf32> to vector<2x10xf32>
    %3 = vector.shape_cast %2 : vector<2x10xf32> to vector<2x10x1xf32>
    %4 = vector.broadcast %3 : vector<2x10x1xf32> to vector<2x10x100xf32>
    %5 = arith.cmpf oge, %0, %4 : vector<2x10x100xf32>
    %c100_i32 = arith.constant 100 : i32
    %6 = vector.broadcast %c100_i32 : i32 to vector<2x10x100xi32>
    %7 = arith.select %5, %1, %6 : vector<2x10x100xi1>, vector<2x10x100xi32>
    %cst_2 = arith.constant dense<2147483647> : vector<2x10xi32>
    %8 = vector.multi_reduction <minsi>, %7, %cst_2 [2] : vector<2x10x100xi32> to vector<2x10xi32>
    %c0_3 = arith.constant 0 : index
    %c0_4 = arith.constant 0 : index
    %9 = vector.load %arg1[%c0_3, %c0_4] : memref<2x10xi32, #tpu.memory_space<vmem>>, vector<2x10xi32>
    %c0_i32 = arith.constant 0 : i32
    %10 = vector.broadcast %c0_i32 : i32 to vector<2x10xi32>
    %11 = arith.cmpi ne, %9, %10 : vector<2x10xi32>
    %c1001_i32 = arith.constant 1001 : i32
    %12 = vector.broadcast %c1001_i32 : i32 to vector<2x10xi32>
    %13 = arith.select %11, %12, %8 : vector<2x10xi1>, vector<2x10xi32>
    %c0_5 = arith.constant 0 : index
    %c0_6 = arith.constant 0 : index
    %14 = vector.load %arg2[%c0_5, %c0_6] : memref<2x10xi32, #tpu.memory_space<vmem>>, vector<2x10xi32>
    tpu.vector_store %arg2[%c0_5, %c0_6], %13 {strides = array<i32>} : memref<2x10xi32, #tpu.memory_space<vmem>>, vector<2x10xi32>,
    return
  }
}

module attributes {stable_mosaic.version = 11 : i64} {
  func.func @_embed_ln_kernel(%arg0: i32, %arg1: memref<1x10x128xf32, #tpu.memory_space<vmem>>, %arg2: memref<10x128xf32, #tpu.memory_space<vmem>>, %arg3: memref<1x10x128xf32, #tpu.memory_space<vmem>>, %arg4: memref<1x128xf32, #tpu.memory_space<vmem>>, %arg5: memref<1x128xf32, #tpu.memory_space<vmem>>, %arg6: memref<1x10x128xf32, #tpu.memory_space<vmem>>) attributes {dimension_semantics = [#tpu.dimension_semantics<parallel>], iteration_bounds = array<i64: 2>, scalar_prefetch = 0 : i64, scratch_operands = 0 : i64, tpu.core_type = #tpu.core_type<tc>, window_params = [{transform_indices = @transform_0, window_bounds = array<i64: 1, 10, 128>}, {pipeline_mode = #tpu.pipeline_mode<synchronous>, transform_indices = @transform_1, window_bounds = array<i64: 10, 128>}, {transform_indices = @transform_2, window_bounds = array<i64: 1, 10, 128>}, {pipeline_mode = #tpu.pipeline_mode<synchronous>, transform_indices = @transform_3, window_bounds = array<i64: 1, 128>}, {pipeline_mode = #tpu.pipeline_mode<synchronous>, transform_indices = @transform_4, window_bounds = array<i64: 1, 128>}, {transform_indices = @transform_5, window_bounds = array<i64: 1, 10, 128>}]} {
    %c0 = arith.constant 0 : index
    %c0_0 = arith.constant 0 : index
    %c0_1 = arith.constant 0 : index
    %0 = vector.load %arg1[%c0, %c0_0, %c0_1] : memref<1x10x128xf32, #tpu.memory_space<vmem>>, vector<1x10x128xf32>
    %1 = vector.shape_cast %0 : vector<1x10x128xf32> to vector<10x128xf32>
    %c0_2 = arith.constant 0 : index
    %c0_3 = arith.constant 0 : index
    %2 = vector.load %arg2[%c0_2, %c0_3] : memref<10x128xf32, #tpu.memory_space<vmem>>, vector<10x128xf32>
    %3 = arith.addf %1, %2 : vector<10x128xf32>
    %c0_4 = arith.constant 0 : index
    %c0_5 = arith.constant 0 : index
    %c0_6 = arith.constant 0 : index
    %4 = vector.load %arg3[%c0_4, %c0_5, %c0_6] : memref<1x10x128xf32, #tpu.memory_space<vmem>>, vector<1x10x128xf32>
    %5 = vector.shape_cast %4 : vector<1x10x128xf32> to vector<10x128xf32>
    %6 = arith.addf %3, %5 : vector<10x128xf32>
    %cst = arith.constant dense<0.000000e+00> : vector<10xf32>
    %7 = vector.multi_reduction <add>, %6, %cst [1] : vector<10x128xf32> to vector<10xf32>
    %8 = vector.shape_cast %7 : vector<10xf32> to vector<10x1xf32>
    %cst_7 = arith.constant 1.280000e+02 : f32
    %9 = vector.broadcast %cst_7 : f32 to vector<10x1xf32>
    %10 = arith.divf %8, %9 : vector<10x1xf32>
    %11 = vector.broadcast %10 : vector<10x1xf32> to vector<10x128xf32>
    %12 = arith.subf %6, %11 : vector<10x128xf32>
    %13 = arith.mulf %12, %12 : vector<10x128xf32>
    %cst_8 = arith.constant dense<0.000000e+00> : vector<10xf32>
    %14 = vector.multi_reduction <add>, %13, %cst_8 [1] : vector<10x128xf32> to vector<10xf32>
    %15 = vector.shape_cast %14 : vector<10xf32> to vector<10x1xf32>
    %cst_9 = arith.constant 1.280000e+02 : f32
    %16 = vector.broadcast %cst_9 : f32 to vector<10x1xf32>
    %17 = arith.divf %15, %16 : vector<10x1xf32>
    %18 = vector.broadcast %10 : vector<10x1xf32> to vector<10x128xf32>
    %19 = arith.subf %6, %18 : vector<10x128xf32>
    %cst_10 = arith.constant 9.99999996E-13 : f32
    %20 = vector.broadcast %cst_10 : f32 to vector<10x1xf32>
    %21 = arith.addf %17, %20 : vector<10x1xf32>
    %22 = math.rsqrt %21 : vector<10x1xf32>
    %23 = vector.broadcast %22 : vector<10x1xf32> to vector<10x128xf32>
    %24 = arith.mulf %19, %23 : vector<10x128xf32>
    %c0_11 = arith.constant 0 : index
    %c0_12 = arith.constant 0 : index
    %25 = vector.load %arg4[%c0_11, %c0_12] : memref<1x128xf32, #tpu.memory_space<vmem>>, vector<1x128xf32>
    %26 = vector.broadcast %25 : vector<1x128xf32> to vector<10x128xf32>
    %27 = arith.mulf %24, %26 : vector<10x128xf32>
    %c0_13 = arith.constant 0 : index
    %c0_14 = arith.constant 0 : index
    %28 = vector.load %arg5[%c0_13, %c0_14] : memref<1x128xf32, #tpu.memory_space<vmem>>, vector<1x128xf32>
    %29 = vector.broadcast %28 : vector<1x128xf32> to vector<10x128xf32>
    %30 = arith.addf %27, %29 : vector<10x128xf32>
    %c0_15 = arith.constant 0 : index
    %c0_16 = arith.constant 0 : index
    %c0_17 = arith.constant 0 : index
    %31 = vector.load %arg6[%c0_15, %c0_16, %c0_17] : memref<1x10x128xf32, #tpu.memory_space<vmem>>, vector<1x10x128xf32>
    %32 = vector.shape_cast %31 : vector<1x10x128xf32> to vector<10x128xf32>
    %33 = vector.shape_cast %30 : vector<10x128xf32> to vector<1x10x128xf32>
    tpu.vector_store %arg6[%c0_15, %c0_16, %c0_17], %33 {strides = array<i32>} : memref<1x10x128xf32, #tpu.memory_space<vmem>>, vector<1x10x128xf32>,
    return
  }
  func.func @transform_0(%arg0: i32) -> (i32, i32, i32) {
    %c0_i32 = arith.constant 0 : i32
    %c0_i32_0 = arith.constant 0 : i32
    %c0_i32_1 = arith.constant 0 : i32
    return %arg0, %c0_i32, %c0_i32_0 : i32, i32, i32
  }
  func.func @transform_1(%arg0: i32) -> (i32, i32) {
    %c0_i32 = arith.constant 0 : i32
    %c0_i32_0 = arith.constant 0 : i32
    %c0_i32_1 = arith.constant 0 : i32
    return %c0_i32, %c0_i32_0 : i32, i32
  }
  func.func @transform_2(%arg0: i32) -> (i32, i32, i32) {
    %c0_i32 = arith.constant 0 : i32
    %c0_i32_0 = arith.constant 0 : i32
    %c0_i32_1 = arith.constant 0 : i32
    return %arg0, %c0_i32, %c0_i32_0 : i32, i32, i32
  }
  func.func @transform_3(%arg0: i32) -> (i32, i32) {
    %c0_i32 = arith.constant 0 : i32
    %c0_i32_0 = arith.constant 0 : i32
    %c0_i32_1 = arith.constant 0 : i32
    return %c0_i32, %c0_i32_0 : i32, i32
  }
  func.func @transform_4(%arg0: i32) -> (i32, i32) {
    %c0_i32 = arith.constant 0 : i32
    %c0_i32_0 = arith.constant 0 : i32
    %c0_i32_1 = arith.constant 0 : i32
    return %c0_i32, %c0_i32_0 : i32, i32
  }
  func.func @transform_5(%arg0: i32) -> (i32, i32, i32) {
    %c0_i32 = arith.constant 0 : i32
    %c0_i32_0 = arith.constant 0 : i32
    %c0_i32_1 = arith.constant 0 : i32
    return %arg0, %c0_i32, %c0_i32_0 : i32, i32, i32
  }
}

module attributes {stable_mosaic.version = 11 : i64} {
  func.func @_matmul_kernel(%arg0: i32, %arg1: i32, %arg2: i32, %arg3: memref<20x128xf32, #tpu.memory_space<vmem>>, %arg4: memref<128x128xbf16, #tpu.memory_space<vmem>>, %arg5: memref<1x128xf32, #tpu.memory_space<vmem>>, %arg6: memref<20x128xf32, #tpu.memory_space<vmem>>, %arg7: memref<20x128xf32, #tpu.memory_space<vmem>>) attributes {dimension_semantics = [#tpu.dimension_semantics<parallel>, #tpu.dimension_semantics<parallel>, #tpu.dimension_semantics<arbitrary>], iteration_bounds = array<i64: 1, 3, 1>, scalar_prefetch = 0 : i64, scratch_operands = 1 : i64, tpu.core_type = #tpu.core_type<tc>, window_params = [{transform_indices = @transform_0, window_bounds = array<i64: 20, 128>}, {transform_indices = @transform_1, window_bounds = array<i64: 128, 128>}, {transform_indices = @transform_2, window_bounds = array<i64: 1, 128>}, {transform_indices = @transform_3, window_bounds = array<i64: 20, 128>}]} {
    %c0_i32 = arith.constant 0 : i32
    %0 = arith.cmpi eq, %arg2, %c0_i32 : i32
    %1 = arith.extui %0 : i1 to i32
    %c0_i32_0 = arith.constant 0 : i32
    %2 = arith.cmpi ne, %1, %c0_i32_0 : i32
    scf.if %2 {
      %cst_10 = arith.constant 0.000000e+00 : f32
      %13 = vector.broadcast %cst_10 : f32 to vector<20x128xf32>
      %c0_11 = arith.constant 0 : index
      %c0_12 = arith.constant 0 : index
      %14 = vector.load %arg7[%c0_11, %c0_12] : memref<20x128xf32, #tpu.memory_space<vmem>>, vector<20x128xf32>
      tpu.vector_store %arg7[%c0_11, %c0_12], %13 {strides = array<i32>} : memref<20x128xf32, #tpu.memory_space<vmem>>, vector<20x128xf32>,
    } else {
    }
    %c0 = arith.constant 0 : index
    %c0_1 = arith.constant 0 : index
    %3 = vector.load %arg7[%c0, %c0_1] : memref<20x128xf32, #tpu.memory_space<vmem>>, vector<20x128xf32>
    %c0_2 = arith.constant 0 : index
    %c0_3 = arith.constant 0 : index
    %4 = vector.load %arg3[%c0_2, %c0_3] : memref<20x128xf32, #tpu.memory_space<vmem>>, vector<20x128xf32>
    %5 = arith.truncf %4 : vector<20x128xf32> to vector<20x128xbf16>
    %c0_4 = arith.constant 0 : index
    %c0_5 = arith.constant 0 : index
    %6 = vector.load %arg4[%c0_4, %c0_5] : memref<128x128xbf16, #tpu.memory_space<vmem>>, vector<128x128xbf16>
    %cst = arith.constant dense<0.000000e+00> : vector<20x128xf32>
    %7 = tpu.matmul %5, %6, %cst {dimension_numbers = #tpu.dot_dimension_numbers<[1], [0], [0], [1], [0, 0, 1, 1], [], []>} : vector<20x128xbf16>, vector<128x128xbf16>, vector<20x128xf32> -> vector<20x128xf32>
    %8 = arith.addf %3, %7 : vector<20x128xf32>
    %c0_6 = arith.constant 0 : index
    %c0_7 = arith.constant 0 : index
    %9 = vector.load %arg7[%c0_6, %c0_7] : memref<20x128xf32, #tpu.memory_space<vmem>>, vector<20x128xf32>
    tpu.vector_store %arg7[%c0_6, %c0_7], %8 {strides = array<i32>} : memref<20x128xf32, #tpu.memory_space<vmem>>, vector<20x128xf32>,
    %c0_i32_8 = arith.constant 0 : i32
    %10 = arith.cmpi eq, %arg2, %c0_i32_8 : i32
    %11 = arith.extui %10 : i1 to i32
    %c0_i32_9 = arith.constant 0 : i32
    %12 = arith.cmpi ne, %11, %c0_i32_9 : i32
    scf.if %12 {
      %c0_10 = arith.constant 0 : index
      %c0_11 = arith.constant 0 : index
      %13 = vector.load %arg7[%c0_10, %c0_11] : memref<20x128xf32, #tpu.memory_space<vmem>>, vector<20x128xf32>
      %c0_12 = arith.constant 0 : index
      %c0_13 = arith.constant 0 : index
      %14 = vector.load %arg5[%c0_12, %c0_13] : memref<1x128xf32, #tpu.memory_space<vmem>>, vector<1x128xf32>
      %15 = vector.broadcast %14 : vector<1x128xf32> to vector<20x128xf32>
      %16 = arith.addf %13, %15 : vector<20x128xf32>
      %c0_14 = arith.constant 0 : index
      %c0_15 = arith.constant 0 : index
      %17 = vector.load %arg6[%c0_14, %c0_15] : memref<20x128xf32, #tpu.memory_space<vmem>>, vector<20x128xf32>
      tpu.vector_store %arg6[%c0_14, %c0_15], %16 {strides = array<i32>} : memref<20x128xf32, #tpu.memory_space<vmem>>, vector<20x128xf32>,
    } else {
    }
    return
  }
  func.func @transform_0(%arg0: i32, %arg1: i32, %arg2: i32) -> (i32, i32) {
    %c0_i32 = arith.constant 0 : i32
    return %arg0, %arg2 : i32, i32
  }
  func.func @transform_1(%arg0: i32, %arg1: i32, %arg2: i32) -> (i32, i32) {
    %c0_i32 = arith.constant 0 : i32
    return %arg2, %arg1 : i32, i32
  }
  func.func @transform_2(%arg0: i32, %arg1: i32, %arg2: i32) -> (i32, i32) {
    %c0_i32 = arith.constant 0 : i32
    %c0_i32_0 = arith.constant 0 : i32
    return %c0_i32, %arg1 : i32, i32
  }
  func.func @transform_3(%arg0: i32, %arg1: i32, %arg2: i32) -> (i32, i32) {
    %c0_i32 = arith.constant 0 : i32
    return %arg0, %arg1 : i32, i32
  }
}

module attributes {stable_mosaic.version = 11 : i64} {
  func.func @_attention_kernel(%arg0: i32, %arg1: memref<1x16x128xf32, #tpu.memory_space<vmem>>, %arg2: memref<1x16x128xf32, #tpu.memory_space<vmem>>, %arg3: memref<1x16x128xf32, #tpu.memory_space<vmem>>, %arg4: memref<1x16x128xf32, #tpu.memory_space<vmem>>) attributes {dimension_semantics = [#tpu.dimension_semantics<parallel>], iteration_bounds = array<i64: 2>, scalar_prefetch = 0 : i64, scratch_operands = 0 : i64, tpu.core_type = #tpu.core_type<tc>, window_params = [{transform_indices = @transform_0, window_bounds = array<i64: 1, 16, 128>}, {transform_indices = @transform_1, window_bounds = array<i64: 1, 16, 128>}, {transform_indices = @transform_2, window_bounds = array<i64: 1, 16, 128>}, {transform_indices = @transform_3, window_bounds = array<i64: 1, 16, 128>}]} {
    %0 = tpu.iota {dimensions = array<i32: 1>} : vector<16x16xi32>
    %c10_i32 = arith.constant 10 : i32
    %1 = vector.broadcast %c10_i32 : i32 to vector<16x16xi32>
    %2 = arith.cmpi slt, %0, %1 : vector<16x16xi32>
    %c0 = arith.constant 0 : index
    %c0_0 = arith.constant 0 : index
    %c0_1 = arith.constant 0 : index
    %3 = vector.load %arg1[%c0, %c0_0, %c0_1] : memref<1x16x128xf32, #tpu.memory_space<vmem>>, vector<1x16x64xf32>
    %4 = vector.shape_cast %3 : vector<1x16x64xf32> to vector<16x64xf32>
    %5 = arith.truncf %4 : vector<16x64xf32> to vector<16x64xbf16>
    %c0_2 = arith.constant 0 : index
    %c0_3 = arith.constant 0 : index
    %c0_4 = arith.constant 0 : index
    %6 = vector.load %arg2[%c0_2, %c0_3, %c0_4] : memref<1x16x128xf32, #tpu.memory_space<vmem>>, vector<1x16x64xf32>
    %7 = vector.shape_cast %6 : vector<1x16x64xf32> to vector<16x64xf32>
    %8 = arith.truncf %7 : vector<16x64xf32> to vector<16x64xbf16>
    %c0_5 = arith.constant 0 : index
    %c0_6 = arith.constant 0 : index
    %c0_7 = arith.constant 0 : index
    %9 = vector.load %arg3[%c0_5, %c0_6, %c0_7] : memref<1x16x128xf32, #tpu.memory_space<vmem>>, vector<1x16x64xf32>
    %10 = vector.shape_cast %9 : vector<1x16x64xf32> to vector<16x64xf32>
    %11 = arith.truncf %10 : vector<16x64xf32> to vector<16x64xbf16>
    %12 = tpu.transpose %8, [1, 0] : vector<16x64xbf16> -> vector<64x16xbf16>
    %cst = arith.constant dense<0.000000e+00> : vector<16x16xf32>
    %13 = tpu.matmul %5, %12, %cst {dimension_numbers = #tpu.dot_dimension_numbers<[1], [0], [0], [1], [0, 0, 1, 1], [], []>} : vector<16x64xbf16>, vector<64x16xbf16>, vector<16x16xf32> -> vector<16x16xf32>
    %cst_8 = arith.constant 1.250000e-01 : f32
    %14 = vector.broadcast %cst_8 : f32 to vector<16x16xf32>
    %15 = arith.mulf %13, %14 : vector<16x16xf32>
    %cst_9 = arith.constant -1.000000e+30 : f32
    %16 = vector.broadcast %cst_9 : f32 to vector<16x16xf32>
    %17 = arith.select %2, %15, %16 : vector<16x16xi1>, vector<16x16xf32>
    %cst_10 = arith.constant dense<0xFF800000> : vector<16xf32>
    %18 = vector.multi_reduction <maximumf>, %17, %cst_10 [1] : vector<16x16xf32> to vector<16xf32>
    %19 = vector.shape_cast %18 : vector<16xf32> to vector<16x1xf32>
    %20 = vector.broadcast %19 : vector<16x1xf32> to vector<16x16xf32>
    %21 = arith.subf %17, %20 : vector<16x16xf32>
    %22 = math.exp %21 : vector<16x16xf32>
    %cst_11 = arith.constant dense<0.000000e+00> : vector<16xf32>
    %23 = vector.multi_reduction <add>, %22, %cst_11 [1] : vector<16x16xf32> to vector<16xf32>
    %24 = vector.shape_cast %23 : vector<16xf32> to vector<16x1xf32>
    %25 = tpu.reciprocal %24 {approx = true} : vector<16x1xf32> -> vector<16x1xf32>
    %26 = vector.broadcast %25 : vector<16x1xf32> to vector<16x16xf32>
    %27 = arith.mulf %22, %26 : vector<16x16xf32>
    %28 = arith.truncf %27 : vector<16x16xf32> to vector<16x16xbf16>
    %cst_12 = arith.constant dense<0.000000e+00> : vector<16x64xf32>
    %29 = tpu.matmul %28, %11, %cst_12 {dimension_numbers = #tpu.dot_dimension_numbers<[1], [0], [0], [1], [0, 0, 1, 1], [], []>} : vector<16x16xbf16>, vector<16x64xbf16>, vector<16x64xf32> -> vector<16x64xf32>
    %c0_13 = arith.constant 0 : index
    %c0_14 = arith.constant 0 : index
    %c0_15 = arith.constant 0 : index
    %30 = vector.load %arg4[%c0_13, %c0_14, %c0_15] : memref<1x16x128xf32, #tpu.memory_space<vmem>>, vector<1x16x64xf32>
    %31 = vector.shape_cast %30 : vector<1x16x64xf32> to vector<16x64xf32>
    %32 = vector.shape_cast %29 : vector<16x64xf32> to vector<1x16x64xf32>
    tpu.vector_store %arg4[%c0_13, %c0_14, %c0_15], %32 {strides = array<i32>} : memref<1x16x128xf32, #tpu.memory_space<vmem>>, vector<1x16x64xf32>,
    %c0_16 = arith.constant 0 : index
    %c0_17 = arith.constant 0 : index
    %c64 = arith.constant 64 : index
    %33 = vector.load %arg1[%c0_16, %c0_17, %c64] : memref<1x16x128xf32, #tpu.memory_space<vmem>>, vector<1x16x64xf32>
    %34 = vector.shape_cast %33 : vector<1x16x64xf32> to vector<16x64xf32>
    %35 = arith.truncf %34 : vector<16x64xf32> to vector<16x64xbf16>
    %c0_18 = arith.constant 0 : index
    %c0_19 = arith.constant 0 : index
    %c64_20 = arith.constant 64 : index
    %36 = vector.load %arg2[%c0_18, %c0_19, %c64_20] : memref<1x16x128xf32, #tpu.memory_space<vmem>>, vector<1x16x64xf32>
    %37 = vector.shape_cast %36 : vector<1x16x64xf32> to vector<16x64xf32>
    %38 = arith.truncf %37 : vector<16x64xf32> to vector<16x64xbf16>
    %c0_21 = arith.constant 0 : index
    %c0_22 = arith.constant 0 : index
    %c64_23 = arith.constant 64 : index
    %39 = vector.load %arg3[%c0_21, %c0_22, %c64_23] : memref<1x16x128xf32, #tpu.memory_space<vmem>>, vector<1x16x64xf32>
    %40 = vector.shape_cast %39 : vector<1x16x64xf32> to vector<16x64xf32>
    %41 = arith.truncf %40 : vector<16x64xf32> to vector<16x64xbf16>
    %42 = tpu.transpose %38, [1, 0] : vector<16x64xbf16> -> vector<64x16xbf16>
    %cst_24 = arith.constant dense<0.000000e+00> : vector<16x16xf32>
    %43 = tpu.matmul %35, %42, %cst_24 {dimension_numbers = #tpu.dot_dimension_numbers<[1], [0], [0], [1], [0, 0, 1, 1], [], []>} : vector<16x64xbf16>, vector<64x16xbf16>, vector<16x16xf32> -> vector<16x16xf32>
    %cst_25 = arith.constant 1.250000e-01 : f32
    %44 = vector.broadcast %cst_25 : f32 to vector<16x16xf32>
    %45 = arith.mulf %43, %44 : vector<16x16xf32>
    %cst_26 = arith.constant -1.000000e+30 : f32
    %46 = vector.broadcast %cst_26 : f32 to vector<16x16xf32>
    %47 = arith.select %2, %45, %46 : vector<16x16xi1>, vector<16x16xf32>
    %cst_27 = arith.constant dense<0xFF800000> : vector<16xf32>
    %48 = vector.multi_reduction <maximumf>, %47, %cst_27 [1] : vector<16x16xf32> to vector<16xf32>
    %49 = vector.shape_cast %48 : vector<16xf32> to vector<16x1xf32>
    %50 = vector.broadcast %49 : vector<16x1xf32> to vector<16x16xf32>
    %51 = arith.subf %47, %50 : vector<16x16xf32>
    %52 = math.exp %51 : vector<16x16xf32>
    %cst_28 = arith.constant dense<0.000000e+00> : vector<16xf32>
    %53 = vector.multi_reduction <add>, %52, %cst_28 [1] : vector<16x16xf32> to vector<16xf32>
    %54 = vector.shape_cast %53 : vector<16xf32> to vector<16x1xf32>
    %55 = tpu.reciprocal %54 {approx = true} : vector<16x1xf32> -> vector<16x1xf32>
    %56 = vector.broadcast %55 : vector<16x1xf32> to vector<16x16xf32>
    %57 = arith.mulf %52, %56 : vector<16x16xf32>
    %58 = arith.truncf %57 : vector<16x16xf32> to vector<16x16xbf16>
    %cst_29 = arith.constant dense<0.000000e+00> : vector<16x64xf32>
    %59 = tpu.matmul %58, %41, %cst_29 {dimension_numbers = #tpu.dot_dimension_numbers<[1], [0], [0], [1], [0, 0, 1, 1], [], []>} : vector<16x16xbf16>, vector<16x64xbf16>, vector<16x64xf32> -> vector<16x64xf32>
    %c0_30 = arith.constant 0 : index
    %c0_31 = arith.constant 0 : index
    %c64_32 = arith.constant 64 : index
    %60 = vector.load %arg4[%c0_30, %c0_31, %c64_32] : memref<1x16x128xf32, #tpu.memory_space<vmem>>, vector<1x16x64xf32>
    %61 = vector.shape_cast %60 : vector<1x16x64xf32> to vector<16x64xf32>
    %62 = vector.shape_cast %59 : vector<16x64xf32> to vector<1x16x64xf32>
    tpu.vector_store %arg4[%c0_30, %c0_31, %c64_32], %62 {strides = array<i32>} : memref<1x16x128xf32, #tpu.memory_space<vmem>>, vector<1x16x64xf32>,
    return
  }
  func.func @transform_0(%arg0: i32) -> (i32, i32, i32) {
    %c0_i32 = arith.constant 0 : i32
    %c0_i32_0 = arith.constant 0 : i32
    %c0_i32_1 = arith.constant 0 : i32
    return %arg0, %c0_i32, %c0_i32_0 : i32, i32, i32
  }
  func.func @transform_1(%arg0: i32) -> (i32, i32, i32) {
    %c0_i32 = arith.constant 0 : i32
    %c0_i32_0 = arith.constant 0 : i32
    %c0_i32_1 = arith.constant 0 : i32
    return %arg0, %c0_i32, %c0_i32_0 : i32, i32, i32
  }
  func.func @transform_2(%arg0: i32) -> (i32, i32, i32) {
    %c0_i32 = arith.constant 0 : i32
    %c0_i32_0 = arith.constant 0 : i32
    %c0_i32_1 = arith.constant 0 : i32
    return %arg0, %c0_i32, %c0_i32_0 : i32, i32, i32
  }
  func.func @transform_3(%arg0: i32) -> (i32, i32, i32) {
    %c0_i32 = arith.constant 0 : i32
    %c0_i32_0 = arith.constant 0 : i32
    %c0_i32_1 = arith.constant 0 : i32
    return %arg0, %c0_i32, %c0_i32_0 : i32, i32, i32
  }
}

module attributes {stable_mosaic.version = 11 : i64} {
  func.func @_matmul_add_ln_kernel(%arg0: i32, %arg1: i32, %arg2: memref<20x128xf32, #tpu.memory_space<vmem>>, %arg3: memref<128x128xbf16, #tpu.memory_space<vmem>>, %arg4: memref<1x128xf32, #tpu.memory_space<vmem>>, %arg5: memref<20x128xf32, #tpu.memory_space<vmem>>, %arg6: memref<1x128xf32, #tpu.memory_space<vmem>>, %arg7: memref<1x128xf32, #tpu.memory_space<vmem>>, %arg8: memref<20x128xf32, #tpu.memory_space<vmem>>, %arg9: memref<20x128xf32, #tpu.memory_space<vmem>>) attributes {dimension_semantics = [#tpu.dimension_semantics<parallel>, #tpu.dimension_semantics<arbitrary>], iteration_bounds = array<i64: 1, 1>, scalar_prefetch = 0 : i64, scratch_operands = 1 : i64, tpu.core_type = #tpu.core_type<tc>, window_params = [{transform_indices = @transform_0, window_bounds = array<i64: 20, 128>}, {transform_indices = @transform_1, window_bounds = array<i64: 128, 128>}, {pipeline_mode = #tpu.pipeline_mode<synchronous>, transform_indices = @transform_2, window_bounds = array<i64: 1, 128>}, {transform_indices = @transform_3, window_bounds = array<i64: 20, 128>}, {pipeline_mode = #tpu.pipeline_mode<synchronous>, transform_indices = @transform_4, window_bounds = array<i64: 1, 128>}, {pipeline_mode = #tpu.pipeline_mode<synchronous>, transform_indices = @transform_5, window_bounds = array<i64: 1, 128>}, {transform_indices = @transform_6, window_bounds = array<i64: 20, 128>}]} {
    %c0_i32 = arith.constant 0 : i32
    %0 = arith.cmpi eq, %arg1, %c0_i32 : i32
    %1 = arith.extui %0 : i1 to i32
    %c0_i32_0 = arith.constant 0 : i32
    %2 = arith.cmpi ne, %1, %c0_i32_0 : i32
    scf.if %2 {
      %cst_10 = arith.constant 0.000000e+00 : f32
      %13 = vector.broadcast %cst_10 : f32 to vector<20x128xf32>
      %c0_11 = arith.constant 0 : index
      %c0_12 = arith.constant 0 : index
      %14 = vector.load %arg9[%c0_11, %c0_12] : memref<20x128xf32, #tpu.memory_space<vmem>>, vector<20x128xf32>
      tpu.vector_store %arg9[%c0_11, %c0_12], %13 {strides = array<i32>} : memref<20x128xf32, #tpu.memory_space<vmem>>, vector<20x128xf32>,
    } else {
    }
    %c0 = arith.constant 0 : index
    %c0_1 = arith.constant 0 : index
    %3 = vector.load %arg9[%c0, %c0_1] : memref<20x128xf32, #tpu.memory_space<vmem>>, vector<20x128xf32>
    %c0_2 = arith.constant 0 : index
    %c0_3 = arith.constant 0 : index
    %4 = vector.load %arg2[%c0_2, %c0_3] : memref<20x128xf32, #tpu.memory_space<vmem>>, vector<20x128xf32>
    %5 = arith.truncf %4 : vector<20x128xf32> to vector<20x128xbf16>
    %c0_4 = arith.constant 0 : index
    %c0_5 = arith.constant 0 : index
    %6 = vector.load %arg3[%c0_4, %c0_5] : memref<128x128xbf16, #tpu.memory_space<vmem>>, vector<128x128xbf16>
    %cst = arith.constant dense<0.000000e+00> : vector<20x128xf32>
    %7 = tpu.matmul %5, %6, %cst {dimension_numbers = #tpu.dot_dimension_numbers<[1], [0], [0], [1], [0, 0, 1, 1], [], []>} : vector<20x128xbf16>, vector<128x128xbf16>, vector<20x128xf32> -> vector<20x128xf32>
    %8 = arith.addf %3, %7 : vector<20x128xf32>
    %c0_6 = arith.constant 0 : index
    %c0_7 = arith.constant 0 : index
    %9 = vector.load %arg9[%c0_6, %c0_7] : memref<20x128xf32, #tpu.memory_space<vmem>>, vector<20x128xf32>
    tpu.vector_store %arg9[%c0_6, %c0_7], %8 {strides = array<i32>} : memref<20x128xf32, #tpu.memory_space<vmem>>, vector<20x128xf32>,
    %c0_i32_8 = arith.constant 0 : i32
    %10 = arith.cmpi eq, %arg1, %c0_i32_8 : i32
    %11 = arith.extui %10 : i1 to i32
    %c0_i32_9 = arith.constant 0 : i32
    %12 = arith.cmpi ne, %11, %c0_i32_9 : i32
    scf.if %12 {
      %c0_10 = arith.constant 0 : index
      %c0_11 = arith.constant 0 : index
      %13 = vector.load %arg9[%c0_10, %c0_11] : memref<20x128xf32, #tpu.memory_space<vmem>>, vector<20x128xf32>
      %c0_12 = arith.constant 0 : index
      %c0_13 = arith.constant 0 : index
      %14 = vector.load %arg4[%c0_12, %c0_13] : memref<1x128xf32, #tpu.memory_space<vmem>>, vector<1x128xf32>
      %15 = vector.broadcast %14 : vector<1x128xf32> to vector<20x128xf32>
      %16 = arith.addf %13, %15 : vector<20x128xf32>
      %c0_14 = arith.constant 0 : index
      %c0_15 = arith.constant 0 : index
      %17 = vector.load %arg5[%c0_14, %c0_15] : memref<20x128xf32, #tpu.memory_space<vmem>>, vector<20x128xf32>
      %18 = arith.addf %16, %17 : vector<20x128xf32>
      %cst_16 = arith.constant dense<0.000000e+00> : vector<20xf32>
      %19 = vector.multi_reduction <add>, %18, %cst_16 [1] : vector<20x128xf32> to vector<20xf32>
      %20 = vector.shape_cast %19 : vector<20xf32> to vector<20x1xf32>
      %cst_17 = arith.constant 1.280000e+02 : f32
      %21 = vector.broadcast %cst_17 : f32 to vector<20x1xf32>
      %22 = arith.divf %20, %21 : vector<20x1xf32>
      %23 = vector.broadcast %22 : vector<20x1xf32> to vector<20x128xf32>
      %24 = arith.subf %18, %23 : vector<20x128xf32>
      %25 = arith.mulf %24, %24 : vector<20x128xf32>
      %cst_18 = arith.constant dense<0.000000e+00> : vector<20xf32>
      %26 = vector.multi_reduction <add>, %25, %cst_18 [1] : vector<20x128xf32> to vector<20xf32>
      %27 = vector.shape_cast %26 : vector<20xf32> to vector<20x1xf32>
      %cst_19 = arith.constant 1.280000e+02 : f32
      %28 = vector.broadcast %cst_19 : f32 to vector<20x1xf32>
      %29 = arith.divf %27, %28 : vector<20x1xf32>
      %30 = vector.broadcast %22 : vector<20x1xf32> to vector<20x128xf32>
      %31 = arith.subf %18, %30 : vector<20x128xf32>
      %cst_20 = arith.constant 9.99999996E-13 : f32
      %32 = vector.broadcast %cst_20 : f32 to vector<20x1xf32>
      %33 = arith.addf %29, %32 : vector<20x1xf32>
      %34 = math.rsqrt %33 : vector<20x1xf32>
      %35 = vector.broadcast %34 : vector<20x1xf32> to vector<20x128xf32>
      %36 = arith.mulf %31, %35 : vector<20x128xf32>
      %c0_21 = arith.constant 0 : index
      %c0_22 = arith.constant 0 : index
      %37 = vector.load %arg6[%c0_21, %c0_22] : memref<1x128xf32, #tpu.memory_space<vmem>>, vector<1x128xf32>
      %38 = vector.broadcast %37 : vector<1x128xf32> to vector<20x128xf32>
      %39 = arith.mulf %36, %38 : vector<20x128xf32>
      %c0_23 = arith.constant 0 : index
      %c0_24 = arith.constant 0 : index
      %40 = vector.load %arg7[%c0_23, %c0_24] : memref<1x128xf32, #tpu.memory_space<vmem>>, vector<1x128xf32>
      %41 = vector.broadcast %40 : vector<1x128xf32> to vector<20x128xf32>
      %42 = arith.addf %39, %41 : vector<20x128xf32>
      %c0_25 = arith.constant 0 : index
      %c0_26 = arith.constant 0 : index
      %43 = vector.load %arg8[%c0_25, %c0_26] : memref<20x128xf32, #tpu.memory_space<vmem>>, vector<20x128xf32>
      tpu.vector_store %arg8[%c0_25, %c0_26], %42 {strides = array<i32>} : memref<20x128xf32, #tpu.memory_space<vmem>>, vector<20x128xf32>,
    } else {
    }
    return
  }
  func.func @transform_0(%arg0: i32, %arg1: i32) -> (i32, i32) {
    %c0_i32 = arith.constant 0 : i32
    return %arg0, %arg1 : i32, i32
  }
  func.func @transform_1(%arg0: i32, %arg1: i32) -> (i32, i32) {
    %c0_i32 = arith.constant 0 : i32
    %c0_i32_0 = arith.constant 0 : i32
    return %arg1, %c0_i32 : i32, i32
  }
  func.func @transform_2(%arg0: i32, %arg1: i32) -> (i32, i32) {
    %c0_i32 = arith.constant 0 : i32
    %c0_i32_0 = arith.constant 0 : i32
    %c0_i32_1 = arith.constant 0 : i32
    return %c0_i32, %c0_i32_0 : i32, i32
  }
  func.func @transform_3(%arg0: i32, %arg1: i32) -> (i32, i32) {
    %c0_i32 = arith.constant 0 : i32
    %c0_i32_0 = arith.constant 0 : i32
    return %arg0, %c0_i32 : i32, i32
  }
  func.func @transform_4(%arg0: i32, %arg1: i32) -> (i32, i32) {
    %c0_i32 = arith.constant 0 : i32
    %c0_i32_0 = arith.constant 0 : i32
    %c0_i32_1 = arith.constant 0 : i32
    return %c0_i32, %c0_i32_0 : i32, i32
  }
  func.func @transform_5(%arg0: i32, %arg1: i32) -> (i32, i32) {
    %c0_i32 = arith.constant 0 : i32
    %c0_i32_0 = arith.constant 0 : i32
    %c0_i32_1 = arith.constant 0 : i32
    return %c0_i32, %c0_i32_0 : i32, i32
  }
  func.func @transform_6(%arg0: i32, %arg1: i32) -> (i32, i32) {
    %c0_i32 = arith.constant 0 : i32
    %c0_i32_0 = arith.constant 0 : i32
    return %arg0, %c0_i32 : i32, i32
  }
}

module attributes {stable_mosaic.version = 11 : i64} {
  func.func @_matmul_kernel(%arg0: i32, %arg1: i32, %arg2: i32, %arg3: memref<20x128xf32, #tpu.memory_space<vmem>>, %arg4: memref<128x256xbf16, #tpu.memory_space<vmem>>, %arg5: memref<1x256xf32, #tpu.memory_space<vmem>>, %arg6: memref<20x256xf32, #tpu.memory_space<vmem>>, %arg7: memref<20x256xf32, #tpu.memory_space<vmem>>) attributes {dimension_semantics = [#tpu.dimension_semantics<parallel>, #tpu.dimension_semantics<parallel>, #tpu.dimension_semantics<arbitrary>], iteration_bounds = array<i64: 1, 1, 1>, scalar_prefetch = 0 : i64, scratch_operands = 1 : i64, tpu.core_type = #tpu.core_type<tc>, window_params = [{transform_indices = @transform_0, window_bounds = array<i64: 20, 128>}, {transform_indices = @transform_1, window_bounds = array<i64: 128, 256>}, {transform_indices = @transform_2, window_bounds = array<i64: 1, 256>}, {transform_indices = @transform_3, window_bounds = array<i64: 20, 256>}]} {
    %c0_i32 = arith.constant 0 : i32
    %0 = arith.cmpi eq, %arg2, %c0_i32 : i32
    %1 = arith.extui %0 : i1 to i32
    %c0_i32_0 = arith.constant 0 : i32
    %2 = arith.cmpi ne, %1, %c0_i32_0 : i32
    scf.if %2 {
      %cst_10 = arith.constant 0.000000e+00 : f32
      %13 = vector.broadcast %cst_10 : f32 to vector<20x256xf32>
      %c0_11 = arith.constant 0 : index
      %c0_12 = arith.constant 0 : index
      %14 = vector.load %arg7[%c0_11, %c0_12] : memref<20x256xf32, #tpu.memory_space<vmem>>, vector<20x256xf32>
      tpu.vector_store %arg7[%c0_11, %c0_12], %13 {strides = array<i32>} : memref<20x256xf32, #tpu.memory_space<vmem>>, vector<20x256xf32>,
    } else {
    }
    %c0 = arith.constant 0 : index
    %c0_1 = arith.constant 0 : index
    %3 = vector.load %arg7[%c0, %c0_1] : memref<20x256xf32, #tpu.memory_space<vmem>>, vector<20x256xf32>
    %c0_2 = arith.constant 0 : index
    %c0_3 = arith.constant 0 : index
    %4 = vector.load %arg3[%c0_2, %c0_3] : memref<20x128xf32, #tpu.memory_space<vmem>>, vector<20x128xf32>
    %5 = arith.truncf %4 : vector<20x128xf32> to vector<20x128xbf16>
    %c0_4 = arith.constant 0 : index
    %c0_5 = arith.constant 0 : index
    %6 = vector.load %arg4[%c0_4, %c0_5] : memref<128x256xbf16, #tpu.memory_space<vmem>>, vector<128x256xbf16>
    %cst = arith.constant dense<0.000000e+00> : vector<20x256xf32>
    %7 = tpu.matmul %5, %6, %cst {dimension_numbers = #tpu.dot_dimension_numbers<[1], [0], [0], [1], [0, 0, 1, 1], [], []>} : vector<20x128xbf16>, vector<128x256xbf16>, vector<20x256xf32> -> vector<20x256xf32>
    %8 = arith.addf %3, %7 : vector<20x256xf32>
    %c0_6 = arith.constant 0 : index
    %c0_7 = arith.constant 0 : index
    %9 = vector.load %arg7[%c0_6, %c0_7] : memref<20x256xf32, #tpu.memory_space<vmem>>, vector<20x256xf32>
    tpu.vector_store %arg7[%c0_6, %c0_7], %8 {strides = array<i32>} : memref<20x256xf32, #tpu.memory_space<vmem>>, vector<20x256xf32>,
    %c0_i32_8 = arith.constant 0 : i32
    %10 = arith.cmpi eq, %arg2, %c0_i32_8 : i32
    %11 = arith.extui %10 : i1 to i32
    %c0_i32_9 = arith.constant 0 : i32
    %12 = arith.cmpi ne, %11, %c0_i32_9 : i32
    scf.if %12 {
      %c0_10 = arith.constant 0 : index
      %c0_11 = arith.constant 0 : index
      %13 = vector.load %arg7[%c0_10, %c0_11] : memref<20x256xf32, #tpu.memory_space<vmem>>, vector<20x256xf32>
      %c0_12 = arith.constant 0 : index
      %c0_13 = arith.constant 0 : index
      %14 = vector.load %arg5[%c0_12, %c0_13] : memref<1x256xf32, #tpu.memory_space<vmem>>, vector<1x256xf32>
      %15 = vector.broadcast %14 : vector<1x256xf32> to vector<20x256xf32>
      %16 = arith.addf %13, %15 : vector<20x256xf32>
      %17 = arith.mulf %16, %16 : vector<20x256xf32>
      %18 = arith.mulf %16, %17 : vector<20x256xf32>
      %cst_14 = arith.constant 4.471500e-02 : f32
      %19 = vector.broadcast %cst_14 : f32 to vector<20x256xf32>
      %20 = arith.mulf %19, %18 : vector<20x256xf32>
      %21 = arith.addf %16, %20 : vector<20x256xf32>
      %cst_15 = arith.constant 0.797884583 : f32
      %22 = vector.broadcast %cst_15 : f32 to vector<20x256xf32>
      %23 = arith.mulf %22, %21 : vector<20x256xf32>
      %24 = math.tanh %23 : vector<20x256xf32>
      %cst_16 = arith.constant 1.000000e+00 : f32
      %25 = vector.broadcast %cst_16 : f32 to vector<20x256xf32>
      %26 = arith.addf %25, %24 : vector<20x256xf32>
      %cst_17 = arith.constant 5.000000e-01 : f32
      %27 = vector.broadcast %cst_17 : f32 to vector<20x256xf32>
      %28 = arith.mulf %27, %26 : vector<20x256xf32>
      %29 = arith.mulf %16, %28 : vector<20x256xf32>
      %c0_18 = arith.constant 0 : index
      %c0_19 = arith.constant 0 : index
      %30 = vector.load %arg6[%c0_18, %c0_19] : memref<20x256xf32, #tpu.memory_space<vmem>>, vector<20x256xf32>
      tpu.vector_store %arg6[%c0_18, %c0_19], %29 {strides = array<i32>} : memref<20x256xf32, #tpu.memory_space<vmem>>, vector<20x256xf32>,
    } else {
    }
    return
  }
  func.func @transform_0(%arg0: i32, %arg1: i32, %arg2: i32) -> (i32, i32) {
    %c0_i32 = arith.constant 0 : i32
    return %arg0, %arg2 : i32, i32
  }
  func.func @transform_1(%arg0: i32, %arg1: i32, %arg2: i32) -> (i32, i32) {
    %c0_i32 = arith.constant 0 : i32
    return %arg2, %arg1 : i32, i32
  }
  func.func @transform_2(%arg0: i32, %arg1: i32, %arg2: i32) -> (i32, i32) {
    %c0_i32 = arith.constant 0 : i32
    %c0_i32_0 = arith.constant 0 : i32
    return %c0_i32, %arg1 : i32, i32
  }
  func.func @transform_3(%arg0: i32, %arg1: i32, %arg2: i32) -> (i32, i32) {
    %c0_i32 = arith.constant 0 : i32
    return %arg0, %arg1 : i32, i32
  }
}

module attributes {stable_mosaic.version = 11 : i64} {
  func.func @_matmul_add_ln_kernel(%arg0: i32, %arg1: i32, %arg2: memref<20x256xf32, #tpu.memory_space<vmem>>, %arg3: memref<256x128xbf16, #tpu.memory_space<vmem>>, %arg4: memref<1x128xf32, #tpu.memory_space<vmem>>, %arg5: memref<20x128xf32, #tpu.memory_space<vmem>>, %arg6: memref<1x128xf32, #tpu.memory_space<vmem>>, %arg7: memref<1x128xf32, #tpu.memory_space<vmem>>, %arg8: memref<20x128xf32, #tpu.memory_space<vmem>>, %arg9: memref<20x128xf32, #tpu.memory_space<vmem>>) attributes {dimension_semantics = [#tpu.dimension_semantics<parallel>, #tpu.dimension_semantics<arbitrary>], iteration_bounds = array<i64: 1, 1>, scalar_prefetch = 0 : i64, scratch_operands = 1 : i64, tpu.core_type = #tpu.core_type<tc>, window_params = [{transform_indices = @transform_0, window_bounds = array<i64: 20, 256>}, {transform_indices = @transform_1, window_bounds = array<i64: 256, 128>}, {pipeline_mode = #tpu.pipeline_mode<synchronous>, transform_indices = @transform_2, window_bounds = array<i64: 1, 128>}, {transform_indices = @transform_3, window_bounds = array<i64: 20, 128>}, {pipeline_mode = #tpu.pipeline_mode<synchronous>, transform_indices = @transform_4, window_bounds = array<i64: 1, 128>}, {pipeline_mode = #tpu.pipeline_mode<synchronous>, transform_indices = @transform_5, window_bounds = array<i64: 1, 128>}, {transform_indices = @transform_6, window_bounds = array<i64: 20, 128>}]} {
    %c0_i32 = arith.constant 0 : i32
    %0 = arith.cmpi eq, %arg1, %c0_i32 : i32
    %1 = arith.extui %0 : i1 to i32
    %c0_i32_0 = arith.constant 0 : i32
    %2 = arith.cmpi ne, %1, %c0_i32_0 : i32
    scf.if %2 {
      %cst_10 = arith.constant 0.000000e+00 : f32
      %13 = vector.broadcast %cst_10 : f32 to vector<20x128xf32>
      %c0_11 = arith.constant 0 : index
      %c0_12 = arith.constant 0 : index
      %14 = vector.load %arg9[%c0_11, %c0_12] : memref<20x128xf32, #tpu.memory_space<vmem>>, vector<20x128xf32>
      tpu.vector_store %arg9[%c0_11, %c0_12], %13 {strides = array<i32>} : memref<20x128xf32, #tpu.memory_space<vmem>>, vector<20x128xf32>,
    } else {
    }
    %c0 = arith.constant 0 : index
    %c0_1 = arith.constant 0 : index
    %3 = vector.load %arg9[%c0, %c0_1] : memref<20x128xf32, #tpu.memory_space<vmem>>, vector<20x128xf32>
    %c0_2 = arith.constant 0 : index
    %c0_3 = arith.constant 0 : index
    %4 = vector.load %arg2[%c0_2, %c0_3] : memref<20x256xf32, #tpu.memory_space<vmem>>, vector<20x256xf32>
    %5 = arith.truncf %4 : vector<20x256xf32> to vector<20x256xbf16>
    %c0_4 = arith.constant 0 : index
    %c0_5 = arith.constant 0 : index
    %6 = vector.load %arg3[%c0_4, %c0_5] : memref<256x128xbf16, #tpu.memory_space<vmem>>, vector<256x128xbf16>
    %cst = arith.constant dense<0.000000e+00> : vector<20x128xf32>
    %7 = tpu.matmul %5, %6, %cst {dimension_numbers = #tpu.dot_dimension_numbers<[1], [0], [0], [1], [0, 0, 1, 1], [], []>} : vector<20x256xbf16>, vector<256x128xbf16>, vector<20x128xf32> -> vector<20x128xf32>
    %8 = arith.addf %3, %7 : vector<20x128xf32>
    %c0_6 = arith.constant 0 : index
    %c0_7 = arith.constant 0 : index
    %9 = vector.load %arg9[%c0_6, %c0_7] : memref<20x128xf32, #tpu.memory_space<vmem>>, vector<20x128xf32>
    tpu.vector_store %arg9[%c0_6, %c0_7], %8 {strides = array<i32>} : memref<20x128xf32, #tpu.memory_space<vmem>>, vector<20x128xf32>,
    %c0_i32_8 = arith.constant 0 : i32
    %10 = arith.cmpi eq, %arg1, %c0_i32_8 : i32
    %11 = arith.extui %10 : i1 to i32
    %c0_i32_9 = arith.constant 0 : i32
    %12 = arith.cmpi ne, %11, %c0_i32_9 : i32
    scf.if %12 {
      %c0_10 = arith.constant 0 : index
      %c0_11 = arith.constant 0 : index
      %13 = vector.load %arg9[%c0_10, %c0_11] : memref<20x128xf32, #tpu.memory_space<vmem>>, vector<20x128xf32>
      %c0_12 = arith.constant 0 : index
      %c0_13 = arith.constant 0 : index
      %14 = vector.load %arg4[%c0_12, %c0_13] : memref<1x128xf32, #tpu.memory_space<vmem>>, vector<1x128xf32>
      %15 = vector.broadcast %14 : vector<1x128xf32> to vector<20x128xf32>
      %16 = arith.addf %13, %15 : vector<20x128xf32>
      %c0_14 = arith.constant 0 : index
      %c0_15 = arith.constant 0 : index
      %17 = vector.load %arg5[%c0_14, %c0_15] : memref<20x128xf32, #tpu.memory_space<vmem>>, vector<20x128xf32>
      %18 = arith.addf %16, %17 : vector<20x128xf32>
      %cst_16 = arith.constant dense<0.000000e+00> : vector<20xf32>
      %19 = vector.multi_reduction <add>, %18, %cst_16 [1] : vector<20x128xf32> to vector<20xf32>
      %20 = vector.shape_cast %19 : vector<20xf32> to vector<20x1xf32>
      %cst_17 = arith.constant 1.280000e+02 : f32
      %21 = vector.broadcast %cst_17 : f32 to vector<20x1xf32>
      %22 = arith.divf %20, %21 : vector<20x1xf32>
      %23 = vector.broadcast %22 : vector<20x1xf32> to vector<20x128xf32>
      %24 = arith.subf %18, %23 : vector<20x128xf32>
      %25 = arith.mulf %24, %24 : vector<20x128xf32>
      %cst_18 = arith.constant dense<0.000000e+00> : vector<20xf32>
      %26 = vector.multi_reduction <add>, %25, %cst_18 [1] : vector<20x128xf32> to vector<20xf32>
      %27 = vector.shape_cast %26 : vector<20xf32> to vector<20x1xf32>
      %cst_19 = arith.constant 1.280000e+02 : f32
      %28 = vector.broadcast %cst_19 : f32 to vector<20x1xf32>
      %29 = arith.divf %27, %28 : vector<20x1xf32>
      %30 = vector.broadcast %22 : vector<20x1xf32> to vector<20x128xf32>
      %31 = arith.subf %18, %30 : vector<20x128xf32>
      %cst_20 = arith.constant 9.99999996E-13 : f32
      %32 = vector.broadcast %cst_20 : f32 to vector<20x1xf32>
      %33 = arith.addf %29, %32 : vector<20x1xf32>
      %34 = math.rsqrt %33 : vector<20x1xf32>
      %35 = vector.broadcast %34 : vector<20x1xf32> to vector<20x128xf32>
      %36 = arith.mulf %31, %35 : vector<20x128xf32>
      %c0_21 = arith.constant 0 : index
      %c0_22 = arith.constant 0 : index
      %37 = vector.load %arg6[%c0_21, %c0_22] : memref<1x128xf32, #tpu.memory_space<vmem>>, vector<1x128xf32>
      %38 = vector.broadcast %37 : vector<1x128xf32> to vector<20x128xf32>
      %39 = arith.mulf %36, %38 : vector<20x128xf32>
      %c0_23 = arith.constant 0 : index
      %c0_24 = arith.constant 0 : index
      %40 = vector.load %arg7[%c0_23, %c0_24] : memref<1x128xf32, #tpu.memory_space<vmem>>, vector<1x128xf32>
      %41 = vector.broadcast %40 : vector<1x128xf32> to vector<20x128xf32>
      %42 = arith.addf %39, %41 : vector<20x128xf32>
      %c0_25 = arith.constant 0 : index
      %c0_26 = arith.constant 0 : index
      %43 = vector.load %arg8[%c0_25, %c0_26] : memref<20x128xf32, #tpu.memory_space<vmem>>, vector<20x128xf32>
      tpu.vector_store %arg8[%c0_25, %c0_26], %42 {strides = array<i32>} : memref<20x128xf32, #tpu.memory_space<vmem>>, vector<20x128xf32>,
    } else {
    }
    return
  }
  func.func @transform_0(%arg0: i32, %arg1: i32) -> (i32, i32) {
    %c0_i32 = arith.constant 0 : i32
    return %arg0, %arg1 : i32, i32
  }
  func.func @transform_1(%arg0: i32, %arg1: i32) -> (i32, i32) {
    %c0_i32 = arith.constant 0 : i32
    %c0_i32_0 = arith.constant 0 : i32
    return %arg1, %c0_i32 : i32, i32
  }
  func.func @transform_2(%arg0: i32, %arg1: i32) -> (i32, i32) {
    %c0_i32 = arith.constant 0 : i32
    %c0_i32_0 = arith.constant 0 : i32
    %c0_i32_1 = arith.constant 0 : i32
    return %c0_i32, %c0_i32_0 : i32, i32
  }
  func.func @transform_3(%arg0: i32, %arg1: i32) -> (i32, i32) {
    %c0_i32 = arith.constant 0 : i32
    %c0_i32_0 = arith.constant 0 : i32
    return %arg0, %c0_i32 : i32, i32
  }
  func.func @transform_4(%arg0: i32, %arg1: i32) -> (i32, i32) {
    %c0_i32 = arith.constant 0 : i32
    %c0_i32_0 = arith.constant 0 : i32
    %c0_i32_1 = arith.constant 0 : i32
    return %c0_i32, %c0_i32_0 : i32, i32
  }
  func.func @transform_5(%arg0: i32, %arg1: i32) -> (i32, i32) {
    %c0_i32 = arith.constant 0 : i32
    %c0_i32_0 = arith.constant 0 : i32
    %c0_i32_1 = arith.constant 0 : i32
    return %c0_i32, %c0_i32_0 : i32, i32
  }
  func.func @transform_6(%arg0: i32, %arg1: i32) -> (i32, i32) {
    %c0_i32 = arith.constant 0 : i32
    %c0_i32_0 = arith.constant 0 : i32
    return %arg0, %c0_i32 : i32, i32
  }
}

module attributes {stable_mosaic.version = 11 : i64} {
  func.func @_matmul_kernel(%arg0: i32, %arg1: i32, %arg2: i32, %arg3: memref<20x128xf32, #tpu.memory_space<vmem>>, %arg4: memref<128x100xbf16, #tpu.memory_space<vmem>>, %arg5: memref<1x100xf32, #tpu.memory_space<vmem>>, %arg6: memref<20x100xf32, #tpu.memory_space<vmem>>, %arg7: memref<20x100xf32, #tpu.memory_space<vmem>>) attributes {dimension_semantics = [#tpu.dimension_semantics<parallel>, #tpu.dimension_semantics<parallel>, #tpu.dimension_semantics<arbitrary>], iteration_bounds = array<i64: 1, 1, 1>, scalar_prefetch = 0 : i64, scratch_operands = 1 : i64, tpu.core_type = #tpu.core_type<tc>, window_params = [{transform_indices = @transform_0, window_bounds = array<i64: 20, 128>}, {transform_indices = @transform_1, window_bounds = array<i64: 128, 100>}, {transform_indices = @transform_2, window_bounds = array<i64: 1, 100>}, {transform_indices = @transform_3, window_bounds = array<i64: 20, 100>}]} {
    %c0_i32 = arith.constant 0 : i32
    %0 = arith.cmpi eq, %arg2, %c0_i32 : i32
    %1 = arith.extui %0 : i1 to i32
    %c0_i32_0 = arith.constant 0 : i32
    %2 = arith.cmpi ne, %1, %c0_i32_0 : i32
    scf.if %2 {
      %cst_10 = arith.constant 0.000000e+00 : f32
      %13 = vector.broadcast %cst_10 : f32 to vector<20x100xf32>
      %c0_11 = arith.constant 0 : index
      %c0_12 = arith.constant 0 : index
      %14 = vector.load %arg7[%c0_11, %c0_12] : memref<20x100xf32, #tpu.memory_space<vmem>>, vector<20x100xf32>
      tpu.vector_store %arg7[%c0_11, %c0_12], %13 {strides = array<i32>} : memref<20x100xf32, #tpu.memory_space<vmem>>, vector<20x100xf32>,
    } else {
    }
    %c0 = arith.constant 0 : index
    %c0_1 = arith.constant 0 : index
    %3 = vector.load %arg7[%c0, %c0_1] : memref<20x100xf32, #tpu.memory_space<vmem>>, vector<20x100xf32>
    %c0_2 = arith.constant 0 : index
    %c0_3 = arith.constant 0 : index
    %4 = vector.load %arg3[%c0_2, %c0_3] : memref<20x128xf32, #tpu.memory_space<vmem>>, vector<20x128xf32>
    %5 = arith.truncf %4 : vector<20x128xf32> to vector<20x128xbf16>
    %c0_4 = arith.constant 0 : index
    %c0_5 = arith.constant 0 : index
    %6 = vector.load %arg4[%c0_4, %c0_5] : memref<128x100xbf16, #tpu.memory_space<vmem>>, vector<128x100xbf16>
    %cst = arith.constant dense<0.000000e+00> : vector<20x100xf32>
    %7 = tpu.matmul %5, %6, %cst {dimension_numbers = #tpu.dot_dimension_numbers<[1], [0], [0], [1], [0, 0, 1, 1], [], []>} : vector<20x128xbf16>, vector<128x100xbf16>, vector<20x100xf32> -> vector<20x100xf32>
    %8 = arith.addf %3, %7 : vector<20x100xf32>
    %c0_6 = arith.constant 0 : index
    %c0_7 = arith.constant 0 : index
    %9 = vector.load %arg7[%c0_6, %c0_7] : memref<20x100xf32, #tpu.memory_space<vmem>>, vector<20x100xf32>
    tpu.vector_store %arg7[%c0_6, %c0_7], %8 {strides = array<i32>} : memref<20x100xf32, #tpu.memory_space<vmem>>, vector<20x100xf32>,
    %c0_i32_8 = arith.constant 0 : i32
    %10 = arith.cmpi eq, %arg2, %c0_i32_8 : i32
    %11 = arith.extui %10 : i1 to i32
    %c0_i32_9 = arith.constant 0 : i32
    %12 = arith.cmpi ne, %11, %c0_i32_9 : i32
    scf.if %12 {
      %c0_10 = arith.constant 0 : index
      %c0_11 = arith.constant 0 : index
      %13 = vector.load %arg7[%c0_10, %c0_11] : memref<20x100xf32, #tpu.memory_space<vmem>>, vector<20x100xf32>
      %c0_12 = arith.constant 0 : index
      %c0_13 = arith.constant 0 : index
      %14 = vector.load %arg5[%c0_12, %c0_13] : memref<1x100xf32, #tpu.memory_space<vmem>>, vector<1x100xf32>
      %15 = vector.broadcast %14 : vector<1x100xf32> to vector<20x100xf32>
      %16 = arith.addf %13, %15 : vector<20x100xf32>
      %c0_14 = arith.constant 0 : index
      %c0_15 = arith.constant 0 : index
      %17 = vector.load %arg6[%c0_14, %c0_15] : memref<20x100xf32, #tpu.memory_space<vmem>>, vector<20x100xf32>
      tpu.vector_store %arg6[%c0_14, %c0_15], %16 {strides = array<i32>} : memref<20x100xf32, #tpu.memory_space<vmem>>, vector<20x100xf32>,
    } else {
    }
    return
  }
  func.func @transform_0(%arg0: i32, %arg1: i32, %arg2: i32) -> (i32, i32) {
    %c0_i32 = arith.constant 0 : i32
    return %arg0, %arg2 : i32, i32
  }
  func.func @transform_1(%arg0: i32, %arg1: i32, %arg2: i32) -> (i32, i32) {
    %c0_i32 = arith.constant 0 : i32
    return %arg2, %arg1 : i32, i32
  }
  func.func @transform_2(%arg0: i32, %arg1: i32, %arg2: i32) -> (i32, i32) {
    %c0_i32 = arith.constant 0 : i32
    %c0_i32_0 = arith.constant 0 : i32
    return %c0_i32, %arg1 : i32, i32
  }
  func.func @transform_3(%arg0: i32, %arg1: i32, %arg2: i32) -> (i32, i32) {
    %c0_i32 = arith.constant 0 : i32
    return %arg0, %arg1 : i32, i32
  }
}

</mosaic_0001>

<llo_original>
// kernel: index_filler_forward.13
$region0: #{index_filler_forward.13}
  #allocation0 [shape = 'u32[]', space=smem, size = 0x4, offset = 0x4, fixed_abs, tag = 'smem constant byte address 0x4 - core index']
  #allocation1 [shape = 'u32[144,128]{1,0:T(1,128)}', space=vmem, size = 0x12000, scoped, tag = 'internal scratch']
  %s0 = inlined_call_operand.vmem [shape: f32[2,10,100], index: 0, kind: input, shape index: {}]
  %s1 = inlined_call_operand.vmem [shape: s32[2,10], index: 1, kind: input, shape index: {}]
  %s2 = inlined_call_operand.vmem [shape: s32[2,10], index: 2, kind: output, shape index: {}]
  %s3 = sld [smem:[#allocation0]]
  $region18: #{index_filler_forward.13} parent=0
    _
  %s5 = ssub.s32 1, %s3
  %s6 = scalar_select 0, %s5, %s3
  // Predicated region
  $region2: #{index_filler_forward.13} parent=0 // pred_check
    _
  $region3: #{index_filler_forward.13} parent=0 // pred_check_branch
    %8 = sbr.rel (0) target = $region5
  $region4: #{index_filler_forward.13} parent=0 // pred_region
    _
  $region5: #{index_filler_forward.13} parent=0 // pred_fallthru
    _
  // Predicated region
  $region6: #{index_filler_forward.13} parent=0 // pred_check
    _
  $region7: #{index_filler_forward.13} parent=0 // pred_check_branch
    %10 = sbr.rel (0) target = $region9
  $region8: #{index_filler_forward.13} parent=0 // pred_region
    _
  $region9: #{index_filler_forward.13} parent=0 // pred_fallthru
    _
  %v11 = vld [vmem:[%s0] sm:$0xff]
  %v12 = vld [vmem:[%s0 + $0x8] sm:$0x3]
  %v13 = vld [vmem:[%s0 + $0x10] sm:$0xff]
  %v14 = vld [vmem:[%s0 + $0x18] sm:$0x3]
  %v15 = vlaneseq
  %v16 = vand.u32 %v15, 127
  %vm17 = vcmask 818176
  %v18 = vsel %vm17, %v11, -inf
  %19 = vmax.xlane.f32.xlu0 %v18
  %v20 = vpop.xlane.xlu0 %19
  %vm21 = vcmask 812032
  %v22 = vsel %vm21, %v12, -inf
  %23 = vmax.xlane.f32.xlu0 %v22
  %v24 = vpop.xlane.xlu0 %23
  %v25 = vsel %vm17, %v13, -inf
  %26 = vmax.xlane.f32.xlu0 %v25
  %v27 = vpop.xlane.xlu0 %26
  %v28 = vsel %vm21, %v14, -inf
  %29 = vmax.xlane.f32.xlu0 %v28
  %v30 = vpop.xlane.xlu0 %29
  %vm31 = vcmp.ge.f32.partialorder %v11, %v20
  %vm32 = vcmp.ge.f32.partialorder %v12, %v24
  %vm33 = vcmp.ge.f32.partialorder %v13, %v27
  %vm34 = vcmp.ge.f32.partialorder %v14, %v30
  %v35 = vsel %vm31, %v16, 100
  %v36 = vsel %vm32, %v16, 100
  %v37 = vsel %vm33, %v16, 100
  %v38 = vsel %vm34, %v16, 100
  %v39 = vsel %vm17, %v35, 2147483647
  %v40 = vand.u32 %v39, 65535
  %v41 = vshra.s32 %v39, 16
  %v42 = vcvt.s32.f32 %v40
  %v43 = vcvt.s32.f32 %v41
  %44 = vmin.xlane.f32.xlu0 %v43
  %v45 = vpop.xlane.xlu0 %44
  %vm46 = vcmp.eq.f32.partialorder %v43, %v45
  %v47 = vsel %vm46, %v42, inf
  %48 = vmin.xlane.f32.xlu0 %v47
  %v49 = vpop.xlane.xlu0 %48
  %v50 = vcvt.f32.s32 %v49
  %v51 = vcvt.f32.s32 %v45
  %v52 = vshll.u32 %v51, 16
  %v53 = vadd.s32 %v52, %v50
  %v54 = vsel %vm21, %v36, 2147483647
  %v55 = vand.u32 %v54, 65535
  %v56 = vshra.s32 %v54, 16
  %v57 = vcvt.s32.f32 %v55
  %v58 = vcvt.s32.f32 %v56
  %59 = vmin.xlane.f32.xlu0 %v58
  %v60 = vpop.xlane.xlu0 %59
  %vm61 = vcmp.eq.f32.partialorder %v58, %v60
  %v62 = vsel %vm61, %v57, inf
  %63 = vmin.xlane.f32.xlu0 %v62
  %v64 = vpop.xlane.xlu0 %63
  %v65 = vcvt.f32.s32 %v64
  %v66 = vcvt.f32.s32 %v60
  %v67 = vshll.u32 %v66, 16
  %v68 = vadd.s32 %v67, %v65
  %v69 = vsel %vm17, %v37, 2147483647
  %v70 = vand.u32 %v69, 65535
  %v71 = vshra.s32 %v69, 16
  %v72 = vcvt.s32.f32 %v70
  %v73 = vcvt.s32.f32 %v71
  %74 = vmin.xlane.f32.xlu0 %v73
  %v75 = vpop.xlane.xlu0 %74
  %vm76 = vcmp.eq.f32.partialorder %v73, %v75
  %v77 = vsel %vm76, %v72, inf
  %78 = vmin.xlane.f32.xlu0 %v77
  %v79 = vpop.xlane.xlu0 %78
  %v80 = vcvt.f32.s32 %v79
  %v81 = vcvt.f32.s32 %v75
  %v82 = vshll.u32 %v81, 16
  %v83 = vadd.s32 %v82, %v80
  %v84 = vsel %vm21, %v38, 2147483647
  %v85 = vand.u32 %v84, 65535
  %v86 = vshra.s32 %v84, 16
  %v87 = vcvt.s32.f32 %v85
  %v88 = vcvt.s32.f32 %v86
  %89 = vmin.xlane.f32.xlu0 %v88
  %v90 = vpop.xlane.xlu0 %89
  %vm91 = vcmp.eq.f32.partialorder %v88, %v90
  %v92 = vsel %vm91, %v87, inf
  %93 = vmin.xlane.f32.xlu0 %v92
  %v94 = vpop.xlane.xlu0 %93
  %v95 = vcvt.f32.s32 %v94
  %v96 = vcvt.f32.s32 %v90
  %v97 = vshll.u32 %v96, 16
  %v98 = vadd.s32 %v97, %v95
  %v99 = vld [vmem:[%s1] sm:$0x3]
  %vm100 = vcmp.ne.s32.totalorder %v99, 0
  %v101 = vlaneseq
  %v102 = vshrl.u32 %v101, 7
  %v103 = vsub.s32 %v16, %v102
  %v104 = vrot.slane %v53, %v103
  %v105 = vadd.s32 %v16, 4294967288
  %v106 = vlaneseq
  %v107 = vshrl.u32 %v106, 7
  %v108 = vsub.s32 %v105, %v107
  %v109 = vrot.slane %v68, %v108
  %vm110 = vcmask 130112
  %v111 = vsel %vm110, %v109, %v104
  %v112 = vlaneseq
  %v113 = vshrl.u32 %v112, 7
  %v114 = vsub.s32 %v16, %v113
  %v115 = vrot.slane %v83, %v114
  %v116 = vlaneseq
  %v117 = vshrl.u32 %v116, 7
  %v118 = vsub.s32 %v105, %v117
  %v119 = vrot.slane %v98, %v118
  %v120 = vsel %vm110, %v119, %v115
  %vm121 = vcmask 1041409
  %v122 = vsel %vm121, %v120, %v111
  %v123 = vsel %vm100, 1001, %v122
  %vm124 = vcmask 74752
  %125 = vst.msk [vmem:[%s2] sm:$0x3] %vm124, %v123
  // Predicated region
  $region10: #{index_filler_forward.13} parent=0 // pred_check
    _
  $region11: #{index_filler_forward.13} parent=0 // pred_check_branch
    %127 = sbr.rel (0) target = $region13
  $region12: #{index_filler_forward.13} parent=0 // pred_region
    _
  $region13: #{index_filler_forward.13} parent=0 // pred_fallthru
    _
  // Predicated region
  $region14: #{index_filler_forward.13} parent=0 // pred_check
    _
  $region15: #{index_filler_forward.13} parent=0 // pred_check_branch
    %129 = sbr.rel (0) target = $region17
  $region16: #{index_filler_forward.13} parent=0 // pred_region
    _
  $region17: #{index_filler_forward.13} parent=0 // pred_fallthru
    _

// kernel: index_filler_forward.14
$region0: #{index_filler_forward.14}
  #allocation0 [shape = 'u32[]', space=smem, size = 0x4, offset = 0x4, fixed_abs, tag = 'smem constant byte address 0x4 - core index']
  #allocation1 [shape = 'u32[144,128]{1,0:T(1,128)}', space=vmem, size = 0x12000, scoped, tag = 'internal scratch']
  %s0 = inlined_call_operand.vmem [shape: f32[2,10,128], index: 0, kind: input, shape index: {}]
  %s1 = inlined_call_operand.vmem [shape: f32[10,128], index: 1, kind: input, shape index: {}]
  %s2 = inlined_call_operand.vmem [shape: f32[2,10,128], index: 2, kind: input, shape index: {}]
  %s3 = inlined_call_operand.vmem [shape: f32[1,128], index: 3, kind: input, shape index: {}]
  %s4 = inlined_call_operand.vmem [shape: f32[1,128], index: 4, kind: input, shape index: {}]
  %s5 = inlined_call_operand.vmem [shape: f32[2,10,128], index: 5, kind: output, shape index: {}]
  %s6 = sld [smem:[#allocation0]]
  $region53: #{index_filler_forward.14} parent=0
    _
  %s8 = ssub.s32 1, %s6
  %s9 = scalar_select 0, %s8, %s6
  loop: start=0, step=1, limit=4
  $region2: #{index_filler_forward.14} parent=0 // loop_pre_header
    _
  $region3: #{index_filler_forward.14} parent=0 // loop_header
    %s11 = sphi 0, %s15
    %p12 = scmp.ge.s32.totalorder %s11, 4
    %s21 = sphi 0, %s23
    %s24 = sphi 0, %s21
    %s25 = sphi 0, %s24
    %s41 = sphi 0, %s25
    %s45 = sphi 0, %s45
    %s47 = sphi 0, %s45
    %s48 = sphi 0, %s47
    %s62 = sphi 0, %s48
    %s68 = sphi 0, %s70
    %s71 = sphi 0, %s68
    %s72 = sphi 0, %s71
    %s88 = sphi 0, %s72
    %s92 = sphi 0, %s92
    %s94 = sphi 0, %s92
    %s95 = sphi 0, %s94
    %s109 = sphi 0, %s95
    %s113 = sphi 0, %s113
    %s115 = sphi 0, %s113
    %s116 = sphi 0, %s115
    %s130 = sphi 0, %s116
    %s136 = sphi 0, %s138
    %s139 = sphi 0, %s136
    %s140 = sphi 0, %s139
    %s156 = sphi 0, %s140
  $region4: #{index_filler_forward.14} parent=0 // loop_header_branch
    %14 = sbr.rel (%p12) target = $region8
  $region5: #{index_filler_forward.14} parent=0 // loop_body
    %s16 = ssub.s32 %s11, 1
    %s17 = ssub.s32 %s11, 2
    %s18 = sadd.s32 %s11, 1
    %s19 = ssub.s32 %s11, %s18
    %p20 = scmp.eq.s32.totalorder %s19, 0
    %s22 = sadd.s32 %s21, 1
    %s23 = scalar_select %p20, %s21, %s22
    %p26 = pneg %p20
    %p27 = scmp.eq.s32.totalorder %s11, 1
    %p28 = por %p26, %p27
    %p29 = scmp.ne.s32.totalorder %s21, %s24
    %p30 = scmp.eq.s32.totalorder %s11, 0
    %p31 = por %p29, %p30
    %p32 = scmp.ne.s32.totalorder %s21, %s24
    %p33 = scmp.eq.s32.totalorder %s16, 1
    %p34 = por %p32, %p33
    %p35 = scmp.ne.s32.totalorder %s24, %s25
    %p36 = scmp.eq.s32.totalorder %s16, 0
    %p37 = por %p35, %p36
    %p38 = scmp.ne.s32.totalorder %s24, %s25
    %p39 = scmp.eq.s32.totalorder %s17, 1
    %p40 = por %p38, %p39
    %p42 = scmp.ne.s32.totalorder %s25, %s41
    %p43 = scmp.eq.s32.totalorder %s17, 0
    %p44 = por %p42, %p43
    %s46 = sadd.s32 %s45, 1
    %p49 = scmp.eq.s32.totalorder %s11, 1
    %p50 = scmp.ne.s32.totalorder %s45, %s47
    %p51 = scmp.eq.s32.totalorder %s11, 0
    %p52 = por %p50, %p51
    %p53 = scmp.ne.s32.totalorder %s45, %s47
    %p54 = scmp.eq.s32.totalorder %s16, 1
    %p55 = por %p53, %p54
    %p56 = scmp.ne.s32.totalorder %s47, %s48
    %p57 = scmp.eq.s32.totalorder %s16, 0
    %p58 = por %p56, %p57
    %p59 = scmp.ne.s32.totalorder %s47, %s48
    %p60 = scmp.eq.s32.totalorder %s17, 1
    %p61 = por %p59, %p60
    %p63 = scmp.ne.s32.totalorder %s48, %s62
    %p64 = scmp.eq.s32.totalorder %s17, 0
    %p65 = por %p63, %p64
    %s66 = ssub.s32 %s11, %s18
    %p67 = scmp.eq.s32.totalorder %s66, 0
    %s69 = sadd.s32 %s68, 1
    %s70 = scalar_select %p67, %s68, %s69
    %p73 = pneg %p67
    %p74 = scmp.eq.s32.totalorder %s11, 1
    %p75 = por %p73, %p74
    %p76 = scmp.ne.s32.totalorder %s68, %s71
    %p77 = scmp.eq.s32.totalorder %s11, 0
    %p78 = por %p76, %p77
    %p79 = scmp.ne.s32.totalorder %s68, %s71
    %p80 = scmp.eq.s32.totalorder %s16, 1
    %p81 = por %p79, %p80
    %p82 = scmp.ne.s32.totalorder %s71, %s72
    %p83 = scmp.eq.s32.totalorder %s16, 0
    %p84 = por %p82, %p83
    %p85 = scmp.ne.s32.totalorder %s71, %s72
    %p86 = scmp.eq.s32.totalorder %s17, 1
    %p87 = por %p85, %p86
    %p89 = scmp.ne.s32.totalorder %s72, %s88
    %p90 = scmp.eq.s32.totalorder %s17, 0
    %p91 = por %p89, %p90
    %s93 = sadd.s32 %s92, 1
    %p96 = scmp.eq.s32.totalorder %s11, 1
    %p97 = scmp.ne.s32.totalorder %s92, %s94
    %p98 = scmp.eq.s32.totalorder %s11, 0
    %p99 = por %p97, %p98
    %p100 = scmp.ne.s32.totalorder %s92, %s94
    %p101 = scmp.eq.s32.totalorder %s16, 1
    %p102 = por %p100, %p101
    %p103 = scmp.ne.s32.totalorder %s94, %s95
    %p104 = scmp.eq.s32.totalorder %s16, 0
    %p105 = por %p103, %p104
    %p106 = scmp.ne.s32.totalorder %s94, %s95
    %p107 = scmp.eq.s32.totalorder %s17, 1
    %p108 = por %p106, %p107
    %p110 = scmp.ne.s32.totalorder %s95, %s109
    %p111 = scmp.eq.s32.totalorder %s17, 0
    %p112 = por %p110, %p111
    %s114 = sadd.s32 %s113, 1
    %p117 = scmp.eq.s32.totalorder %s11, 1
    %p118 = scmp.ne.s32.totalorder %s113, %s115
    %p119 = scmp.eq.s32.totalorder %s11, 0
    %p120 = por %p118, %p119
    %p121 = scmp.ne.s32.totalorder %s113, %s115
    %p122 = scmp.eq.s32.totalorder %s16, 1
    %p123 = por %p121, %p122
    %p124 = scmp.ne.s32.totalorder %s115, %s116
    %p125 = scmp.eq.s32.totalorder %s16, 0
    %p126 = por %p124, %p125
    %p127 = scmp.ne.s32.totalorder %s115, %s116
    %p128 = scmp.eq.s32.totalorder %s17, 1
    %p129 = por %p127, %p128
    %p131 = scmp.ne.s32.totalorder %s116, %s130
    %p132 = scmp.eq.s32.totalorder %s17, 0
    %p133 = por %p131, %p132
    %s134 = ssub.s32 %s11, %s18
    %p135 = scmp.eq.s32.totalorder %s134, 0
    %s137 = sadd.s32 %s136, 1
    %s138 = scalar_select %p135, %s136, %s137
    %p141 = pneg %p135
    %p142 = scmp.eq.s32.totalorder %s11, 1
    %p143 = por %p141, %p142
    %p144 = scmp.ne.s32.totalorder %s136, %s139
    %p145 = scmp.eq.s32.totalorder %s11, 0
    %p146 = por %p144, %p145
    %p147 = scmp.ne.s32.totalorder %s136, %s139
    %p148 = scmp.eq.s32.totalorder %s16, 1
    %p149 = por %p147, %p148
    %p150 = scmp.ne.s32.totalorder %s139, %s140
    %p151 = scmp.eq.s32.totalorder %s16, 0
    %p152 = por %p150, %p151
    %p153 = scmp.ne.s32.totalorder %s139, %s140
    %p154 = scmp.eq.s32.totalorder %s17, 1
    %p155 = por %p153, %p154
    %p157 = scmp.ne.s32.totalorder %s140, %s156
    %p158 = scmp.eq.s32.totalorder %s17, 0
    %p159 = por %p157, %p158
    %p160 = scmp.le.s32.totalorder 1, %s11
    %p161 = scmp.lt.s32.totalorder %s11, 3
    %p162 = pnand %p160, %p161
    %p163 = pneg %p162
    // Predicated region
    $region9: #{index_filler_forward.14} parent=5 // pred_check
      _
    $region10: #{index_filler_forward.14} parent=5 // pred_check_branch
      %165 = sbr.rel (%p162) target = $region12
    $region11: #{index_filler_forward.14} parent=5 // pred_region
      %s166 = ssub.s32 %s11, 1
      // Predicated region
      $region13: #{index_filler_forward.14} parent=11 // pred_check
        %p167 = pneg %p58
      $region14: #{index_filler_forward.14} parent=11 // pred_check_branch
        %169 = sbr.rel (%p167) target = $region16
      $region15: #{index_filler_forward.14} parent=11 // pred_region
        _
      $region16: #{index_filler_forward.14} parent=11 // pred_fallthru
        _
      // Predicated region
      $region17: #{index_filler_forward.14} parent=11 // pred_check
        %p170 = pneg %p105
      $region18: #{index_filler_forward.14} parent=11 // pred_check_branch
        %172 = sbr.rel (%p170) target = $region20
      $region19: #{index_filler_forward.14} parent=11 // pred_region
        _
      $region20: #{index_filler_forward.14} parent=11 // pred_fallthru
        _
      // Predicated region
      $region21: #{index_filler_forward.14} parent=11 // pred_check
        %p173 = pneg %p126
      $region22: #{index_filler_forward.14} parent=11 // pred_check_branch
        %175 = sbr.rel (%p173) target = $region24
      $region23: #{index_filler_forward.14} parent=11 // pred_region
        _
      $region24: #{index_filler_forward.14} parent=11 // pred_fallthru
        _
    $region12: #{index_filler_forward.14} parent=5 // pred_fallthru
      _
    %p176 = scmp.lt.s32.totalorder %s11, 2
    // Predicated region
    $region25: #{index_filler_forward.14} parent=5 // pred_check
      %p177 = pneg %p176
    $region26: #{index_filler_forward.14} parent=5 // pred_check_branch
      %179 = sbr.rel (%p177) target = $region28
    $region27: #{index_filler_forward.14} parent=5 // pred_region
      // Predicated region
      $region29: #{index_filler_forward.14} parent=27 // pred_check
        %p180 = pneg %p31
      $region30: #{index_filler_forward.14} parent=27 // pred_check_branch
        %182 = sbr.rel (%p180) target = $region32
      $region31: #{index_filler_forward.14} parent=27 // pred_region
        %p183 = scmp.lt.s32.totalorder %s11, 1
        %s184 = scalar_select %p183, %s11, 1
        %s185 = smul.addr %s184, 2
        %s186 = smul.addr %s185, 8
        %s187 = scalar_lea.vmem %s0, %s186
      $region32: #{index_filler_forward.14} parent=27 // pred_fallthru
        _
      // Predicated region
      $region33: #{index_filler_forward.14} parent=27 // pred_check
        %p188 = pneg %p78
      $region34: #{index_filler_forward.14} parent=27 // pred_check_branch
        %190 = sbr.rel (%p188) target = $region36
      $region35: #{index_filler_forward.14} parent=27 // pred_region
        %p191 = scmp.lt.s32.totalorder %s11, 1
        %s192 = scalar_select %p191, %s11, 1
        %s193 = smul.addr %s192, 2
        %s194 = smul.addr %s193, 8
        %s195 = scalar_lea.vmem %s2, %s194
      $region36: #{index_filler_forward.14} parent=27 // pred_fallthru
        _
    $region28: #{index_filler_forward.14} parent=5 // pred_fallthru
      _
    %p196 = scmp.le.s32.totalorder 1, %s11
    %p197 = scmp.lt.s32.totalorder %s11, 3
    %p198 = pnand %p196, %p197
    %p199 = pneg %p198
    // Predicated region
    $region37: #{index_filler_forward.14} parent=5 // pred_check
      _
    $region38: #{index_filler_forward.14} parent=5 // pred_check_branch
      %201 = sbr.rel (%p198) target = $region40
    $region39: #{index_filler_forward.14} parent=5 // pred_region
      %s202 = ssub.s32 %s11, 1
      %p203 = scmp.lt.s32.totalorder %s16, 1
      %s204 = scalar_select %p203, %s16, 1
      %s205 = smul.addr %s204, 2
      %s206 = smul.addr %s205, 8
      %s207 = scalar_lea.vmem %s0, %s206
      %p208 = pneg %p37
      %p209 = pneg %p34
      %p210 = pneg %p58
      %p211 = pneg %p55
      %p212 = scmp.lt.s32.totalorder %s16, 1
      %s213 = scalar_select %p212, %s16, 1
      %s214 = smul.addr %s213, 2
      %s215 = smul.addr %s214, 8
      %s216 = scalar_lea.vmem %s2, %s215
      %p217 = pneg %p84
      %p218 = pneg %p81
      %p219 = pneg %p105
      %p220 = pneg %p102
      %p221 = pneg %p126
      %p222 = pneg %p123
      %p223 = pneg %p152
      %p224 = pneg %p149
      %p225 = scmp.lt.s32.totalorder %s16, 1
      %s226 = scalar_select %p225, %s16, 1
      %s227 = smul.addr %s226, 2
      %s228 = smul.addr %s227, 8
      %s229 = scalar_lea.vmem %s5, %s228
      %p230 = scmp.lt.s32.totalorder %s16, 1
      %s231 = scalar_select %p230, %s16, 1
      %s232 = smul.addr %s231, 2
      %s233 = smul.addr %s232, 8
      %s234 = scalar_lea.vmem %s0, %s233
      %p235 = scmp.lt.s32.totalorder %s16, 1
      %s236 = scalar_select %p235, %s16, 1
      %s237 = smul.addr %s236, 2
      %s238 = smul.addr %s237, 8
      %s239 = scalar_lea.vmem %s2, %s238
      %p240 = scmp.lt.s32.totalorder %s16, 1
      %s241 = scalar_select %p240, %s16, 1
      %s242 = smul.addr %s241, 2
      %s243 = smul.addr %s242, 8
      %s244 = scalar_lea.vmem %s5, %s243
      %v245 = vld [vmem:[%s234] sm:$0xff]
      %v246 = vld [vmem:[%s234 + $0x8] sm:$0x3]
      %v247 = vld [vmem:[%s1] sm:$0xff]
      %v248 = vld [vmem:[%s1 + $0x8] sm:$0x3]
      %v249 = vadd.f32 %v245, %v247
      %v250 = vadd.f32 %v246, %v248
      %v251 = vld [vmem:[%s239] sm:$0xff]
      %v252 = vld [vmem:[%s239 + $0x8] sm:$0x3]
      %v253 = vadd.f32 %v249, %v251
      %v254 = vadd.f32 %v250, %v252
      %255 = vadd.xlane.f32.xlu0 %v253
      %v256 = vpop.xlane.xlu0 %255
      %vm257 = vcmask 1041408
      %v258 = vsel %vm257, %v254, 0.0
      %259 = vadd.xlane.f32.xlu0 %v258
      %v260 = vpop.xlane.xlu0 %259
      %v261 = vrcp.pop 128.0
      %v262 = vmul.f32 %v256, %v261
      %v263 = vmul.f32 %v260, %v261
      %v264 = vsub.f32 %v253, %v262
      %v265 = vsub.f32 %v254, %v263
      %v266 = vmul.f32 %v264, %v264
      %v267 = vmul.f32 %v265, %v265
      %268 = vadd.xlane.f32.xlu0 %v266
      %v269 = vpop.xlane.xlu0 %268
      %v270 = vsel %vm257, %v267, 0.0
      %271 = vadd.xlane.f32.xlu0 %v270
      %v272 = vpop.xlane.xlu0 %271
      %v273 = vmul.f32 %v269, %v261
      %v274 = vmul.f32 %v272, %v261
      %v275 = vadd.f32 %v273, 1e-12
      %v276 = vadd.f32 %v274, 1e-12
      %v277 = vrsqrt.pop %v275
      %v278 = vrsqrt.pop %v276
      %v279 = vmul.f32 %v264, %v277
      %v280 = vmul.f32 %v265, %v278
      %v281 = vld [vmem:[%s3] sm:$0x1]
      %v283 = vlaneseq
      %v284 = vshrl.u32 %v283, 7
      %v285 = vsub.s32 0, %v284
      %v286 = vrot.slane %v281, %v285
      %v288 = vmul.f32 %v279, %v286
      %v289 = vmul.f32 %v280, %v286
      %v290 = vld [vmem:[%s4] sm:$0x1]
      %v292 = vlaneseq
      %v293 = vshrl.u32 %v292, 7
      %v294 = vsub.s32 0, %v293
      %v295 = vrot.slane %v290, %v294
      %v297 = vadd.f32 %v288, %v295
      %v298 = vadd.f32 %v289, %v295
      %299 = vst [vmem:[%s244] sm:$0xff] %v297
      %300 = vst [vmem:[%s244 + $0x8] sm:$0x3] %v298
      %p301 = scmp.lt.s32.totalorder %s16, 1
      %s302 = scalar_select %p301, %s16, 1
      %s303 = smul.addr %s302, 2
      %s304 = smul.addr %s303, 8
      %s305 = scalar_lea.vmem %s5, %s304
      // Predicated region
      $region41: #{index_filler_forward.14} parent=39 // pred_check
        %p306 = pneg %p149
      $region42: #{index_filler_forward.14} parent=39 // pred_check_branch
        %308 = sbr.rel (%p306) target = $region44
      $region43: #{index_filler_forward.14} parent=39 // pred_region
        _
      $region44: #{index_filler_forward.14} parent=39 // pred_fallthru
        _
    $region40: #{index_filler_forward.14} parent=5 // pred_fallthru
      _
    %p309 = scmp.le.s32.totalorder 2, %s11
    // Predicated region
    $region45: #{index_filler_forward.14} parent=5 // pred_check
      %p310 = pneg %p309
    $region46: #{index_filler_forward.14} parent=5 // pred_check_branch
      %312 = sbr.rel (%p310) target = $region48
    $region47: #{index_filler_forward.14} parent=5 // pred_region
      %s313 = ssub.s32 %s11, 2
      // Predicated region
      $region49: #{index_filler_forward.14} parent=47 // pred_check
        %p314 = pneg %p155
      $region50: #{index_filler_forward.14} parent=47 // pred_check_branch
        %316 = sbr.rel (%p314) target = $region52
      $region51: #{index_filler_forward.14} parent=47 // pred_region
        %p317 = scmp.lt.s32.totalorder %s17, 1
        %s318 = scalar_select %p317, %s17, 1
        %s319 = smul.addr %s318, 2
        %s320 = smul.addr %s319, 8
        %s321 = scalar_lea.vmem %s5, %s320
      $region52: #{index_filler_forward.14} parent=47 // pred_fallthru
        _
    $region48: #{index_filler_forward.14} parent=5 // pred_fallthru
      _
  $region6: #{index_filler_forward.14} parent=0 // loop_footer
    %s15 = sadd.s32 1, %s11
  $region7: #{index_filler_forward.14} parent=0 // loop_footer_branch
    %10 = sbr.rel target = $region3
  $region8: #{index_filler_forward.14} parent=0 // loop_exit
    _

// kernel: index_filler_forward.15
$region0: #{index_filler_forward.15}
  #allocation0 [shape = 'u32[]', space=smem, size = 0x4, offset = 0x4, fixed_abs, tag = 'smem constant byte address 0x4 - core index']
  #allocation1 [shape = 'u32[144,128]{1,0:T(1,128)}', space=vmem, size = 0x12000, scoped, tag = 'internal scratch']
  #allocation2 [shape = 'f32[20,128]{1,0:T(8,128)}', space=vmem, size = 0x3000, scoped, tag = 'scratch operand']
  %s0 = inlined_call_operand.vmem [shape: f32[20,128], index: 0, kind: input, shape index: {}]
  %s1 = inlined_call_operand.vmem [shape: bf16[128,384], index: 1, kind: input, shape index: {}]
  %s2 = inlined_call_operand.vmem [shape: f32[1,384], index: 2, kind: input, shape index: {}]
  %s3 = inlined_call_operand.vmem [shape: f32[20,384], index: 3, kind: output, shape index: {}]
  %s4 = sld [smem:[#allocation0]]
  $region128: #{index_filler_forward.15} parent=0
    _
  %s6 = ssub.s32 1, %s4
  %s7 = scalar_select 0, %s6, %s4
  $region1: #{index_filler_forward.15} parent=0
    #allocation3 [shape = 'u8[65536]{0}', space=vmem, size = 0x10000, scoped, tag = 'input window, operand 1']
    #allocation4 [shape = 'u8[24576]{0}', space=vmem, size = 0x6000, scoped, tag = 'output window, operand 0']
    loop: start=0, step=1, limit=5
    $region2: #{index_filler_forward.15} parent=1 // loop_pre_header
      _
    $region3: #{index_filler_forward.15} parent=1 // loop_header
      %s9 = sphi 0, %s13
      %p10 = scmp.ge.s32.totalorder %s9, 5
      %s16 = sphi 0, %s35
      %s17 = sphi 0, %s31
      %s18 = sphi 0, %s27
      %s19 = sphi 0, %s16
      %s20 = sphi 0, %s17
      %s21 = sphi 0, %s18
      %s22 = sphi 0, %s19
      %s23 = sphi 0, %s20
      %s24 = sphi 0, %s21
      %s40 = sphi 0, %s42
      %s43 = sphi 0, %s40
      %s44 = sphi 0, %s43
      %s60 = sphi 0, %s44
      %s68 = sphi 0, %s70
      %s71 = sphi 0, %s68
      %s72 = sphi 0, %s71
      %s88 = sphi 0, %s72
      %s94 = sphi 0, %s96
      %s97 = sphi 0, %s94
      %s98 = sphi 0, %s97
      %s114 = sphi 0, %s98
      %s122 = sphi 0, %s124
      %s125 = sphi 0, %s122
      %s126 = sphi 0, %s125
      %s142 = sphi 0, %s126
    $region4: #{index_filler_forward.15} parent=1 // loop_header_branch
      %12 = sbr.rel (%p10) target = $region8
    $region5: #{index_filler_forward.15} parent=1 // loop_body
      %s14 = ssub.s32 %s9, 1
      %s15 = ssub.s32 %s9, 2
      %s25 = sadd.s32 1, %s18
      %p26 = scmp.ge.s32.totalorder %s25, 1
      %s27 = scalar_select %p26, 0, %s25
      %s28 = sadd.s32 1, %s17
      %s29 = scalar_select %p26, %s28, %s17
      %p30 = scmp.ge.s32.totalorder %s29, 3
      %s31 = scalar_select %p30, 0, %s29
      %s32 = sadd.s32 1, %s16
      %s33 = scalar_select %p30, %s32, %s16
      %p34 = scmp.ge.s32.totalorder %s33, 1
      %s35 = scalar_select %p34, 0, %s33
      %s36 = ssub.s32 %s16, %s35
      %s37 = ssub.s32 %s18, %s27
      %s38 = sor.u32 %s36, %s37
      %p39 = scmp.eq.s32.totalorder %s38, 0
      %s41 = sadd.s32 %s40, 1
      %s42 = scalar_select %p39, %s40, %s41
      %p45 = pneg %p39
      %p46 = scmp.eq.s32.totalorder %s9, 2
      %p47 = por %p45, %p46
      %p48 = scmp.ne.s32.totalorder %s40, %s43
      %p49 = scmp.eq.s32.totalorder %s9, 0
      %p50 = por %p48, %p49
      %p51 = scmp.ne.s32.totalorder %s40, %s43
      %p52 = scmp.eq.s32.totalorder %s14, 2
      %p53 = por %p51, %p52
      %p54 = scmp.ne.s32.totalorder %s43, %s44
      %p55 = scmp.eq.s32.totalorder %s14, 0
      %p56 = por %p54, %p55
      %p57 = scmp.ne.s32.totalorder %s43, %s44
      %p58 = scmp.eq.s32.totalorder %s15, 2
      %p59 = por %p57, %p58
      %p61 = scmp.ne.s32.totalorder %s44, %s60
      %p62 = scmp.eq.s32.totalorder %s15, 0
      %p63 = por %p61, %p62
      %s64 = ssub.s32 %s18, %s27
      %s65 = ssub.s32 %s17, %s31
      %s66 = sor.u32 %s64, %s65
      %p67 = scmp.eq.s32.totalorder %s66, 0
      %s69 = sadd.s32 %s68, 1
      %s70 = scalar_select %p67, %s68, %s69
      %p73 = pneg %p67
      %p74 = scmp.eq.s32.totalorder %s9, 2
      %p75 = por %p73, %p74
      %p76 = scmp.ne.s32.totalorder %s68, %s71
      %p77 = scmp.eq.s32.totalorder %s9, 0
      %p78 = por %p76, %p77
      %p79 = scmp.ne.s32.totalorder %s68, %s71
      %p80 = scmp.eq.s32.totalorder %s14, 2
      %p81 = por %p79, %p80
      %p82 = scmp.ne.s32.totalorder %s71, %s72
      %p83 = scmp.eq.s32.totalorder %s14, 0
      %p84 = por %p82, %p83
      %p85 = scmp.ne.s32.totalorder %s71, %s72
      %p86 = scmp.eq.s32.totalorder %s15, 2
      %p87 = por %p85, %p86
      %p89 = scmp.ne.s32.totalorder %s72, %s88
      %p90 = scmp.eq.s32.totalorder %s15, 0
      %p91 = por %p89, %p90
      %s92 = ssub.s32 %s17, %s31
      %p93 = scmp.eq.s32.totalorder %s92, 0
      %s95 = sadd.s32 %s94, 1
      %s96 = scalar_select %p93, %s94, %s95
      %p99 = pneg %p93
      %p100 = scmp.eq.s32.totalorder %s9, 2
      %p101 = por %p99, %p100
      %p102 = scmp.ne.s32.totalorder %s94, %s97
      %p103 = scmp.eq.s32.totalorder %s9, 0
      %p104 = por %p102, %p103
      %p105 = scmp.ne.s32.totalorder %s94, %s97
      %p106 = scmp.eq.s32.totalorder %s14, 2
      %p107 = por %p105, %p106
      %p108 = scmp.ne.s32.totalorder %s97, %s98
      %p109 = scmp.eq.s32.totalorder %s14, 0
      %p110 = por %p108, %p109
      %p111 = scmp.ne.s32.totalorder %s97, %s98
      %p112 = scmp.eq.s32.totalorder %s15, 2
      %p113 = por %p111, %p112
      %p115 = scmp.ne.s32.totalorder %s98, %s114
      %p116 = scmp.eq.s32.totalorder %s15, 0
      %p117 = por %p115, %p116
      %s118 = ssub.s32 %s16, %s35
      %s119 = ssub.s32 %s17, %s31
      %s120 = sor.u32 %s118, %s119
      %p121 = scmp.eq.s32.totalorder %s120, 0
      %s123 = sadd.s32 %s122, 1
      %s124 = scalar_select %p121, %s122, %s123
      %p127 = pneg %p121
      %p128 = scmp.eq.s32.totalorder %s9, 2
      %p129 = por %p127, %p128
      %p130 = scmp.ne.s32.totalorder %s122, %s125
      %p131 = scmp.eq.s32.totalorder %s9, 0
      %p132 = por %p130, %p131
      %p133 = scmp.ne.s32.totalorder %s122, %s125
      %p134 = scmp.eq.s32.totalorder %s14, 2
      %p135 = por %p133, %p134
      %p136 = scmp.ne.s32.totalorder %s125, %s126
      %p137 = scmp.eq.s32.totalorder %s14, 0
      %p138 = por %p136, %p137
      %p139 = scmp.ne.s32.totalorder %s125, %s126
      %p140 = scmp.eq.s32.totalorder %s15, 2
      %p141 = por %p139, %p140
      %p143 = scmp.ne.s32.totalorder %s126, %s142
      %p144 = scmp.eq.s32.totalorder %s15, 0
      %p145 = por %p143, %p144
      %p146 = scmp.le.s32.totalorder 1, %s9
      %p147 = scmp.lt.s32.totalorder %s9, 4
      %p148 = pnand %p146, %p147
      %p149 = pneg %p148
      // Predicated region
      $region9: #{index_filler_forward.15} parent=5 // pred_check
        _
      $region10: #{index_filler_forward.15} parent=5 // pred_check_branch
        %151 = sbr.rel (%p148) target = $region12
      $region11: #{index_filler_forward.15} parent=5 // pred_region
        %s152 = ssub.s32 %s9, 1
        // Predicated region
        $region13: #{index_filler_forward.15} parent=11 // pred_check
          %p153 = pneg %p56
        $region14: #{index_filler_forward.15} parent=11 // pred_check_branch
          %155 = sbr.rel (%p153) target = $region16
        $region15: #{index_filler_forward.15} parent=11 // pred_region
          %s156 = smul.u32 3, %s19
          %p157 = scmp.lt.s32.totalorder %s156, 2
          %s158 = scalar_select %p157, %s156, 2
          %p159 = scmp.lt.s32.totalorder %s21, 0
          %s160 = scalar_select %p159, %s21, 0
          %s161 = sadd.s32 %s160, %s158
          %s162 = smul.addr %s161, 8
          %s163 = scalar_lea.vmem %s0, %s162
          %s164 = smul.u32 3, %s19
        $region16: #{index_filler_forward.15} parent=11 // pred_fallthru
          _
      $region12: #{index_filler_forward.15} parent=5 // pred_fallthru
        _
      %p165 = scmp.lt.s32.totalorder %s9, 3
      // Predicated region
      $region17: #{index_filler_forward.15} parent=5 // pred_check
        %p166 = pneg %p165
      $region18: #{index_filler_forward.15} parent=5 // pred_check_branch
        %168 = sbr.rel (%p166) target = $region20
      $region19: #{index_filler_forward.15} parent=5 // pred_region
        // Predicated region
        $region21: #{index_filler_forward.15} parent=19 // pred_check
          %p169 = pneg %p78
        $region22: #{index_filler_forward.15} parent=19 // pred_check_branch
          %171 = sbr.rel (%p169) target = $region24
        $region23: #{index_filler_forward.15} parent=19 // pred_region
          %s172 = sand.u32 %s68, 1
          %s173 = sand.u32 %s68, 1
          %s174 = smul.addr %s173, 64
          %s175 = scalar_lea.vmem [#allocation3], %s174
          %s176 = smul.u32 16, %s18
          %s177 = smul.addr %s176, 3
          %s178 = sadd.s32 %s17, %s177
          %s179 = smul.addr %s178, 4
          %s180 = scalar_lea.vmem %s1, %s179
          // Predicated region
          $region25: #{index_filler_forward.15} parent=23 // pred_check
            _
          $region26: #{index_filler_forward.15} parent=23 // pred_check_branch
            %182 = sbr.rel (0) target = $region28
          $region27: #{index_filler_forward.15} parent=23 // pred_region
            // Predicated region
            $region29: #{index_filler_forward.15} parent=27 // pred_check
              _
            $region30: #{index_filler_forward.15} parent=27 // pred_check_branch
              %184 = sbr.rel target = $region32
            $region31: #{index_filler_forward.15} parent=27 // pred_region
              // Predicated region
              $region44: #{index_filler_forward.15} parent=31 // pred_check
                _
              $region45: #{index_filler_forward.15} parent=31 // pred_check_branch
                %229 = sbr.rel (0) target = $region47
              $region46: #{index_filler_forward.15} parent=31 // pred_region
                loop: start=0, step=1, limit=1
                $region48: #{index_filler_forward.15} parent=46 // loop_pre_header
                  _
                $region49: #{index_filler_forward.15} parent=46 // loop_header
                  %s231 = sphi 0, %s235
                  %p232 = scmp.ge.s32.totalorder %s231, 1
                  %s236 = sphi %s180, %s180
                  %s237 = sphi %s175, %s175
                $region50: #{index_filler_forward.15} parent=46 // loop_header_branch
                  %234 = sbr.rel (%p232) target = $region54
                $region51: #{index_filler_forward.15} parent=46 // loop_body
                  _
                $region52: #{index_filler_forward.15} parent=46 // loop_footer
                  %s235 = sadd.s32 1, %s231
                $region53: #{index_filler_forward.15} parent=46 // loop_footer_branch
                  %230 = sbr.rel target = $region49
                $region54: #{index_filler_forward.15} parent=46 // loop_exit
                  _
                loop: start=0, step=1, limit=1
                $region55: #{index_filler_forward.15} parent=46 // loop_pre_header
                  _
                $region56: #{index_filler_forward.15} parent=46 // loop_header
                  %s240 = sphi 0, %s244
                  %p241 = scmp.ge.s32.totalorder %s240, 1
                  %s245 = sphi %s180, %s180
                  %s246 = sphi %s175, %s175
                $region57: #{index_filler_forward.15} parent=46 // loop_header_branch
                  %243 = sbr.rel (%p241) target = $region61
                $region58: #{index_filler_forward.15} parent=46 // loop_body
                  %v247 = vld [vmem:[%s245] sm:$0xf]
                  %248 = vst [vmem:[%s246] sm:$0xf] %v247
                  %v249 = vld [vmem:[%s245 + $0xc] sm:$0xf]
                  %250 = vst [vmem:[%s246 + $0x4] sm:$0xf] %v249
                  %v251 = vld [vmem:[%s245 + $0x18] sm:$0xf]
                  %252 = vst [vmem:[%s246 + $0x8] sm:$0xf] %v251
                  %v253 = vld [vmem:[%s245 + $0x24] sm:$0xf]
                  %254 = vst [vmem:[%s246 + $0xc] sm:$0xf] %v253
                  %v255 = vld [vmem:[%s245 + $0x30] sm:$0xf]
                  %256 = vst [vmem:[%s246 + $0x10] sm:$0xf] %v255
                  %v257 = vld [vmem:[%s245 + $0x3c] sm:$0xf]
                  %258 = vst [vmem:[%s246 + $0x14] sm:$0xf] %v257
                  %v259 = vld [vmem:[%s245 + $0x48] sm:$0xf]
                  %260 = vst [vmem:[%s246 + $0x18] sm:$0xf] %v259
                  %v261 = vld [vmem:[%s245 + $0x54] sm:$0xf]
                  %262 = vst [vmem:[%s246 + $0x1c] sm:$0xf] %v261
                  %v263 = vld [vmem:[%s245 + $0x60] sm:$0xf]
                  %264 = vst [vmem:[%s246 + $0x20] sm:$0xf] %v263
                  %v265 = vld [vmem:[%s245 + $0x6c] sm:$0xf]
                  %266 = vst [vmem:[%s246 + $0x24] sm:$0xf] %v265
                  %v267 = vld [vmem:[%s245 + $0x78] sm:$0xf]
                  %268 = vst [vmem:[%s246 + $0x28] sm:$0xf] %v267
                  %v269 = vld [vmem:[%s245 + $0x84] sm:$0xf]
                  %270 = vst [vmem:[%s246 + $0x2c] sm:$0xf] %v269
                  %v271 = vld [vmem:[%s245 + $0x90] sm:$0xf]
                  %272 = vst [vmem:[%s246 + $0x30] sm:$0xf] %v271
                  %v273 = vld [vmem:[%s245 + $0x9c] sm:$0xf]
                  %274 = vst [vmem:[%s246 + $0x34] sm:$0xf] %v273
                  %v275 = vld [vmem:[%s245 + $0xa8] sm:$0xf]
                  %276 = vst [vmem:[%s246 + $0x38] sm:$0xf] %v275
                  %v277 = vld [vmem:[%s245 + $0xb4] sm:$0xf]
                  %278 = vst [vmem:[%s246 + $0x3c] sm:$0xf] %v277
                $region59: #{index_filler_forward.15} parent=46 // loop_footer
                  %s244 = sadd.s32 1, %s240
                $region60: #{index_filler_forward.15} parent=46 // loop_footer_branch
                  %239 = sbr.rel target = $region56
                $region61: #{index_filler_forward.15} parent=46 // loop_exit
                  _
              $region47: #{index_filler_forward.15} parent=31 // pred_fallthru
                _
            $region32: #{index_filler_forward.15} parent=27 // pred_fallthru
              _
            // Predicated region
            $region33: #{index_filler_forward.15} parent=27 // pred_check
              _
            $region34: #{index_filler_forward.15} parent=27 // pred_check_branch
              %186 = sbr.rel (0) target = $region36
            $region35: #{index_filler_forward.15} parent=27 // pred_region
              loop: start=0, step=1, limit=1
              $region37: #{index_filler_forward.15} parent=35 // loop_pre_header
                _
              $region38: #{index_filler_forward.15} parent=35 // loop_header
                %s189 = sphi 0, %s193
                %p190 = scmp.ge.s32.totalorder %s189, 1
                %s194 = sphi %s180, %s180
                %s195 = sphi %s175, %s175
              $region39: #{index_filler_forward.15} parent=35 // loop_header_branch
                %192 = sbr.rel (%p190) target = $region43
              $region40: #{index_filler_forward.15} parent=35 // loop_body
                %v196 = vld [vmem:[%s194] sm:$0xf]
                %197 = vst [vmem:[%s195] sm:$0xf] %v196
                %v198 = vld [vmem:[%s194 + $0xc] sm:$0xf]
                %199 = vst [vmem:[%s195 + $0x4] sm:$0xf] %v198
                %v200 = vld [vmem:[%s194 + $0x18] sm:$0xf]
                %201 = vst [vmem:[%s195 + $0x8] sm:$0xf] %v200
                %v202 = vld [vmem:[%s194 + $0x24] sm:$0xf]
                %203 = vst [vmem:[%s195 + $0xc] sm:$0xf] %v202
                %v204 = vld [vmem:[%s194 + $0x30] sm:$0xf]
                %205 = vst [vmem:[%s195 + $0x10] sm:$0xf] %v204
                %v206 = vld [vmem:[%s194 + $0x3c] sm:$0xf]
                %207 = vst [vmem:[%s195 + $0x14] sm:$0xf] %v206
                %v208 = vld [vmem:[%s194 + $0x48] sm:$0xf]
                %209 = vst [vmem:[%s195 + $0x18] sm:$0xf] %v208
                %v210 = vld [vmem:[%s194 + $0x54] sm:$0xf]
                %211 = vst [vmem:[%s195 + $0x1c] sm:$0xf] %v210
                %v212 = vld [vmem:[%s194 + $0x60] sm:$0xf]
                %213 = vst [vmem:[%s195 + $0x20] sm:$0xf] %v212
                %v214 = vld [vmem:[%s194 + $0x6c] sm:$0xf]
                %215 = vst [vmem:[%s195 + $0x24] sm:$0xf] %v214
                %v216 = vld [vmem:[%s194 + $0x78] sm:$0xf]
                %217 = vst [vmem:[%s195 + $0x28] sm:$0xf] %v216
                %v218 = vld [vmem:[%s194 + $0x84] sm:$0xf]
                %219 = vst [vmem:[%s195 + $0x2c] sm:$0xf] %v218
                %v220 = vld [vmem:[%s194 + $0x90] sm:$0xf]
                %221 = vst [vmem:[%s195 + $0x30] sm:$0xf] %v220
                %v222 = vld [vmem:[%s194 + $0x9c] sm:$0xf]
                %223 = vst [vmem:[%s195 + $0x34] sm:$0xf] %v222
                %v224 = vld [vmem:[%s194 + $0xa8] sm:$0xf]
                %225 = vst [vmem:[%s195 + $0x38] sm:$0xf] %v224
                %v226 = vld [vmem:[%s194 + $0xb4] sm:$0xf]
                %227 = vst [vmem:[%s195 + $0x3c] sm:$0xf] %v226
              $region41: #{index_filler_forward.15} parent=35 // loop_footer
                %s193 = sadd.s32 1, %s189
              $region42: #{index_filler_forward.15} parent=35 // loop_footer_branch
                %188 = sbr.rel target = $region38
              $region43: #{index_filler_forward.15} parent=35 // loop_exit
                _
            $region36: #{index_filler_forward.15} parent=27 // pred_fallthru
              _
          $region28: #{index_filler_forward.15} parent=23 // pred_fallthru
            _
          %279 = vnop
        $region24: #{index_filler_forward.15} parent=19 // pred_fallthru
          _
        // Predicated region
        $region62: #{index_filler_forward.15} parent=19 // pred_check
          %p280 = pneg %p104
        $region63: #{index_filler_forward.15} parent=19 // pred_check_branch
          %282 = sbr.rel (%p280) target = $region65
        $region64: #{index_filler_forward.15} parent=19 // pred_region
          %p283 = scmp.lt.s32.totalorder %s17, 2
          %s284 = scalar_select %p283, %s17, 2
          %s285 = scalar_lea.vmem %s2, %s284
        $region65: #{index_filler_forward.15} parent=19 // pred_fallthru
          _
      $region20: #{index_filler_forward.15} parent=5 // pred_fallthru
        _
      %p286 = scmp.le.s32.totalorder 1, %s9
      %p287 = scmp.lt.s32.totalorder %s9, 4
      %p288 = pnand %p286, %p287
      %p289 = pneg %p288
      // Predicated region
      $region66: #{index_filler_forward.15} parent=5 // pred_check
        _
      $region67: #{index_filler_forward.15} parent=5 // pred_check_branch
        %291 = sbr.rel (%p288) target = $region69
      $region68: #{index_filler_forward.15} parent=5 // pred_region
        %s292 = ssub.s32 %s9, 1
        %s293 = sand.u32 %s71, 1
        %s294 = sand.u32 %s71, 1
        %s295 = smul.addr %s294, 64
        %s296 = scalar_lea.vmem [#allocation3], %s295
        // Predicated region
        $region70: #{index_filler_forward.15} parent=68 // pred_check
          %p297 = pneg %p84
        $region71: #{index_filler_forward.15} parent=68 // pred_check_branch
          %299 = sbr.rel (%p297) target = $region73
        $region72: #{index_filler_forward.15} parent=68 // pred_region
          _
        $region73: #{index_filler_forward.15} parent=68 // pred_fallthru
          _
        %s300 = smul.u32 3, %s19
        %p301 = scmp.lt.s32.totalorder %s300, 2
        %s302 = scalar_select %p301, %s300, 2
        %p303 = scmp.lt.s32.totalorder %s21, 0
        %s304 = scalar_select %p303, %s21, 0
        %s305 = sadd.s32 %s304, %s302
        %s306 = smul.addr %s305, 8
        %s307 = scalar_lea.vmem %s0, %s306
        %p308 = pneg %p56
        %p309 = pneg %p53
        %s310 = sand.u32 %s71, 1
        %s311 = sand.u32 %s71, 1
        %s312 = smul.addr %s311, 64
        %s313 = scalar_lea.vmem [#allocation3], %s312
        %p314 = pneg %p84
        %p315 = pneg %p81
        %p316 = scmp.lt.s32.totalorder %s20, 2
        %s317 = scalar_select %p316, %s20, 2
        %s318 = scalar_lea.vmem %s2, %s317
        %p319 = pneg %p110
        %p320 = pneg %p107
        %p321 = pneg %p138
        %p322 = pneg %p135
        %s323 = sand.u32 %s125, 1
        %s324 = sand.u32 %s125, 1
        %s325 = smul.addr %s324, 24
        %s326 = scalar_lea.vmem [#allocation4], %s325
        %s327 = smul.u32 3, %s19
        %p328 = scmp.lt.s32.totalorder %s327, 2
        %s329 = scalar_select %p328, %s327, 2
        %p330 = scmp.lt.s32.totalorder %s21, 0
        %s331 = scalar_select %p330, %s21, 0
        %s332 = sadd.s32 %s331, %s329
        %s333 = smul.addr %s332, 8
        %s334 = scalar_lea.vmem %s0, %s333
        %s335 = smul.u32 3, %s19
        %s336 = smul.u32 16, %s21
        %p337 = scmp.lt.s32.totalorder %s20, 2
        %s338 = scalar_select %p337, %s20, 2
        %s339 = scalar_lea.vmem %s2, %s338
        %s340 = smul.u32 3, %s19
        %p342 = scmp.eq.s32.totalorder %s21, 0
        // Predicated region
        $region74: #{index_filler_forward.15} parent=68 // pred_check
          %p343 = pneg %p342
        $region75: #{index_filler_forward.15} parent=68 // pred_check_branch
          %345 = sbr.rel (%p343) target = $region77
        $region76: #{index_filler_forward.15} parent=68 // pred_region
          %346 = vst [vmem:[#allocation2] sm:$0xff] 0.0
          %347 = vst [vmem:[#allocation2 + $0x8] sm:$0xff] 0.0
          %348 = vst [vmem:[#allocation2 + $0x10] sm:$0xf] 0.0
        $region77: #{index_filler_forward.15} parent=68 // pred_fallthru
          _
        %v349 = vld [vmem:[#allocation2] sm:$0xff]
        %v350 = vld [vmem:[#allocation2 + $0x8] sm:$0xff]
        %v351 = vld [vmem:[#allocation2 + $0x10] sm:$0xf]
        %v352 = vld [vmem:[%s334] sm:$0xff]
        %v353 = vld [vmem:[%s334 + $0x8] sm:$0xff]
        %v354 = vld [vmem:[%s334 + $0x10] sm:$0xf]
        %v355 = vpack.c.bf16 %v353, %v352
        %v356 = vpack.c.bf16 %v354, %v354
        %v357 = vld [vmem:[%s296] sm:$0xf]
        %v358 = vld [vmem:[%s296 + $0x4] sm:$0xf]
        %v359 = vld [vmem:[%s296 + $0x8] sm:$0xf]
        %v360 = vld [vmem:[%s296 + $0xc] sm:$0xf]
        %v361 = vld [vmem:[%s296 + $0x10] sm:$0xf]
        %v362 = vld [vmem:[%s296 + $0x14] sm:$0xf]
        %v363 = vld [vmem:[%s296 + $0x18] sm:$0xf]
        %v364 = vld [vmem:[%s296 + $0x1c] sm:$0xf]
        %v365 = vld [vmem:[%s296 + $0x20] sm:$0xf]
        %v366 = vld [vmem:[%s296 + $0x24] sm:$0xf]
        %v367 = vld [vmem:[%s296 + $0x28] sm:$0xf]
        %v368 = vld [vmem:[%s296 + $0x2c] sm:$0xf]
        %v369 = vld [vmem:[%s296 + $0x30] sm:$0xf]
        %v370 = vld [vmem:[%s296 + $0x34] sm:$0xf]
        %v371 = vld [vmem:[%s296 + $0x38] sm:$0xf]
        %v372 = vld [vmem:[%s296 + $0x3c] sm:$0xf]
        %v389 = vunpack.c.l.b16 %v357
        %v390 = vunpack.c.l.b16 %v358
        %v391 = vunpack.c.l.b16 %v359
        %v392 = vunpack.c.l.b16 %v360
        %v393 = vunpack.c.l.b16 %v361
        %v394 = vunpack.c.l.b16 %v362
        %v395 = vunpack.c.l.b16 %v363
        %v396 = vunpack.c.l.b16 %v364
        %v397 = vunpack.c.l.b16 %v365
        %v398 = vunpack.c.l.b16 %v366
        %v399 = vunpack.c.l.b16 %v367
        %v400 = vunpack.c.l.b16 %v368
        %v401 = vunpack.c.l.b16 %v369
        %v402 = vunpack.c.l.b16 %v370
        %v403 = vunpack.c.l.b16 %v371
        %v404 = vunpack.c.l.b16 %v372
        %v405 = vpack.c.b16 %v390, %v389
        %v406 = vpack.c.b16 %v392, %v391
        %v407 = vpack.c.b16 %v394, %v393
        %v408 = vpack.c.b16 %v396, %v395
        %v409 = vpack.c.b16 %v398, %v397
        %v410 = vpack.c.b16 %v400, %v399
        %v411 = vpack.c.b16 %v402, %v401
        %v412 = vpack.c.b16 %v404, %v403
        %421 = vmatprep.subr.bf16.mxu0 0
        %422 = vmatpush1.bf16.msra.mxu0 %v405
        %423 = vmatprep.subr.bf16.mxu0 0
        %424 = vmatpush1.bf16.msra.mxu0 %v406
        %425 = vmatprep.subr.bf16.mxu0 0
        %426 = vmatpush1.bf16.msra.mxu0 %v407
        %427 = vmatprep.subr.bf16.mxu0 0
        %428 = vmatpush1.bf16.msra.mxu0 %v408
        %429 = vmatprep.subr.bf16.mxu0 0
        %430 = vmatpush1.bf16.msra.mxu0 %v409
        %431 = vmatprep.subr.bf16.mxu0 0
        %432 = vmatpush1.bf16.msra.mxu0 %v410
        %433 = vmatprep.subr.bf16.mxu0 0
        %434 = vmatpush1.bf16.msra.mxu0 %v411
        %435 = vmatprep.subr.bf16.mxu0 0
        %436 = vmatpush1.bf16.msra.mxu0 %v412
        %437 = vmatprep.subr.bf16.mxu0 0
        %438 = vmatpush1.bf16.msra.mxu0 0
        %439 = vmatprep.subr.bf16.mxu0 0
        %440 = vmatpush1.bf16.msra.mxu0 0
        %441 = vmatprep.subr.bf16.mxu0 0
        %442 = vmatpush1.bf16.msra.mxu0 0
        %443 = vmatprep.subr.bf16.mxu0 0
        %444 = vmatpush1.bf16.msra.mxu0 0
        %445 = vmatprep.subr.bf16.mxu0 0
        %446 = vmatpush1.bf16.msra.mxu0 0
        %447 = vmatprep.subr.bf16.mxu0 0
        %448 = vmatpush1.bf16.msra.mxu0 0
        %449 = vmatprep.subr.bf16.mxu0 0
        %450 = vmatpush1.bf16.msra.mxu0 0
        %451 = vmatprep.subr.bf16.mxu0 0
        %452 = vmatpush1.bf16.msra.mxu0 0
        %453 = vmatprep.mubr.bf16.mxu0 0
        %454 = vmatmul.mubr.bf16.gmra.mrb[0].mxu0 %v355
        %v455 = vpop.f32.mrb[0].mxu0
        %v456 = vadd.f32 0.0, %v455
        %v457 = vpop.f32.mrb[0].mxu0
        %v458 = vpop.f32.mrb[0].mxu0
        %v459 = vadd.f32 0.0, %v458
        %v460 = vpop.f32.mrb[0].mxu0
        %461 = vmatprep.mubr.bf16.mxu0 0
        %462 = vmatmul.mubr.bf16.gmra.mrb[0].mxu0 %v356
        %v463 = vpop.f32.mrb[0].mxu0
        %v464 = vadd.f32 0.0, %v463
        %v465 = vpop.f32.mrb[0].mxu0
        %v466 = vpop.f32.mrb[0].mxu0
        %v467 = vpop.f32.mrb[0].mxu0
        %468 = vdwg.mxu0
        %v469 = vadd.f32 %v349, %v456
        %v470 = vadd.f32 %v350, %v459
        %v471 = vadd.f32 %v351, %v464
        %472 = vst [vmem:[#allocation2] sm:$0xff] %v469
        %473 = vst [vmem:[#allocation2 + $0x8] sm:$0xff] %v470
        %474 = vst [vmem:[#allocation2 + $0x10] sm:$0xf] %v471
        // Predicated region
        $region78: #{index_filler_forward.15} parent=68 // pred_check
          %p475 = pneg %p342
        $region79: #{index_filler_forward.15} parent=68 // pred_check_branch
          %477 = sbr.rel (%p475) target = $region81
        $region80: #{index_filler_forward.15} parent=68 // pred_region
          %v478 = vld [vmem:[#allocation2] sm:$0xff]
          %v479 = vld [vmem:[#allocation2 + $0x8] sm:$0xff]
          %v480 = vld [vmem:[#allocation2 + $0x10] sm:$0xf]
          %v481 = vld [vmem:[%s339] sm:$0x1]
          %v483 = vlaneseq
          %v484 = vshrl.u32 %v483, 7
          %v485 = vsub.s32 0, %v484
          %v486 = vrot.slane %v481, %v485
          %v488 = vadd.f32 %v478, %v486
          %v489 = vadd.f32 %v479, %v486
          %v490 = vadd.f32 %v480, %v486
          %491 = vst [vmem:[%s326] sm:$0xff] %v488
          %492 = vst [vmem:[%s326 + $0x8] sm:$0xff] %v489
          %493 = vst [vmem:[%s326 + $0x10] sm:$0xf] %v490
        $region81: #{index_filler_forward.15} parent=68 // pred_fallthru
          _
        %s494 = sand.u32 %s125, 1
        %s495 = sand.u32 %s125, 1
        %s496 = smul.addr %s495, 24
        %s497 = scalar_lea.vmem [#allocation4], %s496
        // Predicated region
        $region82: #{index_filler_forward.15} parent=68 // pred_check
          %p498 = pneg %p135
        $region83: #{index_filler_forward.15} parent=68 // pred_check_branch
          %500 = sbr.rel (%p498) target = $region85
        $region84: #{index_filler_forward.15} parent=68 // pred_region
          %s501 = smul.u32 3, %s19
          %s502 = smul.addr %s501, 3
          %s503 = sadd.s32 %s20, %s502
          %s504 = smul.addr %s503, 8
          %s505 = scalar_lea.vmem %s3, %s504
          // Predicated region
          $region86: #{index_filler_forward.15} parent=84 // pred_check
            _
          $region87: #{index_filler_forward.15} parent=84 // pred_check_branch
            %507 = sbr.rel (0) target = $region89
          $region88: #{index_filler_forward.15} parent=84 // pred_region
            // Predicated region
            $region90: #{index_filler_forward.15} parent=88 // pred_check
              _
            $region91: #{index_filler_forward.15} parent=88 // pred_check_branch
              %509 = sbr.rel (0) target = $region93
            $region92: #{index_filler_forward.15} parent=88 // pred_region
              // Predicated region
              $region105: #{index_filler_forward.15} parent=92 // pred_check
                _
              $region106: #{index_filler_forward.15} parent=92 // pred_check_branch
                %528 = sbr.rel (0) target = $region108
              $region107: #{index_filler_forward.15} parent=92 // pred_region
                loop: start=0, step=1, limit=1
                $region109: #{index_filler_forward.15} parent=107 // loop_pre_header
                  _
                $region110: #{index_filler_forward.15} parent=107 // loop_header
                  %s530 = sphi 0, %s534
                  %p531 = scmp.ge.s32.totalorder %s530, 1
                  %s535 = sphi %s497, %s497
                  %s536 = sphi %s505, %s505
                $region111: #{index_filler_forward.15} parent=107 // loop_header_branch
                  %533 = sbr.rel (%p531) target = $region115
                $region112: #{index_filler_forward.15} parent=107 // loop_body
                  %v537 = vld [vmem:[%s535] sm:$0xff]
                  %538 = vst [vmem:[%s536] sm:$0xff] %v537
                  %v539 = vld [vmem:[%s535 + $0x8] sm:$0xff]
                  %540 = vst [vmem:[%s536 + $0x18] sm:$0xff] %v539
                  %v541 = vld [vmem:[%s535 + $0x10] sm:$0xff]
                  %542 = vst [vmem:[%s536 + $0x30] sm:$0xff] %v541
                $region113: #{index_filler_forward.15} parent=107 // loop_footer
                  %s534 = sadd.s32 1, %s530
                $region114: #{index_filler_forward.15} parent=107 // loop_footer_branch
                  %529 = sbr.rel target = $region110
                $region115: #{index_filler_forward.15} parent=107 // loop_exit
                  _
              $region108: #{index_filler_forward.15} parent=92 // pred_fallthru
                _
              // Predicated region
              $region116: #{index_filler_forward.15} parent=92 // pred_check
                _
              $region117: #{index_filler_forward.15} parent=92 // pred_check_branch
                %544 = sbr.rel target = $region119
              $region118: #{index_filler_forward.15} parent=92 // pred_region
                _
              $region119: #{index_filler_forward.15} parent=92 // pred_fallthru
                _
            $region93: #{index_filler_forward.15} parent=88 // pred_fallthru
              _
            // Predicated region
            $region94: #{index_filler_forward.15} parent=88 // pred_check
              _
            $region95: #{index_filler_forward.15} parent=88 // pred_check_branch
              %511 = sbr.rel target = $region97
            $region96: #{index_filler_forward.15} parent=88 // pred_region
              loop: start=0, step=1, limit=1
              $region98: #{index_filler_forward.15} parent=96 // loop_pre_header
                _
              $region99: #{index_filler_forward.15} parent=96 // loop_header
                %s514 = sphi 0, %s518
                %p515 = scmp.ge.s32.totalorder %s514, 1
                %s519 = sphi %s497, %s497
                %s520 = sphi %s505, %s505
              $region100: #{index_filler_forward.15} parent=96 // loop_header_branch
                %517 = sbr.rel (%p515) target = $region104
              $region101: #{index_filler_forward.15} parent=96 // loop_body
                %v521 = vld [vmem:[%s519] sm:$0xff]
                %522 = vst [vmem:[%s520] sm:$0xff] %v521
                %v523 = vld [vmem:[%s519 + $0x8] sm:$0xff]
                %524 = vst [vmem:[%s520 + $0x18] sm:$0xff] %v523
                %v525 = vld [vmem:[%s519 + $0x10] sm:$0xff]
                %526 = vst [vmem:[%s520 + $0x30] sm:$0xff] %v525
              $region102: #{index_filler_forward.15} parent=96 // loop_footer
                %s518 = sadd.s32 1, %s514
              $region103: #{index_filler_forward.15} parent=96 // loop_footer_branch
                %513 = sbr.rel target = $region99
              $region104: #{index_filler_forward.15} parent=96 // loop_exit
                _
            $region97: #{index_filler_forward.15} parent=88 // pred_fallthru
              _
          $region89: #{index_filler_forward.15} parent=84 // pred_fallthru
            _
          %545 = vnop
        $region85: #{index_filler_forward.15} parent=68 // pred_fallthru
          _
      $region69: #{index_filler_forward.15} parent=5 // pred_fallthru
        _
      %p546 = scmp.le.s32.totalorder 2, %s9
      // Predicated region
      $region120: #{index_filler_forward.15} parent=5 // pred_check
        %p547 = pneg %p546
      $region121: #{index_filler_forward.15} parent=5 // pred_check_branch
        %549 = sbr.rel (%p547) target = $region123
      $region122: #{index_filler_forward.15} parent=5 // pred_region
        %s550 = ssub.s32 %s9, 2
        // Predicated region
        $region124: #{index_filler_forward.15} parent=122 // pred_check
          %p551 = pneg %p141
        $region125: #{index_filler_forward.15} parent=122 // pred_check_branch
          %553 = sbr.rel (%p551) target = $region127
        $region126: #{index_filler_forward.15} parent=122 // pred_region
          %s554 = sand.u32 %s126, 1
          %s555 = sand.u32 %s126, 1
          %s556 = smul.addr %s555, 24
          %s557 = scalar_lea.vmem [#allocation4], %s556
        $region127: #{index_filler_forward.15} parent=122 // pred_fallthru
          _
      $region123: #{index_filler_forward.15} parent=5 // pred_fallthru
        _
    $region6: #{index_filler_forward.15} parent=1 // loop_footer
      %s13 = sadd.s32 1, %s9
    $region7: #{index_filler_forward.15} parent=1 // loop_footer_branch
      %8 = sbr.rel target = $region3
    $region8: #{index_filler_forward.15} parent=1 // loop_exit
      _

// kernel: index_filler_forward.16
$region0: #{index_filler_forward.16}
  #allocation0 [shape = 'u32[]', space=smem, size = 0x4, offset = 0x4, fixed_abs, tag = 'smem constant byte address 0x4 - core index']
  #allocation1 [shape = 'u32[144,128]{1,0:T(1,128)}', space=vmem, size = 0x12000, scoped, tag = 'internal scratch']
  %s0 = inlined_call_operand.vmem [shape: f32[2,16,128], index: 0, kind: input, shape index: {}]
  %s1 = inlined_call_operand.vmem [shape: f32[2,16,128], index: 1, kind: input, shape index: {}]
  %s2 = inlined_call_operand.vmem [shape: f32[2,16,128], index: 2, kind: input, shape index: {}]
  %s3 = inlined_call_operand.vmem [shape: f32[2,16,128], index: 3, kind: output, shape index: {}]
  %s4 = sld [smem:[#allocation0]]
  $region45: #{index_filler_forward.16} parent=0
    _
  %s6 = ssub.s32 1, %s4
  %s7 = scalar_select 0, %s6, %s4
  loop: start=0, step=1, limit=4
  $region2: #{index_filler_forward.16} parent=0 // loop_pre_header
    _
  $region3: #{index_filler_forward.16} parent=0 // loop_header
    %s9 = sphi 0, %s13
    %p10 = scmp.ge.s32.totalorder %s9, 4
    %s19 = sphi 0, %s21
    %s22 = sphi 0, %s19
    %s23 = sphi 0, %s22
    %s39 = sphi 0, %s23
    %s45 = sphi 0, %s47
    %s48 = sphi 0, %s45
    %s49 = sphi 0, %s48
    %s65 = sphi 0, %s49
    %s71 = sphi 0, %s73
    %s74 = sphi 0, %s71
    %s75 = sphi 0, %s74
    %s91 = sphi 0, %s75
    %s97 = sphi 0, %s99
    %s100 = sphi 0, %s97
    %s101 = sphi 0, %s100
    %s117 = sphi 0, %s101
  $region4: #{index_filler_forward.16} parent=0 // loop_header_branch
    %12 = sbr.rel (%p10) target = $region8
  $region5: #{index_filler_forward.16} parent=0 // loop_body
    %s14 = ssub.s32 %s9, 1
    %s15 = ssub.s32 %s9, 2
    %s16 = sadd.s32 %s9, 1
    %s17 = ssub.s32 %s9, %s16
    %p18 = scmp.eq.s32.totalorder %s17, 0
    %s20 = sadd.s32 %s19, 1
    %s21 = scalar_select %p18, %s19, %s20
    %p24 = pneg %p18
    %p25 = scmp.eq.s32.totalorder %s9, 1
    %p26 = por %p24, %p25
    %p27 = scmp.ne.s32.totalorder %s19, %s22
    %p28 = scmp.eq.s32.totalorder %s9, 0
    %p29 = por %p27, %p28
    %p30 = scmp.ne.s32.totalorder %s19, %s22
    %p31 = scmp.eq.s32.totalorder %s14, 1
    %p32 = por %p30, %p31
    %p33 = scmp.ne.s32.totalorder %s22, %s23
    %p34 = scmp.eq.s32.totalorder %s14, 0
    %p35 = por %p33, %p34
    %p36 = scmp.ne.s32.totalorder %s22, %s23
    %p37 = scmp.eq.s32.totalorder %s15, 1
    %p38 = por %p36, %p37
    %p40 = scmp.ne.s32.totalorder %s23, %s39
    %p41 = scmp.eq.s32.totalorder %s15, 0
    %p42 = por %p40, %p41
    %s43 = ssub.s32 %s9, %s16
    %p44 = scmp.eq.s32.totalorder %s43, 0
    %s46 = sadd.s32 %s45, 1
    %s47 = scalar_select %p44, %s45, %s46
    %p50 = pneg %p44
    %p51 = scmp.eq.s32.totalorder %s9, 1
    %p52 = por %p50, %p51
    %p53 = scmp.ne.s32.totalorder %s45, %s48
    %p54 = scmp.eq.s32.totalorder %s9, 0
    %p55 = por %p53, %p54
    %p56 = scmp.ne.s32.totalorder %s45, %s48
    %p57 = scmp.eq.s32.totalorder %s14, 1
    %p58 = por %p56, %p57
    %p59 = scmp.ne.s32.totalorder %s48, %s49
    %p60 = scmp.eq.s32.totalorder %s14, 0
    %p61 = por %p59, %p60
    %p62 = scmp.ne.s32.totalorder %s48, %s49
    %p63 = scmp.eq.s32.totalorder %s15, 1
    %p64 = por %p62, %p63
    %p66 = scmp.ne.s32.totalorder %s49, %s65
    %p67 = scmp.eq.s32.totalorder %s15, 0
    %p68 = por %p66, %p67
    %s69 = ssub.s32 %s9, %s16
    %p70 = scmp.eq.s32.totalorder %s69, 0
    %s72 = sadd.s32 %s71, 1
    %s73 = scalar_select %p70, %s71, %s72
    %p76 = pneg %p70
    %p77 = scmp.eq.s32.totalorder %s9, 1
    %p78 = por %p76, %p77
    %p79 = scmp.ne.s32.totalorder %s71, %s74
    %p80 = scmp.eq.s32.totalorder %s9, 0
    %p81 = por %p79, %p80
    %p82 = scmp.ne.s32.totalorder %s71, %s74
    %p83 = scmp.eq.s32.totalorder %s14, 1
    %p84 = por %p82, %p83
    %p85 = scmp.ne.s32.totalorder %s74, %s75
    %p86 = scmp.eq.s32.totalorder %s14, 0
    %p87 = por %p85, %p86
    %p88 = scmp.ne.s32.totalorder %s74, %s75
    %p89 = scmp.eq.s32.totalorder %s15, 1
    %p90 = por %p88, %p89
    %p92 = scmp.ne.s32.totalorder %s75, %s91
    %p93 = scmp.eq.s32.totalorder %s15, 0
    %p94 = por %p92, %p93
    %s95 = ssub.s32 %s9, %s16
    %p96 = scmp.eq.s32.totalorder %s95, 0
    %s98 = sadd.s32 %s97, 1
    %s99 = scalar_select %p96, %s97, %s98
    %p102 = pneg %p96
    %p103 = scmp.eq.s32.totalorder %s9, 1
    %p104 = por %p102, %p103
    %p105 = scmp.ne.s32.totalorder %s97, %s100
    %p106 = scmp.eq.s32.totalorder %s9, 0
    %p107 = por %p105, %p106
    %p108 = scmp.ne.s32.totalorder %s97, %s100
    %p109 = scmp.eq.s32.totalorder %s14, 1
    %p110 = por %p108, %p109
    %p111 = scmp.ne.s32.totalorder %s100, %s101
    %p112 = scmp.eq.s32.totalorder %s14, 0
    %p113 = por %p111, %p112
    %p114 = scmp.ne.s32.totalorder %s100, %s101
    %p115 = scmp.eq.s32.totalorder %s15, 1
    %p116 = por %p114, %p115
    %p118 = scmp.ne.s32.totalorder %s101, %s117
    %p119 = scmp.eq.s32.totalorder %s15, 0
    %p120 = por %p118, %p119
    %p121 = scmp.le.s32.totalorder 1, %s9
    %p122 = scmp.lt.s32.totalorder %s9, 3
    %p123 = pnand %p121, %p122
    %p124 = pneg %p123
    // Predicated region
    $region9: #{index_filler_forward.16} parent=5 // pred_check
      _
    $region10: #{index_filler_forward.16} parent=5 // pred_check_branch
      %126 = sbr.rel (%p123) target = $region12
    $region11: #{index_filler_forward.16} parent=5 // pred_region
      %s127 = ssub.s32 %s9, 1
    $region12: #{index_filler_forward.16} parent=5 // pred_fallthru
      _
    %p128 = scmp.lt.s32.totalorder %s9, 2
    // Predicated region
    $region13: #{index_filler_forward.16} parent=5 // pred_check
      %p129 = pneg %p128
    $region14: #{index_filler_forward.16} parent=5 // pred_check_branch
      %131 = sbr.rel (%p129) target = $region16
    $region15: #{index_filler_forward.16} parent=5 // pred_region
      // Predicated region
      $region17: #{index_filler_forward.16} parent=15 // pred_check
        %p132 = pneg %p29
      $region18: #{index_filler_forward.16} parent=15 // pred_check_branch
        %134 = sbr.rel (%p132) target = $region20
      $region19: #{index_filler_forward.16} parent=15 // pred_region
        %p135 = scmp.lt.s32.totalorder %s9, 1
        %s136 = scalar_select %p135, %s9, 1
        %s137 = smul.addr %s136, 2
        %s138 = smul.addr %s137, 8
        %s139 = scalar_lea.vmem %s0, %s138
      $region20: #{index_filler_forward.16} parent=15 // pred_fallthru
        _
      // Predicated region
      $region21: #{index_filler_forward.16} parent=15 // pred_check
        %p140 = pneg %p55
      $region22: #{index_filler_forward.16} parent=15 // pred_check_branch
        %142 = sbr.rel (%p140) target = $region24
      $region23: #{index_filler_forward.16} parent=15 // pred_region
        %p143 = scmp.lt.s32.totalorder %s9, 1
        %s144 = scalar_select %p143, %s9, 1
        %s145 = smul.addr %s144, 2
        %s146 = smul.addr %s145, 8
        %s147 = scalar_lea.vmem %s1, %s146
      $region24: #{index_filler_forward.16} parent=15 // pred_fallthru
        _
      // Predicated region
      $region25: #{index_filler_forward.16} parent=15 // pred_check
        %p148 = pneg %p81
      $region26: #{index_filler_forward.16} parent=15 // pred_check_branch
        %150 = sbr.rel (%p148) target = $region28
      $region27: #{index_filler_forward.16} parent=15 // pred_region
        %p151 = scmp.lt.s32.totalorder %s9, 1
        %s152 = scalar_select %p151, %s9, 1
        %s153 = smul.addr %s152, 2
        %s154 = smul.addr %s153, 8
        %s155 = scalar_lea.vmem %s2, %s154
      $region28: #{index_filler_forward.16} parent=15 // pred_fallthru
        _
    $region16: #{index_filler_forward.16} parent=5 // pred_fallthru
      _
    %p156 = scmp.le.s32.totalorder 1, %s9
    %p157 = scmp.lt.s32.totalorder %s9, 3
    %p158 = pnand %p156, %p157
    %p159 = pneg %p158
    // Predicated region
    $region29: #{index_filler_forward.16} parent=5 // pred_check
      _
    $region30: #{index_filler_forward.16} parent=5 // pred_check_branch
      %161 = sbr.rel (%p158) target = $region32
    $region31: #{index_filler_forward.16} parent=5 // pred_region
      %s162 = ssub.s32 %s9, 1
      %p163 = scmp.lt.s32.totalorder %s14, 1
      %s164 = scalar_select %p163, %s14, 1
      %s165 = smul.addr %s164, 2
      %s166 = smul.addr %s165, 8
      %s167 = scalar_lea.vmem %s0, %s166
      %p168 = pneg %p35
      %p169 = pneg %p32
      %p170 = scmp.lt.s32.totalorder %s14, 1
      %s171 = scalar_select %p170, %s14, 1
      %s172 = smul.addr %s171, 2
      %s173 = smul.addr %s172, 8
      %s174 = scalar_lea.vmem %s1, %s173
      %p175 = pneg %p61
      %p176 = pneg %p58
      %p177 = scmp.lt.s32.totalorder %s14, 1
      %s178 = scalar_select %p177, %s14, 1
      %s179 = smul.addr %s178, 2
      %s180 = smul.addr %s179, 8
      %s181 = scalar_lea.vmem %s2, %s180
      %p182 = pneg %p87
      %p183 = pneg %p84
      %p184 = pneg %p113
      %p185 = pneg %p110
      %p186 = scmp.lt.s32.totalorder %s14, 1
      %s187 = scalar_select %p186, %s14, 1
      %s188 = smul.addr %s187, 2
      %s189 = smul.addr %s188, 8
      %s190 = scalar_lea.vmem %s3, %s189
      %p191 = scmp.lt.s32.totalorder %s14, 1
      %s192 = scalar_select %p191, %s14, 1
      %s193 = smul.addr %s192, 2
      %s194 = smul.addr %s193, 8
      %s195 = scalar_lea.vmem %s0, %s194
      %p196 = scmp.lt.s32.totalorder %s14, 1
      %s197 = scalar_select %p196, %s14, 1
      %s198 = smul.addr %s197, 2
      %s199 = smul.addr %s198, 8
      %s200 = scalar_lea.vmem %s1, %s199
      %p201 = scmp.lt.s32.totalorder %s14, 1
      %s202 = scalar_select %p201, %s14, 1
      %s203 = smul.addr %s202, 2
      %s204 = smul.addr %s203, 8
      %s205 = scalar_lea.vmem %s2, %s204
      %p206 = scmp.lt.s32.totalorder %s14, 1
      %s207 = scalar_select %p206, %s14, 1
      %s208 = smul.addr %s207, 2
      %s209 = smul.addr %s208, 8
      %s210 = scalar_lea.vmem %s3, %s209
      %v212 = vlaneseq
      %v213 = vand.u32 %v212, 127
      %vm214 = vcmp.lt.s32.totalorder %v213, 10
      %v215 = vld [vmem:[%s195] sm:$0xff]
      %v216 = vld [vmem:[%s195 + $0x8] sm:$0xff]
      %v217 = vpack.c.bf16 %v216, %v215
      %v218 = vld [vmem:[%s200] sm:$0xff]
      %v219 = vld [vmem:[%s200 + $0x8] sm:$0xff]
      %v220 = vpack.c.bf16 %v219, %v218
      %v221 = vld [vmem:[%s205] sm:$0xff]
      %v222 = vld [vmem:[%s205 + $0x8] sm:$0xff]
      %v223 = vpack.c.bf16 %v222, %v221
      %vm224 = vcmask 523264
      %v226 = vsel %vm224, %v217, 0
      %v229 = vsel %vm224, %v220, 0
      %231 = vmatprep.subr.bf16.mxu0 0
      %232 = vmatpush1.bf16.xpose.msra.mxu0 %v229
      %233 = vmatprep.subr.bf16.mxu0 0
      %234 = vmatpush1.bf16.xpose.msra.mxu0 0
      %235 = vmatprep.subr.bf16.mxu0 0
      %236 = vmatpush1.bf16.xpose.msra.mxu0 0
      %237 = vmatprep.subr.bf16.mxu0 0
      %238 = vmatpush1.bf16.xpose.msra.mxu0 0
      %239 = vmatprep.subr.bf16.mxu0 0
      %240 = vmatpush1.bf16.xpose.msra.mxu0 0
      %241 = vmatprep.subr.bf16.mxu0 0
      %242 = vmatpush1.bf16.xpose.msra.mxu0 0
      %243 = vmatprep.subr.bf16.mxu0 0
      %244 = vmatpush1.bf16.xpose.msra.mxu0 0
      %245 = vmatprep.subr.bf16.mxu0 0
      %246 = vmatpush1.bf16.xpose.msra.mxu0 0
      %247 = vmatprep.subr.bf16.mxu0 0
      %248 = vmatpush1.bf16.xpose.msra.mxu0 0
      %249 = vmatprep.subr.bf16.mxu0 0
      %250 = vmatpush1.bf16.xpose.msra.mxu0 0
      %251 = vmatprep.subr.bf16.mxu0 0
      %252 = vmatpush1.bf16.xpose.msra.mxu0 0
      %253 = vmatprep.subr.bf16.mxu0 0
      %254 = vmatpush1.bf16.xpose.msra.mxu0 0
      %255 = vmatprep.subr.bf16.mxu0 0
      %256 = vmatpush1.bf16.xpose.msra.mxu0 0
      %257 = vmatprep.subr.bf16.mxu0 0
      %258 = vmatpush1.bf16.xpose.msra.mxu0 0
      %259 = vmatprep.subr.bf16.mxu0 0
      %260 = vmatpush1.bf16.xpose.msra.mxu0 0
      %261 = vmatprep.subr.bf16.mxu0 0
      %262 = vmatpush1.bf16.xpose.msra.mxu0 0
      %263 = vmatprep.mubr.bf16.mxu0 0
      %264 = vmatmul.mubr.bf16.gmra.mrb[0].mxu0 %v226
      %v265 = vpop.f32.mrb[0].mxu0
      %v266 = vadd.f32 0.0, %v265
      %v267 = vpop.f32.mrb[0].mxu0
      %v268 = vpop.f32.mrb[0].mxu0
      %v269 = vadd.f32 0.0, %v268
      %v270 = vpop.f32.mrb[0].mxu0
      %271 = vdwg.mxu0
      %v272 = vmul.f32 %v266, 0.125
      %v273 = vmul.f32 %v269, 0.125
      %v274 = vsel %vm214, %v272, -1e+30
      %v275 = vsel %vm214, %v273, -1e+30
      %vm276 = vcmask 130048
      %v277 = vsel %vm276, %v274, -inf
      %278 = vmax.xlane.f32.xlu0 %v277
      %v279 = vpop.xlane.xlu0 %278
      %v280 = vsel %vm276, %v275, -inf
      %281 = vmax.xlane.f32.xlu0 %v280
      %v282 = vpop.xlane.xlu0 %281
      %v283 = vsub.f32 %v274, %v279
      %v284 = vsub.f32 %v275, %v282
      %v285 = vmul.f32 %v283, 1.442695
      %v286 = vpow.pop %v285
      %v287 = vmul.f32 %v284, 1.442695
      %v288 = vpow.pop %v287
      %v289 = vsel %vm276, %v286, 0.0
      %290 = vadd.xlane.f32.xlu0 %v289
      %v291 = vpop.xlane.xlu0 %290
      %v292 = vsel %vm276, %v288, 0.0
      %293 = vadd.xlane.f32.xlu0 %v292
      %v294 = vpop.xlane.xlu0 %293
      %v295 = vrcp.pop %v291
      %v296 = vrcp.pop %v294
      %v297 = vmul.f32 %v286, %v295
      %v298 = vmul.f32 %v288, %v296
      %v299 = vpack.c.bf16 %v298, %v297
      %v301 = vsel %vm276, %v299, 0
      %303 = vmatprep.subr.bf16.mxu0 0
      %304 = vmatpush1.bf16.msra.mxu0 %v223
      %305 = vmatprep.subr.bf16.mxu0 0
      %306 = vmatpush1.bf16.msra.mxu0 0
      %307 = vmatprep.subr.bf16.mxu0 0
      %308 = vmatpush1.bf16.msra.mxu0 0
      %309 = vmatprep.subr.bf16.mxu0 0
      %310 = vmatpush1.bf16.msra.mxu0 0
      %311 = vmatprep.subr.bf16.mxu0 0
      %312 = vmatpush1.bf16.msra.mxu0 0
      %313 = vmatprep.subr.bf16.mxu0 0
      %314 = vmatpush1.bf16.msra.mxu0 0
      %315 = vmatprep.subr.bf16.mxu0 0
      %316 = vmatpush1.bf16.msra.mxu0 0
      %317 = vmatprep.subr.bf16.mxu0 0
      %318 = vmatpush1.bf16.msra.mxu0 0
      %319 = vmatprep.subr.bf16.mxu0 0
      %320 = vmatpush1.bf16.msra.mxu0 0
      %321 = vmatprep.subr.bf16.mxu0 0
      %322 = vmatpush1.bf16.msra.mxu0 0
      %323 = vmatprep.subr.bf16.mxu0 0
      %324 = vmatpush1.bf16.msra.mxu0 0
      %325 = vmatprep.subr.bf16.mxu0 0
      %326 = vmatpush1.bf16.msra.mxu0 0
      %327 = vmatprep.subr.bf16.mxu0 0
      %328 = vmatpush1.bf16.msra.mxu0 0
      %329 = vmatprep.subr.bf16.mxu0 0
      %330 = vmatpush1.bf16.msra.mxu0 0
      %331 = vmatprep.subr.bf16.mxu0 0
      %332 = vmatpush1.bf16.msra.mxu0 0
      %333 = vmatprep.subr.bf16.mxu0 0
      %334 = vmatpush1.bf16.msra.mxu0 0
      %335 = vmatprep.mubr.bf16.mxu0 0
      %336 = vmatmul.mubr.bf16.gmra.mrb[0].mxu0 %v301
      %v337 = vpop.f32.mrb[0].mxu0
      %v338 = vadd.f32 0.0, %v337
      %v339 = vpop.f32.mrb[0].mxu0
      %v340 = vpop.f32.mrb[0].mxu0
      %v341 = vadd.f32 0.0, %v340
      %v342 = vpop.f32.mrb[0].mxu0
      %343 = vdwg.mxu0
      %344 = vst.msk [vmem:[%s210] sm:$0xff] %vm224, %v338
      %345 = vst.msk [vmem:[%s210 + $0x8] sm:$0xff] %vm224, %v341
      %v346 = vld [vmem:[%s195] sm:$0xff]
      %v347 = vld [vmem:[%s195 + $0x8] sm:$0xff]
      %v348 = vpack.c.bf16 %v347, %v346
      %v349 = vld [vmem:[%s200] sm:$0xff]
      %v350 = vld [vmem:[%s200 + $0x8] sm:$0xff]
      %v351 = vpack.c.bf16 %v350, %v349
      %v352 = vld [vmem:[%s205] sm:$0xff]
      %v353 = vld [vmem:[%s205 + $0x8] sm:$0xff]
      %v354 = vpack.c.bf16 %v353, %v352
      %356 = vrot.lane.b32.xlu0 %v348, 64
      %v357 = vpop.permute.xlu0 %356
      %359 = vrot.lane.b32.xlu0 %v351, 64
      %v360 = vpop.permute.xlu0 %359
      %v362 = vsel %vm224, %v357, 0
      %v365 = vsel %vm224, %v360, 0
      %367 = vmatprep.subr.bf16.mxu0 0
      %368 = vmatpush1.bf16.xpose.msra.mxu0 %v365
      %369 = vmatprep.subr.bf16.mxu0 0
      %370 = vmatpush1.bf16.xpose.msra.mxu0 0
      %371 = vmatprep.subr.bf16.mxu0 0
      %372 = vmatpush1.bf16.xpose.msra.mxu0 0
      %373 = vmatprep.subr.bf16.mxu0 0
      %374 = vmatpush1.bf16.xpose.msra.mxu0 0
      %375 = vmatprep.subr.bf16.mxu0 0
      %376 = vmatpush1.bf16.xpose.msra.mxu0 0
      %377 = vmatprep.subr.bf16.mxu0 0
      %378 = vmatpush1.bf16.xpose.msra.mxu0 0
      %379 = vmatprep.subr.bf16.mxu0 0
      %380 = vmatpush1.bf16.xpose.msra.mxu0 0
      %381 = vmatprep.subr.bf16.mxu0 0
      %382 = vmatpush1.bf16.xpose.msra.mxu0 0
      %383 = vmatprep.subr.bf16.mxu0 0
      %384 = vmatpush1.bf16.xpose.msra.mxu0 0
      %385 = vmatprep.subr.bf16.mxu0 0
      %386 = vmatpush1.bf16.xpose.msra.mxu0 0
      %387 = vmatprep.subr.bf16.mxu0 0
      %388 = vmatpush1.bf16.xpose.msra.mxu0 0
      %389 = vmatprep.subr.bf16.mxu0 0
      %390 = vmatpush1.bf16.xpose.msra.mxu0 0
      %391 = vmatprep.subr.bf16.mxu0 0
      %392 = vmatpush1.bf16.xpose.msra.mxu0 0
      %393 = vmatprep.subr.bf16.mxu0 0
      %394 = vmatpush1.bf16.xpose.msra.mxu0 0
      %395 = vmatprep.subr.bf16.mxu0 0
      %396 = vmatpush1.bf16.xpose.msra.mxu0 0
      %397 = vmatprep.subr.bf16.mxu0 0
      %398 = vmatpush1.bf16.xpose.msra.mxu0 0
      %399 = vmatprep.mubr.bf16.mxu0 0
      %400 = vmatmul.mubr.bf16.gmra.mrb[0].mxu0 %v362
      %v401 = vpop.f32.mrb[0].mxu0
      %v402 = vadd.f32 0.0, %v401
      %v403 = vpop.f32.mrb[0].mxu0
      %v404 = vpop.f32.mrb[0].mxu0
      %v405 = vadd.f32 0.0, %v404
      %v406 = vpop.f32.mrb[0].mxu0
      %407 = vdwg.mxu0
      %v408 = vmul.f32 %v402, 0.125
      %v409 = vmul.f32 %v405, 0.125
      %v410 = vsel %vm214, %v408, -1e+30
      %v411 = vsel %vm214, %v409, -1e+30
      %v412 = vsel %vm276, %v410, -inf
      %413 = vmax.xlane.f32.xlu0 %v412
      %v414 = vpop.xlane.xlu0 %413
      %v415 = vsel %vm276, %v411, -inf
      %416 = vmax.xlane.f32.xlu0 %v415
      %v417 = vpop.xlane.xlu0 %416
      %v418 = vsub.f32 %v410, %v414
      %v419 = vsub.f32 %v411, %v417
      %v420 = vmul.f32 %v418, 1.442695
      %v421 = vpow.pop %v420
      %v422 = vmul.f32 %v419, 1.442695
      %v423 = vpow.pop %v422
      %v424 = vsel %vm276, %v421, 0.0
      %425 = vadd.xlane.f32.xlu0 %v424
      %v426 = vpop.xlane.xlu0 %425
      %v427 = vsel %vm276, %v423, 0.0
      %428 = vadd.xlane.f32.xlu0 %v427
      %v429 = vpop.xlane.xlu0 %428
      %v430 = vrcp.pop %v426
      %v431 = vrcp.pop %v429
      %v432 = vmul.f32 %v421, %v430
      %v433 = vmul.f32 %v423, %v431
      %v434 = vpack.c.bf16 %v433, %v432
      %436 = vrot.lane.b32.xlu0 %v354, 64
      %v437 = vpop.permute.xlu0 %436
      %v440 = vsel %vm276, %v434, 0
      %442 = vmatprep.subr.bf16.mxu0 0
      %443 = vmatpush1.bf16.msra.mxu0 %v437
      %444 = vmatprep.subr.bf16.mxu0 0
      %445 = vmatpush1.bf16.msra.mxu0 0
      %446 = vmatprep.subr.bf16.mxu0 0
      %447 = vmatpush1.bf16.msra.mxu0 0
      %448 = vmatprep.subr.bf16.mxu0 0
      %449 = vmatpush1.bf16.msra.mxu0 0
      %450 = vmatprep.subr.bf16.mxu0 0
      %451 = vmatpush1.bf16.msra.mxu0 0
      %452 = vmatprep.subr.bf16.mxu0 0
      %453 = vmatpush1.bf16.msra.mxu0 0
      %454 = vmatprep.subr.bf16.mxu0 0
      %455 = vmatpush1.bf16.msra.mxu0 0
      %456 = vmatprep.subr.bf16.mxu0 0
      %457 = vmatpush1.bf16.msra.mxu0 0
      %458 = vmatprep.subr.bf16.mxu0 0
      %459 = vmatpush1.bf16.msra.mxu0 0
      %460 = vmatprep.subr.bf16.mxu0 0
      %461 = vmatpush1.bf16.msra.mxu0 0
      %462 = vmatprep.subr.bf16.mxu0 0
      %463 = vmatpush1.bf16.msra.mxu0 0
      %464 = vmatprep.subr.bf16.mxu0 0
      %465 = vmatpush1.bf16.msra.mxu0 0
      %466 = vmatprep.subr.bf16.mxu0 0
      %467 = vmatpush1.bf16.msra.mxu0 0
      %468 = vmatprep.subr.bf16.mxu0 0
      %469 = vmatpush1.bf16.msra.mxu0 0
      %470 = vmatprep.subr.bf16.mxu0 0
      %471 = vmatpush1.bf16.msra.mxu0 0
      %472 = vmatprep.subr.bf16.mxu0 0
      %473 = vmatpush1.bf16.msra.mxu0 0
      %474 = vmatprep.mubr.bf16.mxu0 0
      %475 = vmatmul.mubr.bf16.gmra.mrb[0].mxu0 %v440
      %v476 = vpop.f32.mrb[0].mxu0
      %v477 = vadd.f32 0.0, %v476
      %v478 = vpop.f32.mrb[0].mxu0
      %v479 = vpop.f32.mrb[0].mxu0
      %v480 = vadd.f32 0.0, %v479
      %v481 = vpop.f32.mrb[0].mxu0
      %482 = vdwg.mxu0
      %485 = vrot.lane.b32.xlu0 %v477, 64
      %v486 = vpop.permute.xlu0 %485
      %487 = vrot.lane.b32.xlu0 %v480, 64
      %v488 = vpop.permute.xlu0 %487
      %vm491 = vcmask 1048064
      %492 = vst.msk [vmem:[%s210] sm:$0xff] %vm491, %v486
      %493 = vst.msk [vmem:[%s210 + $0x8] sm:$0xff] %vm491, %v488
      %p494 = scmp.lt.s32.totalorder %s14, 1
      %s495 = scalar_select %p494, %s14, 1
      %s496 = smul.addr %s495, 2
      %s497 = smul.addr %s496, 8
      %s498 = scalar_lea.vmem %s3, %s497
      // Predicated region
      $region33: #{index_filler_forward.16} parent=31 // pred_check
        %p499 = pneg %p110
      $region34: #{index_filler_forward.16} parent=31 // pred_check_branch
        %501 = sbr.rel (%p499) target = $region36
      $region35: #{index_filler_forward.16} parent=31 // pred_region
        _
      $region36: #{index_filler_forward.16} parent=31 // pred_fallthru
        _
    $region32: #{index_filler_forward.16} parent=5 // pred_fallthru
      _
    %p502 = scmp.le.s32.totalorder 2, %s9
    // Predicated region
    $region37: #{index_filler_forward.16} parent=5 // pred_check
      %p503 = pneg %p502
    $region38: #{index_filler_forward.16} parent=5 // pred_check_branch
      %505 = sbr.rel (%p503) target = $region40
    $region39: #{index_filler_forward.16} parent=5 // pred_region
      %s506 = ssub.s32 %s9, 2
      // Predicated region
      $region41: #{index_filler_forward.16} parent=39 // pred_check
        %p507 = pneg %p116
      $region42: #{index_filler_forward.16} parent=39 // pred_check_branch
        %509 = sbr.rel (%p507) target = $region44
      $region43: #{index_filler_forward.16} parent=39 // pred_region
        %p510 = scmp.lt.s32.totalorder %s15, 1
        %s511 = scalar_select %p510, %s15, 1
        %s512 = smul.addr %s511, 2
        %s513 = smul.addr %s512, 8
        %s514 = scalar_lea.vmem %s3, %s513
      $region44: #{index_filler_forward.16} parent=39 // pred_fallthru
        _
    $region40: #{index_filler_forward.16} parent=5 // pred_fallthru
      _
  $region6: #{index_filler_forward.16} parent=0 // loop_footer
    %s13 = sadd.s32 1, %s9
  $region7: #{index_filler_forward.16} parent=0 // loop_footer_branch
    %8 = sbr.rel target = $region3
  $region8: #{index_filler_forward.16} parent=0 // loop_exit
    _

// kernel: index_filler_forward.17
$region0: #{index_filler_forward.17}
  #allocation0 [shape = 'u32[]', space=smem, size = 0x4, offset = 0x4, fixed_abs, tag = 'smem constant byte address 0x4 - core index']
  #allocation1 [shape = 'u32[144,128]{1,0:T(1,128)}', space=vmem, size = 0x12000, scoped, tag = 'internal scratch']
  #allocation2 [shape = 'f32[20,128]{1,0:T(8,128)}', space=vmem, size = 0x3000, scoped, tag = 'scratch operand']
  %s0 = inlined_call_operand.vmem [shape: f32[20,128], index: 0, kind: input, shape index: {}]
  %s1 = inlined_call_operand.vmem [shape: bf16[128,128], index: 1, kind: input, shape index: {}]
  %s2 = inlined_call_operand.vmem [shape: f32[1,128], index: 2, kind: input, shape index: {}]
  %s3 = inlined_call_operand.vmem [shape: f32[20,128], index: 3, kind: input, shape index: {}]
  %s4 = inlined_call_operand.vmem [shape: f32[1,128], index: 4, kind: input, shape index: {}]
  %s5 = inlined_call_operand.vmem [shape: f32[1,128], index: 5, kind: input, shape index: {}]
  %s6 = inlined_call_operand.vmem [shape: f32[20,128], index: 6, kind: output, shape index: {}]
  %s7 = sld [smem:[#allocation0]]
  $region42: #{index_filler_forward.17} parent=0
    _
  %s9 = ssub.s32 1, %s7
  %s10 = scalar_select 0, %s9, %s7
  // Predicated region
  $region2: #{index_filler_forward.17} parent=0 // pred_check
    _
  $region3: #{index_filler_forward.17} parent=0 // pred_check_branch
    %12 = sbr.rel (0) target = $region5
  $region4: #{index_filler_forward.17} parent=0 // pred_region
    _
  $region5: #{index_filler_forward.17} parent=0 // pred_fallthru
    _
  // Predicated region
  $region6: #{index_filler_forward.17} parent=0 // pred_check
    _
  $region7: #{index_filler_forward.17} parent=0 // pred_check_branch
    %14 = sbr.rel (0) target = $region9
  $region8: #{index_filler_forward.17} parent=0 // pred_region
    _
  $region9: #{index_filler_forward.17} parent=0 // pred_fallthru
    _
  // Predicated region
  $region10: #{index_filler_forward.17} parent=0 // pred_check
    _
  $region11: #{index_filler_forward.17} parent=0 // pred_check_branch
    %16 = sbr.rel (0) target = $region13
  $region12: #{index_filler_forward.17} parent=0 // pred_region
    _
  $region13: #{index_filler_forward.17} parent=0 // pred_fallthru
    _
  // Predicated region
  $region14: #{index_filler_forward.17} parent=0 // pred_check
    _
  $region15: #{index_filler_forward.17} parent=0 // pred_check_branch
    %18 = sbr.rel (0) target = $region17
  $region16: #{index_filler_forward.17} parent=0 // pred_region
    _
  $region17: #{index_filler_forward.17} parent=0 // pred_fallthru
    _
  // Predicated region
  $region18: #{index_filler_forward.17} parent=0 // pred_check
    _
  $region19: #{index_filler_forward.17} parent=0 // pred_check_branch
    %20 = sbr.rel (0) target = $region21
  $region20: #{index_filler_forward.17} parent=0 // pred_region
    _
  $region21: #{index_filler_forward.17} parent=0 // pred_fallthru
    _
  // Predicated region
  $region22: #{index_filler_forward.17} parent=0 // pred_check
    _
  $region23: #{index_filler_forward.17} parent=0 // pred_check_branch
    %22 = sbr.rel (0) target = $region25
  $region24: #{index_filler_forward.17} parent=0 // pred_region
    _
  $region25: #{index_filler_forward.17} parent=0 // pred_fallthru
    _
  %p24 = scmp.eq.s32.totalorder 0, 0
  // Predicated region
  $region26: #{index_filler_forward.17} parent=0 // pred_check
    %p25 = pneg %p24
  $region27: #{index_filler_forward.17} parent=0 // pred_check_branch
    %27 = sbr.rel (%p25) target = $region29
  $region28: #{index_filler_forward.17} parent=0 // pred_region
    %28 = vst [vmem:[#allocation2] sm:$0xff] 0.0
    %29 = vst [vmem:[#allocation2 + $0x8] sm:$0xff] 0.0
    %30 = vst [vmem:[#allocation2 + $0x10] sm:$0xf] 0.0
  $region29: #{index_filler_forward.17} parent=0 // pred_fallthru
    _
  %v31 = vld [vmem:[#allocation2] sm:$0xff]
  %v32 = vld [vmem:[#allocation2 + $0x8] sm:$0xff]
  %v33 = vld [vmem:[#allocation2 + $0x10] sm:$0xf]
  %v34 = vld [vmem:[%s0] sm:$0xff]
  %v35 = vld [vmem:[%s0 + $0x8] sm:$0xff]
  %v36 = vld [vmem:[%s0 + $0x10] sm:$0xf]
  %v37 = vpack.c.bf16 %v35, %v34
  %v38 = vpack.c.bf16 %v36, %v36
  %v39 = vld [vmem:[%s1] sm:$0xf]
  %v40 = vld [vmem:[%s1 + $0x4] sm:$0xf]
  %v41 = vld [vmem:[%s1 + $0x8] sm:$0xf]
  %v42 = vld [vmem:[%s1 + $0xc] sm:$0xf]
  %v43 = vld [vmem:[%s1 + $0x10] sm:$0xf]
  %v44 = vld [vmem:[%s1 + $0x14] sm:$0xf]
  %v45 = vld [vmem:[%s1 + $0x18] sm:$0xf]
  %v46 = vld [vmem:[%s1 + $0x1c] sm:$0xf]
  %v47 = vld [vmem:[%s1 + $0x20] sm:$0xf]
  %v48 = vld [vmem:[%s1 + $0x24] sm:$0xf]
  %v49 = vld [vmem:[%s1 + $0x28] sm:$0xf]
  %v50 = vld [vmem:[%s1 + $0x2c] sm:$0xf]
  %v51 = vld [vmem:[%s1 + $0x30] sm:$0xf]
  %v52 = vld [vmem:[%s1 + $0x34] sm:$0xf]
  %v53 = vld [vmem:[%s1 + $0x38] sm:$0xf]
  %v54 = vld [vmem:[%s1 + $0x3c] sm:$0xf]
  %v71 = vunpack.c.l.b16 %v39
  %v72 = vunpack.c.l.b16 %v40
  %v73 = vunpack.c.l.b16 %v41
  %v74 = vunpack.c.l.b16 %v42
  %v75 = vunpack.c.l.b16 %v43
  %v76 = vunpack.c.l.b16 %v44
  %v77 = vunpack.c.l.b16 %v45
  %v78 = vunpack.c.l.b16 %v46
  %v79 = vunpack.c.l.b16 %v47
  %v80 = vunpack.c.l.b16 %v48
  %v81 = vunpack.c.l.b16 %v49
  %v82 = vunpack.c.l.b16 %v50
  %v83 = vunpack.c.l.b16 %v51
  %v84 = vunpack.c.l.b16 %v52
  %v85 = vunpack.c.l.b16 %v53
  %v86 = vunpack.c.l.b16 %v54
  %v87 = vpack.c.b16 %v72, %v71
  %v88 = vpack.c.b16 %v74, %v73
  %v89 = vpack.c.b16 %v76, %v75
  %v90 = vpack.c.b16 %v78, %v77
  %v91 = vpack.c.b16 %v80, %v79
  %v92 = vpack.c.b16 %v82, %v81
  %v93 = vpack.c.b16 %v84, %v83
  %v94 = vpack.c.b16 %v86, %v85
  %103 = vmatprep.subr.bf16.mxu0 0
  %104 = vmatpush1.bf16.msra.mxu0 %v87
  %105 = vmatprep.subr.bf16.mxu0 0
  %106 = vmatpush1.bf16.msra.mxu0 %v88
  %107 = vmatprep.subr.bf16.mxu0 0
  %108 = vmatpush1.bf16.msra.mxu0 %v89
  %109 = vmatprep.subr.bf16.mxu0 0
  %110 = vmatpush1.bf16.msra.mxu0 %v90
  %111 = vmatprep.subr.bf16.mxu0 0
  %112 = vmatpush1.bf16.msra.mxu0 %v91
  %113 = vmatprep.subr.bf16.mxu0 0
  %114 = vmatpush1.bf16.msra.mxu0 %v92
  %115 = vmatprep.subr.bf16.mxu0 0
  %116 = vmatpush1.bf16.msra.mxu0 %v93
  %117 = vmatprep.subr.bf16.mxu0 0
  %118 = vmatpush1.bf16.msra.mxu0 %v94
  %119 = vmatprep.subr.bf16.mxu0 0
  %120 = vmatpush1.bf16.msra.mxu0 0
  %121 = vmatprep.subr.bf16.mxu0 0
  %122 = vmatpush1.bf16.msra.mxu0 0
  %123 = vmatprep.subr.bf16.mxu0 0
  %124 = vmatpush1.bf16.msra.mxu0 0
  %125 = vmatprep.subr.bf16.mxu0 0
  %126 = vmatpush1.bf16.msra.mxu0 0
  %127 = vmatprep.subr.bf16.mxu0 0
  %128 = vmatpush1.bf16.msra.mxu0 0
  %129 = vmatprep.subr.bf16.mxu0 0
  %130 = vmatpush1.bf16.msra.mxu0 0
  %131 = vmatprep.subr.bf16.mxu0 0
  %132 = vmatpush1.bf16.msra.mxu0 0
  %133 = vmatprep.subr.bf16.mxu0 0
  %134 = vmatpush1.bf16.msra.mxu0 0
  %135 = vmatprep.mubr.bf16.mxu0 0
  %136 = vmatmul.mubr.bf16.gmra.mrb[0].mxu0 %v37
  %v137 = vpop.f32.mrb[0].mxu0
  %v138 = vadd.f32 0.0, %v137
  %v139 = vpop.f32.mrb[0].mxu0
  %v140 = vpop.f32.mrb[0].mxu0
  %v141 = vadd.f32 0.0, %v140
  %v142 = vpop.f32.mrb[0].mxu0
  %143 = vmatprep.mubr.bf16.mxu0 0
  %144 = vmatmul.mubr.bf16.gmra.mrb[0].mxu0 %v38
  %v145 = vpop.f32.mrb[0].mxu0
  %v146 = vadd.f32 0.0, %v145
  %v147 = vpop.f32.mrb[0].mxu0
  %v148 = vpop.f32.mrb[0].mxu0
  %v149 = vpop.f32.mrb[0].mxu0
  %150 = vdwg.mxu0
  %v151 = vadd.f32 %v31, %v138
  %v152 = vadd.f32 %v32, %v141
  %v153 = vadd.f32 %v33, %v146
  %154 = vst [vmem:[#allocation2] sm:$0xff] %v151
  %155 = vst [vmem:[#allocation2 + $0x8] sm:$0xff] %v152
  %156 = vst [vmem:[#allocation2 + $0x10] sm:$0xf] %v153
  // Predicated region
  $region30: #{index_filler_forward.17} parent=0 // pred_check
    %p157 = pneg %p24
  $region31: #{index_filler_forward.17} parent=0 // pred_check_branch
    %159 = sbr.rel (%p157) target = $region33
  $region32: #{index_filler_forward.17} parent=0 // pred_region
    %v160 = vld [vmem:[#allocation2] sm:$0xff]
    %v161 = vld [vmem:[#allocation2 + $0x8] sm:$0xff]
    %v162 = vld [vmem:[#allocation2 + $0x10] sm:$0xf]
    %v163 = vld [vmem:[%s2] sm:$0x1]
    %v165 = vlaneseq
    %v166 = vshrl.u32 %v165, 7
    %v167 = vsub.s32 0, %v166
    %v168 = vrot.slane %v163, %v167
    %v170 = vadd.f32 %v160, %v168
    %v171 = vadd.f32 %v161, %v168
    %v172 = vadd.f32 %v162, %v168
    %v173 = vld [vmem:[%s3] sm:$0xff]
    %v174 = vld [vmem:[%s3 + $0x8] sm:$0xff]
    %v175 = vld [vmem:[%s3 + $0x10] sm:$0xf]
    %v176 = vadd.f32 %v170, %v173
    %v177 = vadd.f32 %v171, %v174
    %v178 = vadd.f32 %v172, %v175
    %179 = vadd.xlane.f32.xlu0 %v176
    %v180 = vpop.xlane.xlu0 %179
    %181 = vadd.xlane.f32.xlu0 %v177
    %v182 = vpop.xlane.xlu0 %181
    %vm183 = vcmask 1043456
    %v184 = vsel %vm183, %v178, 0.0
    %185 = vadd.xlane.f32.xlu0 %v184
    %v186 = vpop.xlane.xlu0 %185
    %v187 = vrcp.pop 128.0
    %v188 = vmul.f32 %v180, %v187
    %v189 = vmul.f32 %v182, %v187
    %v190 = vmul.f32 %v186, %v187
    %v191 = vsub.f32 %v176, %v188
    %v192 = vsub.f32 %v177, %v189
    %v193 = vsub.f32 %v178, %v190
    %v194 = vmul.f32 %v191, %v191
    %v195 = vmul.f32 %v192, %v192
    %v196 = vmul.f32 %v193, %v193
    %197 = vadd.xlane.f32.xlu0 %v194
    %v198 = vpop.xlane.xlu0 %197
    %199 = vadd.xlane.f32.xlu0 %v195
    %v200 = vpop.xlane.xlu0 %199
    %v201 = vsel %vm183, %v196, 0.0
    %202 = vadd.xlane.f32.xlu0 %v201
    %v203 = vpop.xlane.xlu0 %202
    %v204 = vmul.f32 %v198, %v187
    %v205 = vmul.f32 %v200, %v187
    %v206 = vmul.f32 %v203, %v187
    %v207 = vadd.f32 %v204, 1e-12
    %v208 = vadd.f32 %v205, 1e-12
    %v209 = vadd.f32 %v206, 1e-12
    %v210 = vrsqrt.pop %v207
    %v211 = vrsqrt.pop %v208
    %v212 = vrsqrt.pop %v209
    %v213 = vmul.f32 %v191, %v210
    %v214 = vmul.f32 %v192, %v211
    %v215 = vmul.f32 %v193, %v212
    %v216 = vld [vmem:[%s4] sm:$0x1]
    %v218 = vlaneseq
    %v219 = vshrl.u32 %v218, 7
    %v220 = vsub.s32 0, %v219
    %v221 = vrot.slane %v216, %v220
    %v223 = vmul.f32 %v213, %v221
    %v224 = vmul.f32 %v214, %v221
    %v225 = vmul.f32 %v215, %v221
    %v226 = vld [vmem:[%s5] sm:$0x1]
    %v228 = vlaneseq
    %v229 = vshrl.u32 %v228, 7
    %v230 = vsub.s32 0, %v229
    %v231 = vrot.slane %v226, %v230
    %v233 = vadd.f32 %v223, %v231
    %v234 = vadd.f32 %v224, %v231
    %v235 = vadd.f32 %v225, %v231
    %236 = vst [vmem:[%s6] sm:$0xff] %v233
    %237 = vst [vmem:[%s6 + $0x8] sm:$0xff] %v234
    %238 = vst [vmem:[%s6 + $0x10] sm:$0xf] %v235
  $region33: #{index_filler_forward.17} parent=0 // pred_fallthru
    _
  // Predicated region
  $region34: #{index_filler_forward.17} parent=0 // pred_check
    _
  $region35: #{index_filler_forward.17} parent=0 // pred_check_branch
    %240 = sbr.rel (0) target = $region37
  $region36: #{index_filler_forward.17} parent=0 // pred_region
    _
  $region37: #{index_filler_forward.17} parent=0 // pred_fallthru
    _
  // Predicated region
  $region38: #{index_filler_forward.17} parent=0 // pred_check
    _
  $region39: #{index_filler_forward.17} parent=0 // pred_check_branch
    %242 = sbr.rel (0) target = $region41
  $region40: #{index_filler_forward.17} parent=0 // pred_region
    _
  $region41: #{index_filler_forward.17} parent=0 // pred_fallthru
    _

// kernel: index_filler_forward.18
$region0: #{index_filler_forward.18}
  #allocation0 [shape = 'u32[]', space=smem, size = 0x4, offset = 0x4, fixed_abs, tag = 'smem constant byte address 0x4 - core index']
  #allocation1 [shape = 'u32[144,128]{1,0:T(1,128)}', space=vmem, size = 0x12000, scoped, tag = 'internal scratch']
  #allocation2 [shape = 'f32[20,256]{1,0:T(8,128)}', space=vmem, size = 0x6000, scoped, tag = 'scratch operand']
  %s0 = inlined_call_operand.vmem [shape: f32[20,128], index: 0, kind: input, shape index: {}]
  %s1 = inlined_call_operand.vmem [shape: bf16[128,256], index: 1, kind: input, shape index: {}]
  %s2 = inlined_call_operand.vmem [shape: f32[1,256], index: 2, kind: input, shape index: {}]
  %s3 = inlined_call_operand.vmem [shape: f32[20,256], index: 3, kind: output, shape index: {}]
  %s4 = sld [smem:[#allocation0]]
  $region30: #{index_filler_forward.18} parent=0
    _
  %s6 = ssub.s32 1, %s4
  %s7 = scalar_select 0, %s6, %s4
  // Predicated region
  $region2: #{index_filler_forward.18} parent=0 // pred_check
    _
  $region3: #{index_filler_forward.18} parent=0 // pred_check_branch
    %9 = sbr.rel (0) target = $region5
  $region4: #{index_filler_forward.18} parent=0 // pred_region
    _
  $region5: #{index_filler_forward.18} parent=0 // pred_fallthru
    _
  // Predicated region
  $region6: #{index_filler_forward.18} parent=0 // pred_check
    _
  $region7: #{index_filler_forward.18} parent=0 // pred_check_branch
    %11 = sbr.rel (0) target = $region9
  $region8: #{index_filler_forward.18} parent=0 // pred_region
    _
  $region9: #{index_filler_forward.18} parent=0 // pred_fallthru
    _
  // Predicated region
  $region10: #{index_filler_forward.18} parent=0 // pred_check
    _
  $region11: #{index_filler_forward.18} parent=0 // pred_check_branch
    %13 = sbr.rel (0) target = $region13
  $region12: #{index_filler_forward.18} parent=0 // pred_region
    _
  $region13: #{index_filler_forward.18} parent=0 // pred_fallthru
    _
  %p15 = scmp.eq.s32.totalorder 0, 0
  // Predicated region
  $region14: #{index_filler_forward.18} parent=0 // pred_check
    %p16 = pneg %p15
  $region15: #{index_filler_forward.18} parent=0 // pred_check_branch
    %18 = sbr.rel (%p16) target = $region17
  $region16: #{index_filler_forward.18} parent=0 // pred_region
    %19 = vst [vmem:[#allocation2] sm:$0xff] 0.0
    %20 = vst [vmem:[#allocation2 + $0x8] sm:$0xff] 0.0
    %21 = vst [vmem:[#allocation2 + $0x10] sm:$0xff] 0.0
    %22 = vst [vmem:[#allocation2 + $0x18] sm:$0xff] 0.0
    %23 = vst [vmem:[#allocation2 + $0x20] sm:$0xf] 0.0
    %24 = vst [vmem:[#allocation2 + $0x28] sm:$0xf] 0.0
  $region17: #{index_filler_forward.18} parent=0 // pred_fallthru
    _
  %v25 = vld [vmem:[#allocation2] sm:$0xff]
  %v26 = vld [vmem:[#allocation2 + $0x8] sm:$0xff]
  %v27 = vld [vmem:[#allocation2 + $0x10] sm:$0xff]
  %v28 = vld [vmem:[#allocation2 + $0x18] sm:$0xff]
  %v29 = vld [vmem:[#allocation2 + $0x20] sm:$0xf]
  %v30 = vld [vmem:[#allocation2 + $0x28] sm:$0xf]
  %v31 = vld [vmem:[%s0] sm:$0xff]
  %v32 = vld [vmem:[%s0 + $0x8] sm:$0xff]
  %v33 = vld [vmem:[%s0 + $0x10] sm:$0xf]
  %v34 = vpack.c.bf16 %v32, %v31
  %v35 = vpack.c.bf16 %v33, %v33
  %v36 = vld [vmem:[%s1] sm:$0xff]
  %v37 = vld [vmem:[%s1 + $0x8] sm:$0xff]
  %v38 = vld [vmem:[%s1 + $0x10] sm:$0xff]
  %v39 = vld [vmem:[%s1 + $0x18] sm:$0xff]
  %v40 = vld [vmem:[%s1 + $0x20] sm:$0xff]
  %v41 = vld [vmem:[%s1 + $0x28] sm:$0xff]
  %v42 = vld [vmem:[%s1 + $0x30] sm:$0xff]
  %v43 = vld [vmem:[%s1 + $0x38] sm:$0xff]
  %v44 = vld [vmem:[%s1 + $0x40] sm:$0xff]
  %v45 = vld [vmem:[%s1 + $0x48] sm:$0xff]
  %v46 = vld [vmem:[%s1 + $0x50] sm:$0xff]
  %v47 = vld [vmem:[%s1 + $0x58] sm:$0xff]
  %v48 = vld [vmem:[%s1 + $0x60] sm:$0xff]
  %v49 = vld [vmem:[%s1 + $0x68] sm:$0xff]
  %v50 = vld [vmem:[%s1 + $0x70] sm:$0xff]
  %v51 = vld [vmem:[%s1 + $0x78] sm:$0xff]
  %v68 = vunpack.c.l.b16 %v36
  %v69 = vunpack.c.h.b16 %v36
  %v70 = vunpack.c.l.b16 %v37
  %v71 = vunpack.c.h.b16 %v37
  %v72 = vunpack.c.l.b16 %v38
  %v73 = vunpack.c.h.b16 %v38
  %v74 = vunpack.c.l.b16 %v39
  %v75 = vunpack.c.h.b16 %v39
  %v76 = vunpack.c.l.b16 %v40
  %v77 = vunpack.c.h.b16 %v40
  %v78 = vunpack.c.l.b16 %v41
  %v79 = vunpack.c.h.b16 %v41
  %v80 = vunpack.c.l.b16 %v42
  %v81 = vunpack.c.h.b16 %v42
  %v82 = vunpack.c.l.b16 %v43
  %v83 = vunpack.c.h.b16 %v43
  %v84 = vunpack.c.l.b16 %v44
  %v85 = vunpack.c.h.b16 %v44
  %v86 = vunpack.c.l.b16 %v45
  %v87 = vunpack.c.h.b16 %v45
  %v88 = vunpack.c.l.b16 %v46
  %v89 = vunpack.c.h.b16 %v46
  %v90 = vunpack.c.l.b16 %v47
  %v91 = vunpack.c.h.b16 %v47
  %v92 = vunpack.c.l.b16 %v48
  %v93 = vunpack.c.h.b16 %v48
  %v94 = vunpack.c.l.b16 %v49
  %v95 = vunpack.c.h.b16 %v49
  %v96 = vunpack.c.l.b16 %v50
  %v97 = vunpack.c.h.b16 %v50
  %v98 = vunpack.c.l.b16 %v51
  %v99 = vunpack.c.h.b16 %v51
  %v100 = vpack.c.b16 %v70, %v68
  %v101 = vpack.c.b16 %v71, %v69
  %v102 = vpack.c.b16 %v74, %v72
  %v103 = vpack.c.b16 %v75, %v73
  %v104 = vpack.c.b16 %v78, %v76
  %v105 = vpack.c.b16 %v79, %v77
  %v106 = vpack.c.b16 %v82, %v80
  %v107 = vpack.c.b16 %v83, %v81
  %v108 = vpack.c.b16 %v86, %v84
  %v109 = vpack.c.b16 %v87, %v85
  %v110 = vpack.c.b16 %v90, %v88
  %v111 = vpack.c.b16 %v91, %v89
  %v112 = vpack.c.b16 %v94, %v92
  %v113 = vpack.c.b16 %v95, %v93
  %v114 = vpack.c.b16 %v98, %v96
  %v115 = vpack.c.b16 %v99, %v97
  %132 = vmatprep.subr.bf16.mxu0 %v101
  %133 = vmatpush1.bf16.msra.mxu0 %v100
  %134 = vmatprep.subr.bf16.mxu0 %v103
  %135 = vmatpush1.bf16.msra.mxu0 %v102
  %136 = vmatprep.subr.bf16.mxu0 %v105
  %137 = vmatpush1.bf16.msra.mxu0 %v104
  %138 = vmatprep.subr.bf16.mxu0 %v107
  %139 = vmatpush1.bf16.msra.mxu0 %v106
  %140 = vmatprep.subr.bf16.mxu0 %v109
  %141 = vmatpush1.bf16.msra.mxu0 %v108
  %142 = vmatprep.subr.bf16.mxu0 %v111
  %143 = vmatpush1.bf16.msra.mxu0 %v110
  %144 = vmatprep.subr.bf16.mxu0 %v113
  %145 = vmatpush1.bf16.msra.mxu0 %v112
  %146 = vmatprep.subr.bf16.mxu0 %v115
  %147 = vmatpush1.bf16.msra.mxu0 %v114
  %148 = vmatprep.subr.bf16.mxu0 0
  %149 = vmatpush1.bf16.msra.mxu0 0
  %150 = vmatprep.subr.bf16.mxu0 0
  %151 = vmatpush1.bf16.msra.mxu0 0
  %152 = vmatprep.subr.bf16.mxu0 0
  %153 = vmatpush1.bf16.msra.mxu0 0
  %154 = vmatprep.subr.bf16.mxu0 0
  %155 = vmatpush1.bf16.msra.mxu0 0
  %156 = vmatprep.subr.bf16.mxu0 0
  %157 = vmatpush1.bf16.msra.mxu0 0
  %158 = vmatprep.subr.bf16.mxu0 0
  %159 = vmatpush1.bf16.msra.mxu0 0
  %160 = vmatprep.subr.bf16.mxu0 0
  %161 = vmatpush1.bf16.msra.mxu0 0
  %162 = vmatprep.subr.bf16.mxu0 0
  %163 = vmatpush1.bf16.msra.mxu0 0
  %164 = vmatprep.mubr.bf16.mxu0 0
  %165 = vmatmul.mubr.bf16.gmra.mrb[0].mxu0 %v34
  %v166 = vpop.f32.mrb[0].mxu0
  %v167 = vadd.f32 0.0, %v166
  %v168 = vpop.f32.mrb[0].mxu0
  %v169 = vadd.f32 0.0, %v168
  %v170 = vpop.f32.mrb[0].mxu0
  %v171 = vadd.f32 0.0, %v170
  %v172 = vpop.f32.mrb[0].mxu0
  %v173 = vadd.f32 0.0, %v172
  %174 = vmatprep.mubr.bf16.mxu0 0
  %175 = vmatmul.mubr.bf16.gmra.mrb[0].mxu0 %v35
  %v176 = vpop.f32.mrb[0].mxu0
  %v177 = vadd.f32 0.0, %v176
  %v178 = vpop.f32.mrb[0].mxu0
  %v179 = vadd.f32 0.0, %v178
  %v180 = vpop.f32.mrb[0].mxu0
  %v181 = vpop.f32.mrb[0].mxu0
  %182 = vdwg.mxu0
  %v183 = vadd.f32 %v25, %v167
  %v184 = vadd.f32 %v26, %v169
  %v185 = vadd.f32 %v27, %v171
  %v186 = vadd.f32 %v28, %v173
  %v187 = vadd.f32 %v29, %v177
  %v188 = vadd.f32 %v30, %v179
  %189 = vst [vmem:[#allocation2] sm:$0xff] %v183
  %190 = vst [vmem:[#allocation2 + $0x8] sm:$0xff] %v184
  %191 = vst [vmem:[#allocation2 + $0x10] sm:$0xff] %v185
  %192 = vst [vmem:[#allocation2 + $0x18] sm:$0xff] %v186
  %193 = vst [vmem:[#allocation2 + $0x20] sm:$0xf] %v187
  %194 = vst [vmem:[#allocation2 + $0x28] sm:$0xf] %v188
  // Predicated region
  $region18: #{index_filler_forward.18} parent=0 // pred_check
    %p195 = pneg %p15
  $region19: #{index_filler_forward.18} parent=0 // pred_check_branch
    %197 = sbr.rel (%p195) target = $region21
  $region20: #{index_filler_forward.18} parent=0 // pred_region
    %v198 = vld [vmem:[#allocation2] sm:$0xff]
    %v199 = vld [vmem:[#allocation2 + $0x8] sm:$0xff]
    %v200 = vld [vmem:[#allocation2 + $0x10] sm:$0xff]
    %v201 = vld [vmem:[#allocation2 + $0x18] sm:$0xff]
    %v202 = vld [vmem:[#allocation2 + $0x20] sm:$0xf]
    %v203 = vld [vmem:[#allocation2 + $0x28] sm:$0xf]
    %v204 = vld [vmem:[%s2] sm:$0x3]
    %v206 = vlaneseq
    %v207 = vshrl.u32 %v206, 7
    %v208 = vsub.s32 0, %v207
    %v209 = vrot.slane %v204, %v208
    %v210 = vlaneseq
    %v211 = vshrl.u32 %v210, 7
    %v212 = vsub.s32 1, %v211
    %v213 = vrot.slane %v204, %v212
    %v216 = vadd.f32 %v198, %v209
    %v217 = vadd.f32 %v199, %v213
    %v218 = vadd.f32 %v200, %v209
    %v219 = vadd.f32 %v201, %v213
    %v220 = vadd.f32 %v202, %v209
    %v221 = vadd.f32 %v203, %v213
    %v222 = vmul.f32 %v216, %v216
    %v223 = vmul.f32 %v217, %v217
    %v224 = vmul.f32 %v218, %v218
    %v225 = vmul.f32 %v219, %v219
    %v226 = vmul.f32 %v220, %v220
    %v227 = vmul.f32 %v221, %v221
    %v228 = vmul.f32 %v216, %v222
    %v229 = vmul.f32 %v217, %v223
    %v230 = vmul.f32 %v218, %v224
    %v231 = vmul.f32 %v219, %v225
    %v232 = vmul.f32 %v220, %v226
    %v233 = vmul.f32 %v221, %v227
    %v234 = vmul.f32 %v228, 0.044715
    %v235 = vmul.f32 %v229, 0.044715
    %v236 = vmul.f32 %v230, 0.044715
    %v237 = vmul.f32 %v231, 0.044715
    %v238 = vmul.f32 %v232, 0.044715
    %v239 = vmul.f32 %v233, 0.044715
    %v240 = vadd.f32 %v216, %v234
    %v241 = vadd.f32 %v217, %v235
    %v242 = vadd.f32 %v218, %v236
    %v243 = vadd.f32 %v219, %v237
    %v244 = vadd.f32 %v220, %v238
    %v245 = vadd.f32 %v221, %v239
    %v246 = vmul.f32 %v240, 0.7978846
    %v247 = vmul.f32 %v241, 0.7978846
    %v248 = vmul.f32 %v242, 0.7978846
    %v249 = vmul.f32 %v243, 0.7978846
    %v250 = vmul.f32 %v244, 0.7978846
    %v251 = vmul.f32 %v245, 0.7978846
    %v252 = vtanh.pop %v246
    %v253 = vtanh.pop %v247
    %v254 = vtanh.pop %v248
    %v255 = vtanh.pop %v249
    %v256 = vtanh.pop %v250
    %v257 = vtanh.pop %v251
    %v258 = vadd.f32 %v252, 1.0
    %v259 = vadd.f32 %v253, 1.0
    %v260 = vadd.f32 %v254, 1.0
    %v261 = vadd.f32 %v255, 1.0
    %v262 = vadd.f32 %v256, 1.0
    %v263 = vadd.f32 %v257, 1.0
    %v264 = vmul.f32 %v258, 0.5
    %v265 = vmul.f32 %v259, 0.5
    %v266 = vmul.f32 %v260, 0.5
    %v267 = vmul.f32 %v261, 0.5
    %v268 = vmul.f32 %v262, 0.5
    %v269 = vmul.f32 %v263, 0.5
    %v270 = vmul.f32 %v216, %v264
    %v271 = vmul.f32 %v217, %v265
    %v272 = vmul.f32 %v218, %v266
    %v273 = vmul.f32 %v219, %v267
    %v274 = vmul.f32 %v220, %v268
    %v275 = vmul.f32 %v221, %v269
    %276 = vst [vmem:[%s3] sm:$0xff] %v270
    %277 = vst [vmem:[%s3 + $0x8] sm:$0xff] %v271
    %278 = vst [vmem:[%s3 + $0x10] sm:$0xff] %v272
    %279 = vst [vmem:[%s3 + $0x18] sm:$0xff] %v273
    %280 = vst [vmem:[%s3 + $0x20] sm:$0xf] %v274
    %281 = vst [vmem:[%s3 + $0x28] sm:$0xf] %v275
  $region21: #{index_filler_forward.18} parent=0 // pred_fallthru
    _
  // Predicated region
  $region22: #{index_filler_forward.18} parent=0 // pred_check
    _
  $region23: #{index_filler_forward.18} parent=0 // pred_check_branch
    %283 = sbr.rel (0) target = $region25
  $region24: #{index_filler_forward.18} parent=0 // pred_region
    _
  $region25: #{index_filler_forward.18} parent=0 // pred_fallthru
    _
  // Predicated region
  $region26: #{index_filler_forward.18} parent=0 // pred_check
    _
  $region27: #{index_filler_forward.18} parent=0 // pred_check_branch
    %285 = sbr.rel (0) target = $region29
  $region28: #{index_filler_forward.18} parent=0 // pred_region
    _
  $region29: #{index_filler_forward.18} parent=0 // pred_fallthru
    _

// kernel: index_filler_forward.19
$region0: #{index_filler_forward.19}
  #allocation0 [shape = 'u32[]', space=smem, size = 0x4, offset = 0x4, fixed_abs, tag = 'smem constant byte address 0x4 - core index']
  #allocation1 [shape = 'u32[144,128]{1,0:T(1,128)}', space=vmem, size = 0x12000, scoped, tag = 'internal scratch']
  #allocation2 [shape = 'f32[20,128]{1,0:T(8,128)}', space=vmem, size = 0x3000, scoped, tag = 'scratch operand']
  %s0 = inlined_call_operand.vmem [shape: f32[20,256], index: 0, kind: input, shape index: {}]
  %s1 = inlined_call_operand.vmem [shape: bf16[256,128], index: 1, kind: input, shape index: {}]
  %s2 = inlined_call_operand.vmem [shape: f32[1,128], index: 2, kind: input, shape index: {}]
  %s3 = inlined_call_operand.vmem [shape: f32[20,128], index: 3, kind: input, shape index: {}]
  %s4 = inlined_call_operand.vmem [shape: f32[1,128], index: 4, kind: input, shape index: {}]
  %s5 = inlined_call_operand.vmem [shape: f32[1,128], index: 5, kind: input, shape index: {}]
  %s6 = inlined_call_operand.vmem [shape: f32[20,128], index: 6, kind: output, shape index: {}]
  %s7 = sld [smem:[#allocation0]]
  $region42: #{index_filler_forward.19} parent=0
    _
  %s9 = ssub.s32 1, %s7
  %s10 = scalar_select 0, %s9, %s7
  // Predicated region
  $region2: #{index_filler_forward.19} parent=0 // pred_check
    _
  $region3: #{index_filler_forward.19} parent=0 // pred_check_branch
    %12 = sbr.rel (0) target = $region5
  $region4: #{index_filler_forward.19} parent=0 // pred_region
    _
  $region5: #{index_filler_forward.19} parent=0 // pred_fallthru
    _
  // Predicated region
  $region6: #{index_filler_forward.19} parent=0 // pred_check
    _
  $region7: #{index_filler_forward.19} parent=0 // pred_check_branch
    %14 = sbr.rel (0) target = $region9
  $region8: #{index_filler_forward.19} parent=0 // pred_region
    _
  $region9: #{index_filler_forward.19} parent=0 // pred_fallthru
    _
  // Predicated region
  $region10: #{index_filler_forward.19} parent=0 // pred_check
    _
  $region11: #{index_filler_forward.19} parent=0 // pred_check_branch
    %16 = sbr.rel (0) target = $region13
  $region12: #{index_filler_forward.19} parent=0 // pred_region
    _
  $region13: #{index_filler_forward.19} parent=0 // pred_fallthru
    _
  // Predicated region
  $region14: #{index_filler_forward.19} parent=0 // pred_check
    _
  $region15: #{index_filler_forward.19} parent=0 // pred_check_branch
    %18 = sbr.rel (0) target = $region17
  $region16: #{index_filler_forward.19} parent=0 // pred_region
    _
  $region17: #{index_filler_forward.19} parent=0 // pred_fallthru
    _
  // Predicated region
  $region18: #{index_filler_forward.19} parent=0 // pred_check
    _
  $region19: #{index_filler_forward.19} parent=0 // pred_check_branch
    %20 = sbr.rel (0) target = $region21
  $region20: #{index_filler_forward.19} parent=0 // pred_region
    _
  $region21: #{index_filler_forward.19} parent=0 // pred_fallthru
    _
  // Predicated region
  $region22: #{index_filler_forward.19} parent=0 // pred_check
    _
  $region23: #{index_filler_forward.19} parent=0 // pred_check_branch
    %22 = sbr.rel (0) target = $region25
  $region24: #{index_filler_forward.19} parent=0 // pred_region
    _
  $region25: #{index_filler_forward.19} parent=0 // pred_fallthru
    _
  %p24 = scmp.eq.s32.totalorder 0, 0
  // Predicated region
  $region26: #{index_filler_forward.19} parent=0 // pred_check
    %p25 = pneg %p24
  $region27: #{index_filler_forward.19} parent=0 // pred_check_branch
    %27 = sbr.rel (%p25) target = $region29
  $region28: #{index_filler_forward.19} parent=0 // pred_region
    %28 = vst [vmem:[#allocation2] sm:$0xff] 0.0
    %29 = vst [vmem:[#allocation2 + $0x8] sm:$0xff] 0.0
    %30 = vst [vmem:[#allocation2 + $0x10] sm:$0xf] 0.0
  $region29: #{index_filler_forward.19} parent=0 // pred_fallthru
    _
  %v31 = vld [vmem:[#allocation2] sm:$0xff]
  %v32 = vld [vmem:[#allocation2 + $0x8] sm:$0xff]
  %v33 = vld [vmem:[#allocation2 + $0x10] sm:$0xf]
  %v34 = vld [vmem:[%s0] sm:$0xff]
  %v35 = vld [vmem:[%s0 + $0x8] sm:$0xff]
  %v36 = vld [vmem:[%s0 + $0x10] sm:$0xff]
  %v37 = vld [vmem:[%s0 + $0x18] sm:$0xff]
  %v38 = vld [vmem:[%s0 + $0x20] sm:$0xf]
  %v39 = vld [vmem:[%s0 + $0x28] sm:$0xf]
  %v40 = vpack.c.bf16 %v36, %v34
  %v41 = vpack.c.bf16 %v37, %v35
  %v42 = vpack.c.bf16 %v38, %v38
  %v43 = vpack.c.bf16 %v39, %v39
  %v44 = vld [vmem:[%s1] sm:$0xf]
  %v45 = vld [vmem:[%s1 + $0x4] sm:$0xf]
  %v46 = vld [vmem:[%s1 + $0x8] sm:$0xf]
  %v47 = vld [vmem:[%s1 + $0xc] sm:$0xf]
  %v48 = vld [vmem:[%s1 + $0x10] sm:$0xf]
  %v49 = vld [vmem:[%s1 + $0x14] sm:$0xf]
  %v50 = vld [vmem:[%s1 + $0x18] sm:$0xf]
  %v51 = vld [vmem:[%s1 + $0x1c] sm:$0xf]
  %v52 = vld [vmem:[%s1 + $0x20] sm:$0xf]
  %v53 = vld [vmem:[%s1 + $0x24] sm:$0xf]
  %v54 = vld [vmem:[%s1 + $0x28] sm:$0xf]
  %v55 = vld [vmem:[%s1 + $0x2c] sm:$0xf]
  %v56 = vld [vmem:[%s1 + $0x30] sm:$0xf]
  %v57 = vld [vmem:[%s1 + $0x34] sm:$0xf]
  %v58 = vld [vmem:[%s1 + $0x38] sm:$0xf]
  %v59 = vld [vmem:[%s1 + $0x3c] sm:$0xf]
  %v60 = vld [vmem:[%s1 + $0x40] sm:$0xf]
  %v61 = vld [vmem:[%s1 + $0x44] sm:$0xf]
  %v62 = vld [vmem:[%s1 + $0x48] sm:$0xf]
  %v63 = vld [vmem:[%s1 + $0x4c] sm:$0xf]
  %v64 = vld [vmem:[%s1 + $0x50] sm:$0xf]
  %v65 = vld [vmem:[%s1 + $0x54] sm:$0xf]
  %v66 = vld [vmem:[%s1 + $0x58] sm:$0xf]
  %v67 = vld [vmem:[%s1 + $0x5c] sm:$0xf]
  %v68 = vld [vmem:[%s1 + $0x60] sm:$0xf]
  %v69 = vld [vmem:[%s1 + $0x64] sm:$0xf]
  %v70 = vld [vmem:[%s1 + $0x68] sm:$0xf]
  %v71 = vld [vmem:[%s1 + $0x6c] sm:$0xf]
  %v72 = vld [vmem:[%s1 + $0x70] sm:$0xf]
  %v73 = vld [vmem:[%s1 + $0x74] sm:$0xf]
  %v74 = vld [vmem:[%s1 + $0x78] sm:$0xf]
  %v75 = vld [vmem:[%s1 + $0x7c] sm:$0xf]
  %v108 = vunpack.c.l.b16 %v44
  %v109 = vunpack.c.l.b16 %v45
  %v110 = vunpack.c.l.b16 %v46
  %v111 = vunpack.c.l.b16 %v47
  %v112 = vunpack.c.l.b16 %v48
  %v113 = vunpack.c.l.b16 %v49
  %v114 = vunpack.c.l.b16 %v50
  %v115 = vunpack.c.l.b16 %v51
  %v116 = vunpack.c.l.b16 %v52
  %v117 = vunpack.c.l.b16 %v53
  %v118 = vunpack.c.l.b16 %v54
  %v119 = vunpack.c.l.b16 %v55
  %v120 = vunpack.c.l.b16 %v56
  %v121 = vunpack.c.l.b16 %v57
  %v122 = vunpack.c.l.b16 %v58
  %v123 = vunpack.c.l.b16 %v59
  %v124 = vunpack.c.l.b16 %v60
  %v125 = vunpack.c.l.b16 %v61
  %v126 = vunpack.c.l.b16 %v62
  %v127 = vunpack.c.l.b16 %v63
  %v128 = vunpack.c.l.b16 %v64
  %v129 = vunpack.c.l.b16 %v65
  %v130 = vunpack.c.l.b16 %v66
  %v131 = vunpack.c.l.b16 %v67
  %v132 = vunpack.c.l.b16 %v68
  %v133 = vunpack.c.l.b16 %v69
  %v134 = vunpack.c.l.b16 %v70
  %v135 = vunpack.c.l.b16 %v71
  %v136 = vunpack.c.l.b16 %v72
  %v137 = vunpack.c.l.b16 %v73
  %v138 = vunpack.c.l.b16 %v74
  %v139 = vunpack.c.l.b16 %v75
  %v140 = vpack.c.b16 %v109, %v108
  %v141 = vpack.c.b16 %v111, %v110
  %v142 = vpack.c.b16 %v113, %v112
  %v143 = vpack.c.b16 %v115, %v114
  %v144 = vpack.c.b16 %v117, %v116
  %v145 = vpack.c.b16 %v119, %v118
  %v146 = vpack.c.b16 %v121, %v120
  %v147 = vpack.c.b16 %v123, %v122
  %v148 = vpack.c.b16 %v125, %v124
  %v149 = vpack.c.b16 %v127, %v126
  %v150 = vpack.c.b16 %v129, %v128
  %v151 = vpack.c.b16 %v131, %v130
  %v152 = vpack.c.b16 %v133, %v132
  %v153 = vpack.c.b16 %v135, %v134
  %v154 = vpack.c.b16 %v137, %v136
  %v155 = vpack.c.b16 %v139, %v138
  %172 = vmatprep.subr.bf16.mxu0 0
  %173 = vmatpush1.bf16.msra.mxu0 %v140
  %174 = vmatprep.subr.bf16.mxu0 0
  %175 = vmatpush1.bf16.msra.mxu0 %v141
  %176 = vmatprep.subr.bf16.mxu0 0
  %177 = vmatpush1.bf16.msra.mxu0 %v142
  %178 = vmatprep.subr.bf16.mxu0 0
  %179 = vmatpush1.bf16.msra.mxu0 %v143
  %180 = vmatprep.subr.bf16.mxu0 0
  %181 = vmatpush1.bf16.msra.mxu0 %v144
  %182 = vmatprep.subr.bf16.mxu0 0
  %183 = vmatpush1.bf16.msra.mxu0 %v145
  %184 = vmatprep.subr.bf16.mxu0 0
  %185 = vmatpush1.bf16.msra.mxu0 %v146
  %186 = vmatprep.subr.bf16.mxu0 0
  %187 = vmatpush1.bf16.msra.mxu0 %v147
  %188 = vmatprep.subr.bf16.mxu0 0
  %189 = vmatpush1.bf16.msra.mxu0 %v148
  %190 = vmatprep.subr.bf16.mxu0 0
  %191 = vmatpush1.bf16.msra.mxu0 %v149
  %192 = vmatprep.subr.bf16.mxu0 0
  %193 = vmatpush1.bf16.msra.mxu0 %v150
  %194 = vmatprep.subr.bf16.mxu0 0
  %195 = vmatpush1.bf16.msra.mxu0 %v151
  %196 = vmatprep.subr.bf16.mxu0 0
  %197 = vmatpush1.bf16.msra.mxu0 %v152
  %198 = vmatprep.subr.bf16.mxu0 0
  %199 = vmatpush1.bf16.msra.mxu0 %v153
  %200 = vmatprep.subr.bf16.mxu0 0
  %201 = vmatpush1.bf16.msra.mxu0 %v154
  %202 = vmatprep.subr.bf16.mxu0 0
  %203 = vmatpush1.bf16.msra.mxu0 %v155
  %204 = vmatprep.mubr.bf16.mxu0 %v41
  %205 = vmatmul.mubr.bf16.gmra.mrb[0].mxu0 %v40
  %v206 = vpop.f32.mrb[0].mxu0
  %v207 = vadd.f32 0.0, %v206
  %v208 = vpop.f32.mrb[0].mxu0
  %v209 = vpop.f32.mrb[0].mxu0
  %v210 = vadd.f32 0.0, %v209
  %v211 = vpop.f32.mrb[0].mxu0
  %212 = vmatprep.mubr.bf16.mxu0 %v43
  %213 = vmatmul.mubr.bf16.gmra.mrb[0].mxu0 %v42
  %v214 = vpop.f32.mrb[0].mxu0
  %v215 = vadd.f32 0.0, %v214
  %v216 = vpop.f32.mrb[0].mxu0
  %v217 = vpop.f32.mrb[0].mxu0
  %v218 = vpop.f32.mrb[0].mxu0
  %219 = vdwg.mxu0
  %v220 = vadd.f32 %v31, %v207
  %v221 = vadd.f32 %v32, %v210
  %v222 = vadd.f32 %v33, %v215
  %223 = vst [vmem:[#allocation2] sm:$0xff] %v220
  %224 = vst [vmem:[#allocation2 + $0x8] sm:$0xff] %v221
  %225 = vst [vmem:[#allocation2 + $0x10] sm:$0xf] %v222
  // Predicated region
  $region30: #{index_filler_forward.19} parent=0 // pred_check
    %p226 = pneg %p24
  $region31: #{index_filler_forward.19} parent=0 // pred_check_branch
    %228 = sbr.rel (%p226) target = $region33
  $region32: #{index_filler_forward.19} parent=0 // pred_region
    %v229 = vld [vmem:[#allocation2] sm:$0xff]
    %v230 = vld [vmem:[#allocation2 + $0x8] sm:$0xff]
    %v231 = vld [vmem:[#allocation2 + $0x10] sm:$0xf]
    %v232 = vld [vmem:[%s2] sm:$0x1]
    %v234 = vlaneseq
    %v235 = vshrl.u32 %v234, 7
    %v236 = vsub.s32 0, %v235
    %v237 = vrot.slane %v232, %v236
    %v239 = vadd.f32 %v229, %v237
    %v240 = vadd.f32 %v230, %v237
    %v241 = vadd.f32 %v231, %v237
    %v242 = vld [vmem:[%s3] sm:$0xff]
    %v243 = vld [vmem:[%s3 + $0x8] sm:$0xff]
    %v244 = vld [vmem:[%s3 + $0x10] sm:$0xf]
    %v245 = vadd.f32 %v239, %v242
    %v246 = vadd.f32 %v240, %v243
    %v247 = vadd.f32 %v241, %v244
    %248 = vadd.xlane.f32.xlu0 %v245
    %v249 = vpop.xlane.xlu0 %248
    %250 = vadd.xlane.f32.xlu0 %v246
    %v251 = vpop.xlane.xlu0 %250
    %vm252 = vcmask 1043456
    %v253 = vsel %vm252, %v247, 0.0
    %254 = vadd.xlane.f32.xlu0 %v253
    %v255 = vpop.xlane.xlu0 %254
    %v256 = vrcp.pop 128.0
    %v257 = vmul.f32 %v249, %v256
    %v258 = vmul.f32 %v251, %v256
    %v259 = vmul.f32 %v255, %v256
    %v260 = vsub.f32 %v245, %v257
    %v261 = vsub.f32 %v246, %v258
    %v262 = vsub.f32 %v247, %v259
    %v263 = vmul.f32 %v260, %v260
    %v264 = vmul.f32 %v261, %v261
    %v265 = vmul.f32 %v262, %v262
    %266 = vadd.xlane.f32.xlu0 %v263
    %v267 = vpop.xlane.xlu0 %266
    %268 = vadd.xlane.f32.xlu0 %v264
    %v269 = vpop.xlane.xlu0 %268
    %v270 = vsel %vm252, %v265, 0.0
    %271 = vadd.xlane.f32.xlu0 %v270
    %v272 = vpop.xlane.xlu0 %271
    %v273 = vmul.f32 %v267, %v256
    %v274 = vmul.f32 %v269, %v256
    %v275 = vmul.f32 %v272, %v256
    %v276 = vadd.f32 %v273, 1e-12
    %v277 = vadd.f32 %v274, 1e-12
    %v278 = vadd.f32 %v275, 1e-12
    %v279 = vrsqrt.pop %v276
    %v280 = vrsqrt.pop %v277
    %v281 = vrsqrt.pop %v278
    %v282 = vmul.f32 %v260, %v279
    %v283 = vmul.f32 %v261, %v280
    %v284 = vmul.f32 %v262, %v281
    %v285 = vld [vmem:[%s4] sm:$0x1]
    %v287 = vlaneseq
    %v288 = vshrl.u32 %v287, 7
    %v289 = vsub.s32 0, %v288
    %v290 = vrot.slane %v285, %v289
    %v292 = vmul.f32 %v282, %v290
    %v293 = vmul.f32 %v283, %v290
    %v294 = vmul.f32 %v284, %v290
    %v295 = vld [vmem:[%s5] sm:$0x1]
    %v297 = vlaneseq
    %v298 = vshrl.u32 %v297, 7
    %v299 = vsub.s32 0, %v298
    %v300 = vrot.slane %v295, %v299
    %v302 = vadd.f32 %v292, %v300
    %v303 = vadd.f32 %v293, %v300
    %v304 = vadd.f32 %v294, %v300
    %305 = vst [vmem:[%s6] sm:$0xff] %v302
    %306 = vst [vmem:[%s6 + $0x8] sm:$0xff] %v303
    %307 = vst [vmem:[%s6 + $0x10] sm:$0xf] %v304
  $region33: #{index_filler_forward.19} parent=0 // pred_fallthru
    _
  // Predicated region
  $region34: #{index_filler_forward.19} parent=0 // pred_check
    _
  $region35: #{index_filler_forward.19} parent=0 // pred_check_branch
    %309 = sbr.rel (0) target = $region37
  $region36: #{index_filler_forward.19} parent=0 // pred_region
    _
  $region37: #{index_filler_forward.19} parent=0 // pred_fallthru
    _
  // Predicated region
  $region38: #{index_filler_forward.19} parent=0 // pred_check
    _
  $region39: #{index_filler_forward.19} parent=0 // pred_check_branch
    %311 = sbr.rel (0) target = $region41
  $region40: #{index_filler_forward.19} parent=0 // pred_region
    _
  $region41: #{index_filler_forward.19} parent=0 // pred_fallthru
    _

// kernel: index_filler_forward.25
$region0: #{index_filler_forward.25}
  #allocation0 [shape = 'u32[]', space=smem, size = 0x4, offset = 0x4, fixed_abs, tag = 'smem constant byte address 0x4 - core index']
  #allocation1 [shape = 'u32[144,128]{1,0:T(1,128)}', space=vmem, size = 0x12000, scoped, tag = 'internal scratch']
  #allocation2 [shape = 'f32[20,100]{1,0:T(8,128)}', space=vmem, size = 0x3000, scoped, tag = 'scratch operand']
  %s0 = inlined_call_operand.vmem [shape: f32[20,128], index: 0, kind: input, shape index: {}]
  %s1 = inlined_call_operand.vmem [shape: bf16[128,100], index: 1, kind: input, shape index: {}]
  %s2 = inlined_call_operand.vmem [shape: f32[1,100], index: 2, kind: input, shape index: {}]
  %s3 = inlined_call_operand.vmem [shape: f32[20,100], index: 3, kind: output, shape index: {}]
  %s4 = sld [smem:[#allocation0]]
  $region30: #{index_filler_forward.25} parent=0
    _
  %s6 = ssub.s32 1, %s4
  %s7 = scalar_select 0, %s6, %s4
  // Predicated region
  $region2: #{index_filler_forward.25} parent=0 // pred_check
    _
  $region3: #{index_filler_forward.25} parent=0 // pred_check_branch
    %9 = sbr.rel (0) target = $region5
  $region4: #{index_filler_forward.25} parent=0 // pred_region
    _
  $region5: #{index_filler_forward.25} parent=0 // pred_fallthru
    _
  // Predicated region
  $region6: #{index_filler_forward.25} parent=0 // pred_check
    _
  $region7: #{index_filler_forward.25} parent=0 // pred_check_branch
    %11 = sbr.rel (0) target = $region9
  $region8: #{index_filler_forward.25} parent=0 // pred_region
    _
  $region9: #{index_filler_forward.25} parent=0 // pred_fallthru
    _
  // Predicated region
  $region10: #{index_filler_forward.25} parent=0 // pred_check
    _
  $region11: #{index_filler_forward.25} parent=0 // pred_check_branch
    %13 = sbr.rel (0) target = $region13
  $region12: #{index_filler_forward.25} parent=0 // pred_region
    _
  $region13: #{index_filler_forward.25} parent=0 // pred_fallthru
    _
  %p15 = scmp.eq.s32.totalorder 0, 0
  // Predicated region
  $region14: #{index_filler_forward.25} parent=0 // pred_check
    %p16 = pneg %p15
  $region15: #{index_filler_forward.25} parent=0 // pred_check_branch
    %18 = sbr.rel (%p16) target = $region17
  $region16: #{index_filler_forward.25} parent=0 // pred_region
    %vm19 = vcmask 818176
    %20 = vst.msk [vmem:[#allocation2] sm:$0xff] %vm19, 0.0
    %21 = vst.msk [vmem:[#allocation2 + $0x8] sm:$0xff] %vm19, 0.0
    %vm22 = vcmask 814080
    %23 = vst.msk [vmem:[#allocation2 + $0x10] sm:$0xf] %vm22, 0.0
  $region17: #{index_filler_forward.25} parent=0 // pred_fallthru
    _
  %v24 = vld [vmem:[#allocation2] sm:$0xff]
  %v25 = vld [vmem:[#allocation2 + $0x8] sm:$0xff]
  %v26 = vld [vmem:[#allocation2 + $0x10] sm:$0xf]
  %v27 = vld [vmem:[%s0] sm:$0xff]
  %v28 = vld [vmem:[%s0 + $0x8] sm:$0xff]
  %v29 = vld [vmem:[%s0 + $0x10] sm:$0xf]
  %v30 = vpack.c.bf16 %v28, %v27
  %v31 = vpack.c.bf16 %v29, %v29
  %v32 = vld [vmem:[%s1] sm:$0xf]
  %v33 = vld [vmem:[%s1 + $0x4] sm:$0xf]
  %v34 = vld [vmem:[%s1 + $0x8] sm:$0xf]
  %v35 = vld [vmem:[%s1 + $0xc] sm:$0xf]
  %v36 = vld [vmem:[%s1 + $0x10] sm:$0xf]
  %v37 = vld [vmem:[%s1 + $0x14] sm:$0xf]
  %v38 = vld [vmem:[%s1 + $0x18] sm:$0xf]
  %v39 = vld [vmem:[%s1 + $0x1c] sm:$0xf]
  %v40 = vld [vmem:[%s1 + $0x20] sm:$0xf]
  %v41 = vld [vmem:[%s1 + $0x24] sm:$0xf]
  %v42 = vld [vmem:[%s1 + $0x28] sm:$0xf]
  %v43 = vld [vmem:[%s1 + $0x2c] sm:$0xf]
  %v44 = vld [vmem:[%s1 + $0x30] sm:$0xf]
  %v45 = vld [vmem:[%s1 + $0x34] sm:$0xf]
  %v46 = vld [vmem:[%s1 + $0x38] sm:$0xf]
  %v47 = vld [vmem:[%s1 + $0x3c] sm:$0xf]
  %v64 = vunpack.c.l.b16 %v32
  %v65 = vunpack.c.l.b16 %v33
  %v66 = vunpack.c.l.b16 %v34
  %v67 = vunpack.c.l.b16 %v35
  %v68 = vunpack.c.l.b16 %v36
  %v69 = vunpack.c.l.b16 %v37
  %v70 = vunpack.c.l.b16 %v38
  %v71 = vunpack.c.l.b16 %v39
  %v72 = vunpack.c.l.b16 %v40
  %v73 = vunpack.c.l.b16 %v41
  %v74 = vunpack.c.l.b16 %v42
  %v75 = vunpack.c.l.b16 %v43
  %v76 = vunpack.c.l.b16 %v44
  %v77 = vunpack.c.l.b16 %v45
  %v78 = vunpack.c.l.b16 %v46
  %v79 = vunpack.c.l.b16 %v47
  %v80 = vpack.c.b16 %v65, %v64
  %v81 = vpack.c.b16 %v67, %v66
  %v82 = vpack.c.b16 %v69, %v68
  %v83 = vpack.c.b16 %v71, %v70
  %v84 = vpack.c.b16 %v73, %v72
  %v85 = vpack.c.b16 %v75, %v74
  %v86 = vpack.c.b16 %v77, %v76
  %v87 = vpack.c.b16 %v79, %v78
  %96 = vmatprep.subr.bf16.mxu0 0
  %97 = vmatpush1.bf16.msra.mxu0 %v80
  %98 = vmatprep.subr.bf16.mxu0 0
  %99 = vmatpush1.bf16.msra.mxu0 %v81
  %100 = vmatprep.subr.bf16.mxu0 0
  %101 = vmatpush1.bf16.msra.mxu0 %v82
  %102 = vmatprep.subr.bf16.mxu0 0
  %103 = vmatpush1.bf16.msra.mxu0 %v83
  %104 = vmatprep.subr.bf16.mxu0 0
  %105 = vmatpush1.bf16.msra.mxu0 %v84
  %106 = vmatprep.subr.bf16.mxu0 0
  %107 = vmatpush1.bf16.msra.mxu0 %v85
  %108 = vmatprep.subr.bf16.mxu0 0
  %109 = vmatpush1.bf16.msra.mxu0 %v86
  %110 = vmatprep.subr.bf16.mxu0 0
  %111 = vmatpush1.bf16.msra.mxu0 %v87
  %112 = vmatprep.subr.bf16.mxu0 0
  %113 = vmatpush1.bf16.msra.mxu0 0
  %114 = vmatprep.subr.bf16.mxu0 0
  %115 = vmatpush1.bf16.msra.mxu0 0
  %116 = vmatprep.subr.bf16.mxu0 0
  %117 = vmatpush1.bf16.msra.mxu0 0
  %118 = vmatprep.subr.bf16.mxu0 0
  %119 = vmatpush1.bf16.msra.mxu0 0
  %120 = vmatprep.subr.bf16.mxu0 0
  %121 = vmatpush1.bf16.msra.mxu0 0
  %122 = vmatprep.subr.bf16.mxu0 0
  %123 = vmatpush1.bf16.msra.mxu0 0
  %124 = vmatprep.subr.bf16.mxu0 0
  %125 = vmatpush1.bf16.msra.mxu0 0
  %126 = vmatprep.subr.bf16.mxu0 0
  %127 = vmatpush1.bf16.msra.mxu0 0
  %128 = vmatprep.mubr.bf16.mxu0 0
  %129 = vmatmul.mubr.bf16.gmra.mrb[0].mxu0 %v30
  %v130 = vpop.f32.mrb[0].mxu0
  %v131 = vadd.f32 0.0, %v130
  %v132 = vpop.f32.mrb[0].mxu0
  %v133 = vpop.f32.mrb[0].mxu0
  %v134 = vadd.f32 0.0, %v133
  %v135 = vpop.f32.mrb[0].mxu0
  %136 = vmatprep.mubr.bf16.mxu0 0
  %137 = vmatmul.mubr.bf16.gmra.mrb[0].mxu0 %v31
  %v138 = vpop.f32.mrb[0].mxu0
  %v139 = vadd.f32 0.0, %v138
  %v140 = vpop.f32.mrb[0].mxu0
  %v141 = vpop.f32.mrb[0].mxu0
  %v142 = vpop.f32.mrb[0].mxu0
  %143 = vdwg.mxu0
  %v144 = vadd.f32 %v24, %v131
  %v145 = vadd.f32 %v25, %v134
  %v146 = vadd.f32 %v26, %v139
  %vm147 = vcmask 818176
  %148 = vst.msk [vmem:[#allocation2] sm:$0xff] %vm147, %v144
  %149 = vst.msk [vmem:[#allocation2 + $0x8] sm:$0xff] %vm147, %v145
  %vm150 = vcmask 814080
  %151 = vst.msk [vmem:[#allocation2 + $0x10] sm:$0xf] %vm150, %v146
  // Predicated region
  $region18: #{index_filler_forward.25} parent=0 // pred_check
    %p152 = pneg %p15
  $region19: #{index_filler_forward.25} parent=0 // pred_check_branch
    %154 = sbr.rel (%p152) target = $region21
  $region20: #{index_filler_forward.25} parent=0 // pred_region
    %v155 = vld [vmem:[#allocation2] sm:$0xff]
    %v156 = vld [vmem:[#allocation2 + $0x8] sm:$0xff]
    %v157 = vld [vmem:[#allocation2 + $0x10] sm:$0xf]
    %v158 = vld [vmem:[%s2] sm:$0x1]
    %v160 = vlaneseq
    %v161 = vshrl.u32 %v160, 7
    %v162 = vsub.s32 0, %v161
    %v163 = vrot.slane %v158, %v162
    %v165 = vadd.f32 %v155, %v163
    %v166 = vadd.f32 %v156, %v163
    %v167 = vadd.f32 %v157, %v163
    %168 = vst.msk [vmem:[%s3] sm:$0xff] %vm147, %v165
    %169 = vst.msk [vmem:[%s3 + $0x8] sm:$0xff] %vm147, %v166
    %170 = vst.msk [vmem:[%s3 + $0x10] sm:$0xf] %vm150, %v167
  $region21: #{index_filler_forward.25} parent=0 // pred_fallthru
    _
  // Predicated region
  $region22: #{index_filler_forward.25} parent=0 // pred_check
    _
  $region23: #{index_filler_forward.25} parent=0 // pred_check_branch
    %172 = sbr.rel (0) target = $region25
  $region24: #{index_filler_forward.25} parent=0 // pred_region
    _
  $region25: #{index_filler_forward.25} parent=0 // pred_fallthru
    _
  // Predicated region
  $region26: #{index_filler_forward.25} parent=0 // pred_check
    _
  $region27: #{index_filler_forward.25} parent=0 // pred_check_branch
    %174 = sbr.rel (0) target = $region29
  $region28: #{index_filler_forward.25} parent=0 // pred_region
    _
  $region29: #{index_filler_forward.25} parent=0 // pred_fallthru
    _

</llo_original>
